<compile_context>
chip_gen: v6e
topology: v6e:2x2x1
jax: 0.10.0
libtpu: 0.0.40
codegen_flags: <defaults>
</compile_context>

<pallas_src>
import functools

import jax
import jax.numpy as jnp
from jax import lax
from jax.experimental import pallas as pl
from jax.experimental.pallas import tpu as pltpu


_VMEM = pl.BlockSpec(memory_space=pltpu.MemorySpace.VMEM)


# ----------------------------------------------------------------------------
# Pallas kernel 1: fused conv-as-matmul  out = relu(cols @ w + b)  (bf16 out)
# ----------------------------------------------------------------------------
def _conv_relu_kernel(x_ref, w_ref, b_ref, o_ref):
    x = x_ref[...].astype(jnp.bfloat16)                      # cast in-kernel
    acc = jnp.dot(x, w_ref[...], preferred_element_type=jnp.float32)
    o_ref[...] = jnp.maximum(acc + b_ref[...], 0.0).astype(o_ref.dtype)


def conv_relu_matmul(cols, w_bf16, b_f32):
    """relu(cols @ w + b) as a single whole-array Pallas matmul, bf16 output.

    No grid / no row split: a multi-step grid only adds per-step overhead on
    1-TC chips (v5e/v6e), and at <=512x256x32 the per-TC work is far below the
    ~MFLOP level where a 2-TC split would pay off on v7x.
    """
    M, K = cols.shape
    N = w_bf16.shape[1]
    return pl.pallas_call(
        _conv_relu_kernel,
        out_shape=jax.ShapeDtypeStruct((M, N), jnp.bfloat16),
        in_specs=[_VMEM, _VMEM, _VMEM],
        out_specs=_VMEM,
        cost_estimate=pl.CostEstimate(
            flops=2 * M * K * N,
            transcendentals=0,
            bytes_accessed=int(cols.nbytes + w_bf16.nbytes + b_f32.nbytes
                               + M * N * 2)),
    )(cols, w_bf16, b_f32)


# ----------------------------------------------------------------------------
# Pallas kernel 2: fused "VAE tail"
#   conv3 -> enc FC (flatten folded into the contraction) -> mean|log_var
#   heads -> FeatureLayer+FeedForward (one fused dot) -> scene sum (folded
#   into dec1) -> decoder MLP + sigmoid.
# Only mean, log_var, feature_discr and the reconstruction leave the kernel.
# ----------------------------------------------------------------------------
def _vae_tail_kernel(F, L, OHW3,
                     cols3_ref, w3_ref, b3_ref,
                     fcw_ref, fcb_ref,
                     hdw_ref, hdb_ref,
                     cw_ref, cb_ref,
                     d1w_ref, d1b_ref, d2w_ref, d2b_ref, d3w_ref, d3b_ref,
                     recon_ref, mean_ref, logvar_ref, feat_ref,
                     a3_sc):
    f32, bf16 = jnp.float32, jnp.bfloat16
    FL = F * L
    B = mean_ref.shape[0]
    C3 = w3_ref.shape[1]
    hidden = fcw_ref.shape[1]

    # --- conv3 as ONE matmul (its weight is pushed to the MXU exactly once) --
    # cols3 rows are ordered (spatial position r major, batch b minor), i.e.
    # row index r*B + b, so each spatial position's rows are a contiguous pair.
    a3 = jnp.dot(cols3_ref[...], w3_ref[...], preferred_element_type=f32)
    a3_sc[...] = jnp.maximum(a3 + b3_ref[...], 0.0).astype(bf16)   # (OHW3*B, C3)

    # --- encoder FC with the NHWC flatten folded into the contraction -------
    # h_flat[b, r*C3 + c] == a3[r*B + b, c], hence
    #   enc_fc(h_flat) == sum_r a3[rB:(r+1)B, :] @ fc_w[r*C3:(r+1)*C3, :]
    # Total K pushed through the MXU equals the single (B, OHW3*C3) matmul, so
    # this costs no extra weight-push work and avoids an in-kernel reshape.
    acc = jnp.zeros((B, hidden), f32)
    for r in range(OHW3):
        lhs = a3_sc[pl.ds(r * B, B), :]                      # (B, C3)   bf16
        rhs = fcw_ref[r * C3:(r + 1) * C3, :]                # (C3, hid) bf16
        acc = acc + jnp.dot(lhs, rhs, preferred_element_type=f32)
    h = jnp.maximum(acc + fcb_ref[...], 0.0)                 # (B, hidden) f32

    # --- fused mean / log_var heads: one matmul, split on a 128-lane boundary
    heads = jnp.dot(h.astype(bf16), hdw_ref[...],
                    preferred_element_type=f32) + hdb_ref[...]
    mean = heads[:, :FL]
    log_var = heads[:, FL:2 * FL]
    mean_ref[...] = mean
    logvar_ref[...] = log_var

    # reparameterize (eval mode): latent_sample = mean.  Kept in float32 for
    # the FeatureLayer / FeedForward dot (f32-reference parity).
    # TODO(synk): training-mode sampling (pltpu.prng_random_bits +
    #             exp(0.5*logvar)) not implemented.
    latent = mean

    # --- FeatureLayer + FeedForward fused into ONE matmul --------------------
    # cw = [ kron(I_F, ff_w) | blockdiag(feat_w) | 0-pad ]  : (FL, FL + 128)
    comb = jnp.dot(latent, cw_ref[...], preferred_element_type=f32) + cb_ref[...]
    ff = jnp.maximum(comb[:, :FL], 0.0)                      # (B, FL) feed-forward
    feat_ref[...] = comb[:, FL:FL + F]                       # (B, F)  discriminators

    # --- scene = sum_f z_f, folded into dec1 (weight stacked F times along K)
    d = jnp.dot(ff.astype(bf16), d1w_ref[...], preferred_element_type=f32) + d1b_ref[...]
    d = jnp.maximum(d, 0.0)
    d = jnp.dot(d.astype(bf16), d2w_ref[...], preferred_element_type=f32) + d2b_ref[...]
    d = jnp.maximum(d, 0.0)
    d = jnp.dot(d.astype(bf16), d3w_ref[...], preferred_element_type=f32) + d3b_ref[...]
    recon_ref[...] = jax.nn.sigmoid(d)                       # (B, C*H*W) lane-dense


# ----------------------------------------------------------------------------
# Deterministic parameter initialization.
# ----------------------------------------------------------------------------
def init_params(key, image_size=(1, 32, 32), latent_dim=32, n_features=4):
    C, H, W = image_size
    KS = 4
    conv_channels = [C, 16, 32, 32]
    hidden = 128
    F, L = n_features, latent_dim
    FL = F * L
    # Lane-alignment assumptions used by the fused tail kernel: the mean /
    # log_var and feed-forward/feature slices happen at lane offsets FL, 2*FL.
    assert FL % 128 == 0, "n_features * latent_dim must be a multiple of 128"
    assert H % 8 == 0 and W % 8 == 0, "three stride-2 convs need H, W % 8 == 0"

    def dense(k, fan_in, fan_out):
        k1, k2 = jax.random.split(k)
        scale = 1.0 / jnp.sqrt(jnp.float32(fan_in))
        w = jax.random.normal(k1, (fan_in, fan_out), jnp.float32) * scale
        b = jax.random.normal(k2, (fan_out,), jnp.float32) * scale
        return w, b

    keys = iter(jax.random.split(key, 16))
    params = {}

    # Encoder convs.  Weights are stored im2col-flattened as (Cin*KH*KW, Cout)
    # in CHANNEL-MAJOR patch order, which is the ordering produced by
    # lax.conv_general_dilated_patches.  (A PyTorch (Cout, Cin, KH, KW) weight
    # maps via w.permute(1, 2, 3, 0).reshape(Cin*KH*KW, Cout).)
    enc_convs = []
    for cin, cout in zip(conv_channels[:-1], conv_channels[1:]):
        w, b = dense(next(keys), KS * KS * cin, cout)
        enc_convs.append((w.astype(jnp.bfloat16), b.reshape(1, cout)))
    params["enc_convs"] = enc_convs

    ds_f = 2 ** (len(conv_channels) - 1)          # three stride-2 convs -> /8
    flat = conv_channels[-1] * (H // ds_f) * (W // ds_f)
    w, b = dense(next(keys), flat, hidden)
    params["enc_fc_w"] = w.astype(jnp.bfloat16)
    params["enc_fc_b"] = b.reshape(1, hidden)

    # Fused mean|log_var heads: (hidden, 2*FL).
    mu_w, mu_b = dense(next(keys), hidden, FL)
    lv_w, lv_b = dense(next(keys), hidden, FL)
    params["heads_w"] = jnp.concatenate([mu_w, lv_w], axis=1).astype(jnp.bfloat16)
    params["heads_b"] = jnp.concatenate([mu_b, lv_b]).reshape(1, 2 * FL)

    # FeatureLayer (per-feature Linear(L,1)) + FeedForward (shared Linear(L,L)
    # per feature slot) fused into a single (FL, FL+128) float32 weight:
    #   cols [0, FL)        -> block-diagonal feed-forward
    #   cols [FL, FL+F)     -> block-diagonal feature regressors
    #   cols [FL+F, FL+128) -> zero padding (keeps N lane-aligned)
    ff_w, ff_b = dense(next(keys), L, L)
    ff_big = jnp.kron(jnp.eye(F, dtype=jnp.float32), ff_w)          # (FL, FL)
    feat_big = jnp.zeros((FL, 128), jnp.float32)
    feat_bias = jnp.zeros((128,), jnp.float32)
    for f in range(F):
        wf, bf = dense(next(keys), L, 1)
        feat_big = feat_big.at[f * L:(f + 1) * L, f].set(wf[:, 0])
        feat_bias = feat_bias.at[f].set(bf[0])
    params["featff_w"] = jnp.concatenate([ff_big, feat_big], axis=1)      # f32
    params["featff_b"] = jnp.concatenate([jnp.tile(ff_b, F),
                                          feat_bias]).reshape(1, FL + 128)

    # Decoder MLP.  dec1's weight is stacked F times along K so the feature sum
    # ("scene = sum_i z_i") is performed by the MXU contraction itself.
    d1_w, d1_b = dense(next(keys), L, 256)
    params["dec1_w"] = jnp.tile(d1_w, (F, 1)).astype(jnp.bfloat16)
    params["dec1_b"] = d1_b.reshape(1, 256)
    d2_w, d2_b = dense(next(keys), 256, 256)
    params["dec2_w"] = d2_w.astype(jnp.bfloat16)
    params["dec2_b"] = d2_b.reshape(1, 256)
    d3_w, d3_b = dense(next(keys), 256, C * H * W)
    params["dec3_w"] = d3_w.astype(jnp.bfloat16)
    params["dec3_b"] = d3_b.reshape(1, C * H * W)

    config = {"image_size": image_size, "latent_dim": latent_dim,
              "n_features": n_features}
    return config, params


# ----------------------------------------------------------------------------
# Forward pass (mirrors VAE.forward); `config` is static (closed over).
# ----------------------------------------------------------------------------
def vae_forward(config, params, x_nchw):
    C, H, W = config["image_size"]
    F, L = config["n_features"], config["latent_dim"]
    FL = F * L
    B = x_nchw.shape[0]
    npix = C * H * W

    # --- encoder conv stack: im2col in XLA, matmul+bias+ReLU in Pallas -------
    # conv1/conv2 are separate calls only because the patch extraction between
    # them lives in XLA; conv3 is fused into the tail kernel below.
    h = jnp.transpose(x_nchw, (0, 2, 3, 1)).astype(jnp.float32)   # NCHW -> NHWC
    for w, b in params["enc_convs"][:-1]:
        patches = lax.conv_general_dilated_patches(
            h, filter_shape=(4, 4), window_strides=(2, 2),
            padding=((1, 1), (1, 1)),
            dimension_numbers=("NHWC", "HWIO", "NHWC"))
        _, OH, OW, K = patches.shape
        # NOTE: conv1's K=16 underfills the MXU contraction depth; inherent to
        # a 4x4x1 first conv.
        out = conv_relu_matmul(patches.reshape(B * OH * OW, K), w, b)
        h = out.reshape(B, OH, OW, -1)

    # conv3 patches, rows reordered to (spatial-major, batch-minor) so the
    # fused tail kernel can fold the NHWC flatten into the FC contraction.
    patches3 = lax.conv_general_dilated_patches(
        h, filter_shape=(4, 4), window_strides=(2, 2),
        padding=((1, 1), (1, 1)),
        dimension_numbers=("NHWC", "HWIO", "NHWC"))
    _, OH3, OW3, K3 = patches3.shape
    OHW3 = OH3 * OW3
    cols3 = jnp.transpose(patches3, (1, 2, 0, 3)).reshape(OHW3 * B, K3)

    w3, b3 = params["enc_convs"][-1]
    C3 = w3.shape[1]
    hidden = params["enc_fc_w"].shape[1]

    tail_inputs = (
        cols3, w3, b3,
        params["enc_fc_w"], params["enc_fc_b"],
        params["heads_w"], params["heads_b"],
        params["featff_w"], params["featff_b"],
        params["dec1_w"], params["dec1_b"],
        params["dec2_w"], params["dec2_b"],
        params["dec3_w"], params["dec3_b"],
    )
    out_bytes = 4 * (B * npix + 2 * B * FL + B * F)
    tail_flops = 2 * B * (OHW3 * K3 * C3 + OHW3 * C3 * hidden
                          + hidden * 2 * FL + FL * (FL + 128)
                          + FL * 256 + 256 * 256 + 256 * npix)
    cost = pl.CostEstimate(
        flops=int(tail_flops),
        transcendentals=int(B * npix),                       # sigmoid exp
        bytes_accessed=int(sum(a.nbytes for a in tail_inputs) + out_bytes))

    # --- fused tail: conv3 + enc_fc + heads + feat/ff + decoder --------------
    recon_flat, mean, log_var, feature_discr = pl.pallas_call(
        functools.partial(_vae_tail_kernel, F, L, OHW3),
        out_shape=(
            jax.ShapeDtypeStruct((B, npix), jnp.float32),    # reconstruction
            jax.ShapeDtypeStruct((B, FL), jnp.float32),      # mean
            jax.ShapeDtypeStruct((B, FL), jnp.float32),      # log_var
            jax.ShapeDtypeStruct((B, F), jnp.float32),       # feature_discr
        ),
        in_specs=[_VMEM] * len(tail_inputs),
        out_specs=(_VMEM, _VMEM, _VMEM, _VMEM),
        scratch_shapes=[pltpu.VMEM((OHW3 * B, C3), jnp.bfloat16)],
        cost_estimate=cost,
    )(*tail_inputs)

    latent_sample = mean                                  # eval-mode reparameterize
    reconstruct = recon_flat.reshape(B, C, H, W)
    return reconstruct, mean, log_var, latent_sample, feature_discr


if __name__ == "__main__":
    key = jax.random.PRNGKey(0)
    pkey, xkey = jax.random.split(key)

    image_size = (1, 32, 32)
    latent_dim = 32
    n_features = 4
    batch = 2

    config, params = init_params(pkey, image_size, latent_dim, n_features)
    x = jax.random.normal(xkey, (batch,) + image_size, jnp.float32)

    fwd = jax.jit(functools.partial(vae_forward, config))
    outs = jax.block_until_ready(fwd(params, x))

    reconstruct, mean, log_var, latent_sample, feature_discr = outs
    assert reconstruct.shape == (batch,) + image_size
    assert mean.shape == (batch, n_features * latent_dim)
    assert log_var.shape == (batch, n_features * latent_dim)
    assert latent_sample.shape == (batch, n_features * latent_dim)
    assert feature_discr.shape == (batch, n_features)
    assert all(bool(jnp.all(jnp.isfinite(o))) for o in outs)

    print("KERNEL_OK")
</pallas_src>

<mosaic_0001>
module attributes {stable_mosaic.version = 11 : i64} {
  func.func @_conv_relu_kernel(%arg0: memref<512x16xf32, #tpu.memory_space<vmem>>, %arg1: memref<16x16xbf16, #tpu.memory_space<vmem>>, %arg2: memref<1x16xf32, #tpu.memory_space<vmem>>, %arg3: memref<512x16xbf16, #tpu.memory_space<vmem>>) attributes {dimension_semantics = [], scalar_prefetch = 0 : i64, scratch_operands = 0 : i64, tpu.core_type = #tpu.core_type<tc>} {
    %c0 = arith.constant 0 : index
    %c0_0 = arith.constant 0 : index
    %0 = vector.load %arg0[%c0, %c0_0] : memref<512x16xf32, #tpu.memory_space<vmem>>, vector<512x16xf32>
    %1 = arith.truncf %0 : vector<512x16xf32> to vector<512x16xbf16>
    %c0_1 = arith.constant 0 : index
    %c0_2 = arith.constant 0 : index
    %2 = vector.load %arg1[%c0_1, %c0_2] : memref<16x16xbf16, #tpu.memory_space<vmem>>, vector<16x16xbf16>
    %cst = arith.constant dense<0.000000e+00> : vector<512x16xf32>
    %3 = tpu.matmul %1, %2, %cst {dimension_numbers = #tpu.dot_dimension_numbers<[1], [0], [0], [1], [0, 0, 1, 1], [], []>} : vector<512x16xbf16>, vector<16x16xbf16>, vector<512x16xf32> -> vector<512x16xf32>
    %c0_3 = arith.constant 0 : index
    %c0_4 = arith.constant 0 : index
    %4 = vector.load %arg2[%c0_3, %c0_4] : memref<1x16xf32, #tpu.memory_space<vmem>>, vector<1x16xf32>
    %5 = vector.broadcast %4 : vector<1x16xf32> to vector<512x16xf32>
    %6 = arith.addf %3, %5 : vector<512x16xf32>
    %cst_5 = arith.constant 0.000000e+00 : f32
    %7 = vector.broadcast %cst_5 : f32 to vector<512x16xf32>
    %8 = arith.maximumf %6, %7 : vector<512x16xf32>
    %9 = arith.truncf %8 : vector<512x16xf32> to vector<512x16xbf16>
    %c0_6 = arith.constant 0 : index
    %c0_7 = arith.constant 0 : index
    %10 = vector.load %arg3[%c0_6, %c0_7] : memref<512x16xbf16, #tpu.memory_space<vmem>>, vector<512x16xbf16>
    tpu.vector_store %arg3[%c0_6, %c0_7], %9 {strides = array<i32>} : memref<512x16xbf16, #tpu.memory_space<vmem>>, vector<512x16xbf16>,
    return
  }
}

module attributes {stable_mosaic.version = 11 : i64} {
  func.func @_conv_relu_kernel(%arg0: memref<128x256xbf16, #tpu.memory_space<vmem>>, %arg1: memref<256x32xbf16, #tpu.memory_space<vmem>>, %arg2: memref<1x32xf32, #tpu.memory_space<vmem>>, %arg3: memref<128x32xbf16, #tpu.memory_space<vmem>>) attributes {dimension_semantics = [], scalar_prefetch = 0 : i64, scratch_operands = 0 : i64, tpu.core_type = #tpu.core_type<tc>} {
    %c0 = arith.constant 0 : index
    %c0_0 = arith.constant 0 : index
    %0 = vector.load %arg0[%c0, %c0_0] : memref<128x256xbf16, #tpu.memory_space<vmem>>, vector<128x256xbf16>
    %c0_1 = arith.constant 0 : index
    %c0_2 = arith.constant 0 : index
    %1 = vector.load %arg1[%c0_1, %c0_2] : memref<256x32xbf16, #tpu.memory_space<vmem>>, vector<256x32xbf16>
    %cst = arith.constant dense<0.000000e+00> : vector<128x32xf32>
    %2 = tpu.matmul %0, %1, %cst {dimension_numbers = #tpu.dot_dimension_numbers<[1], [0], [0], [1], [0, 0, 1, 1], [], []>} : vector<128x256xbf16>, vector<256x32xbf16>, vector<128x32xf32> -> vector<128x32xf32>
    %c0_3 = arith.constant 0 : index
    %c0_4 = arith.constant 0 : index
    %3 = vector.load %arg2[%c0_3, %c0_4] : memref<1x32xf32, #tpu.memory_space<vmem>>, vector<1x32xf32>
    %4 = vector.broadcast %3 : vector<1x32xf32> to vector<128x32xf32>
    %5 = arith.addf %2, %4 : vector<128x32xf32>
    %cst_5 = arith.constant 0.000000e+00 : f32
    %6 = vector.broadcast %cst_5 : f32 to vector<128x32xf32>
    %7 = arith.maximumf %5, %6 : vector<128x32xf32>
    %8 = arith.truncf %7 : vector<128x32xf32> to vector<128x32xbf16>
    %c0_6 = arith.constant 0 : index
    %c0_7 = arith.constant 0 : index
    %9 = vector.load %arg3[%c0_6, %c0_7] : memref<128x32xbf16, #tpu.memory_space<vmem>>, vector<128x32xbf16>
    tpu.vector_store %arg3[%c0_6, %c0_7], %8 {strides = array<i32>} : memref<128x32xbf16, #tpu.memory_space<vmem>>, vector<128x32xbf16>,
    return
  }
}

module attributes {stable_mosaic.version = 11 : i64} {
  func.func @_vae_tail_kernel(%arg0: memref<32x512xbf16, #tpu.memory_space<vmem>>, %arg1: memref<512x32xbf16, #tpu.memory_space<vmem>>, %arg2: memref<1x32xf32, #tpu.memory_space<vmem>>, %arg3: memref<512x128xbf16, #tpu.memory_space<vmem>>, %arg4: memref<1x128xf32, #tpu.memory_space<vmem>>, %arg5: memref<128x256xbf16, #tpu.memory_space<vmem>>, %arg6: memref<1x256xf32, #tpu.memory_space<vmem>>, %arg7: memref<128x256xf32, #tpu.memory_space<vmem>>, %arg8: memref<1x256xf32, #tpu.memory_space<vmem>>, %arg9: memref<128x256xbf16, #tpu.memory_space<vmem>>, %arg10: memref<1x256xf32, #tpu.memory_space<vmem>>, %arg11: memref<256x256xbf16, #tpu.memory_space<vmem>>, %arg12: memref<1x256xf32, #tpu.memory_space<vmem>>, %arg13: memref<256x1024xbf16, #tpu.memory_space<vmem>>, %arg14: memref<1x1024xf32, #tpu.memory_space<vmem>>, %arg15: memref<2x1024xf32, #tpu.memory_space<vmem>>, %arg16: memref<2x128xf32, #tpu.memory_space<vmem>>, %arg17: memref<2x128xf32, #tpu.memory_space<vmem>>, %arg18: memref<2x4xf32, #tpu.memory_space<vmem>>, %arg19: memref<32x32xbf16, #tpu.memory_space<vmem>>) attributes {dimension_semantics = [], scalar_prefetch = 0 : i64, scratch_operands = 1 : i64, tpu.core_type = #tpu.core_type<tc>} {
    %c0 = arith.constant 0 : index
    %c0_0 = arith.constant 0 : index
    %0 = vector.load %arg0[%c0, %c0_0] : memref<32x512xbf16, #tpu.memory_space<vmem>>, vector<32x512xbf16>
    %c0_1 = arith.constant 0 : index
    %c0_2 = arith.constant 0 : index
    %1 = vector.load %arg1[%c0_1, %c0_2] : memref<512x32xbf16, #tpu.memory_space<vmem>>, vector<512x32xbf16>
    %cst = arith.constant dense<0.000000e+00> : vector<32x32xf32>
    %2 = tpu.matmul %0, %1, %cst {dimension_numbers = #tpu.dot_dimension_numbers<[1], [0], [0], [1], [0, 0, 1, 1], [], []>} : vector<32x512xbf16>, vector<512x32xbf16>, vector<32x32xf32> -> vector<32x32xf32>
    %c0_3 = arith.constant 0 : index
    %c0_4 = arith.constant 0 : index
    %3 = vector.load %arg2[%c0_3, %c0_4] : memref<1x32xf32, #tpu.memory_space<vmem>>, vector<1x32xf32>
    %4 = vector.broadcast %3 : vector<1x32xf32> to vector<32x32xf32>
    %5 = arith.addf %2, %4 : vector<32x32xf32>
    %cst_5 = arith.constant 0.000000e+00 : f32
    %6 = vector.broadcast %cst_5 : f32 to vector<32x32xf32>
    %7 = arith.maximumf %5, %6 : vector<32x32xf32>
    %8 = arith.truncf %7 : vector<32x32xf32> to vector<32x32xbf16>
    %c0_6 = arith.constant 0 : index
    %c0_7 = arith.constant 0 : index
    %9 = vector.load %arg19[%c0_6, %c0_7] : memref<32x32xbf16, #tpu.memory_space<vmem>>, vector<32x32xbf16>
    tpu.vector_store %arg19[%c0_6, %c0_7], %8 {strides = array<i32>} : memref<32x32xbf16, #tpu.memory_space<vmem>>, vector<32x32xbf16>,
    %cst_8 = arith.constant 0.000000e+00 : f32
    %10 = vector.broadcast %cst_8 : f32 to vector<2x128xf32>
    %c0_9 = arith.constant 0 : index
    %c0_10 = arith.constant 0 : index
    %11 = vector.load %arg19[%c0_9, %c0_10] : memref<32x32xbf16, #tpu.memory_space<vmem>>, vector<2x32xbf16>
    %c0_11 = arith.constant 0 : index
    %c0_12 = arith.constant 0 : index
    %12 = vector.load %arg3[%c0_11, %c0_12] : memref<512x128xbf16, #tpu.memory_space<vmem>>, vector<32x128xbf16>
    %cst_13 = arith.constant dense<0.000000e+00> : vector<2x128xf32>
    %13 = tpu.matmul %11, %12, %cst_13 {dimension_numbers = #tpu.dot_dimension_numbers<[1], [0], [0], [1], [0, 0, 1, 1], [], []>} : vector<2x32xbf16>, vector<32x128xbf16>, vector<2x128xf32> -> vector<2x128xf32>
    %14 = arith.addf %10, %13 : vector<2x128xf32>
    %c2 = arith.constant 2 : index
    %c0_14 = arith.constant 0 : index
    %15 = vector.load %arg19[%c2, %c0_14] : memref<32x32xbf16, #tpu.memory_space<vmem>>, vector<2x32xbf16>
    %c32 = arith.constant 32 : index
    %c0_15 = arith.constant 0 : index
    %16 = vector.load %arg3[%c32, %c0_15] : memref<512x128xbf16, #tpu.memory_space<vmem>>, vector<32x128xbf16>
    %cst_16 = arith.constant dense<0.000000e+00> : vector<2x128xf32>
    %17 = tpu.matmul %15, %16, %cst_16 {dimension_numbers = #tpu.dot_dimension_numbers<[1], [0], [0], [1], [0, 0, 1, 1], [], []>} : vector<2x32xbf16>, vector<32x128xbf16>, vector<2x128xf32> -> vector<2x128xf32>
    %18 = arith.addf %14, %17 : vector<2x128xf32>
    %c4 = arith.constant 4 : index
    %c0_17 = arith.constant 0 : index
    %19 = vector.load %arg19[%c4, %c0_17] : memref<32x32xbf16, #tpu.memory_space<vmem>>, vector<2x32xbf16>
    %c64 = arith.constant 64 : index
    %c0_18 = arith.constant 0 : index
    %20 = vector.load %arg3[%c64, %c0_18] : memref<512x128xbf16, #tpu.memory_space<vmem>>, vector<32x128xbf16>
    %cst_19 = arith.constant dense<0.000000e+00> : vector<2x128xf32>
    %21 = tpu.matmul %19, %20, %cst_19 {dimension_numbers = #tpu.dot_dimension_numbers<[1], [0], [0], [1], [0, 0, 1, 1], [], []>} : vector<2x32xbf16>, vector<32x128xbf16>, vector<2x128xf32> -> vector<2x128xf32>
    %22 = arith.addf %18, %21 : vector<2x128xf32>
    %c6 = arith.constant 6 : index
    %c0_20 = arith.constant 0 : index
    %23 = vector.load %arg19[%c6, %c0_20] : memref<32x32xbf16, #tpu.memory_space<vmem>>, vector<2x32xbf16>
    %c96 = arith.constant 96 : index
    %c0_21 = arith.constant 0 : index
    %24 = vector.load %arg3[%c96, %c0_21] : memref<512x128xbf16, #tpu.memory_space<vmem>>, vector<32x128xbf16>
    %cst_22 = arith.constant dense<0.000000e+00> : vector<2x128xf32>
    %25 = tpu.matmul %23, %24, %cst_22 {dimension_numbers = #tpu.dot_dimension_numbers<[1], [0], [0], [1], [0, 0, 1, 1], [], []>} : vector<2x32xbf16>, vector<32x128xbf16>, vector<2x128xf32> -> vector<2x128xf32>
    %26 = arith.addf %22, %25 : vector<2x128xf32>
    %c8 = arith.constant 8 : index
    %c0_23 = arith.constant 0 : index
    %27 = vector.load %arg19[%c8, %c0_23] : memref<32x32xbf16, #tpu.memory_space<vmem>>, vector<2x32xbf16>
    %c128 = arith.constant 128 : index
    %c0_24 = arith.constant 0 : index
    %28 = vector.load %arg3[%c128, %c0_24] : memref<512x128xbf16, #tpu.memory_space<vmem>>, vector<32x128xbf16>
    %cst_25 = arith.constant dense<0.000000e+00> : vector<2x128xf32>
    %29 = tpu.matmul %27, %28, %cst_25 {dimension_numbers = #tpu.dot_dimension_numbers<[1], [0], [0], [1], [0, 0, 1, 1], [], []>} : vector<2x32xbf16>, vector<32x128xbf16>, vector<2x128xf32> -> vector<2x128xf32>
    %30 = arith.addf %26, %29 : vector<2x128xf32>
    %c10 = arith.constant 10 : index
    %c0_26 = arith.constant 0 : index
    %31 = vector.load %arg19[%c10, %c0_26] : memref<32x32xbf16, #tpu.memory_space<vmem>>, vector<2x32xbf16>
    %c160 = arith.constant 160 : index
    %c0_27 = arith.constant 0 : index
    %32 = vector.load %arg3[%c160, %c0_27] : memref<512x128xbf16, #tpu.memory_space<vmem>>, vector<32x128xbf16>
    %cst_28 = arith.constant dense<0.000000e+00> : vector<2x128xf32>
    %33 = tpu.matmul %31, %32, %cst_28 {dimension_numbers = #tpu.dot_dimension_numbers<[1], [0], [0], [1], [0, 0, 1, 1], [], []>} : vector<2x32xbf16>, vector<32x128xbf16>, vector<2x128xf32> -> vector<2x128xf32>
    %34 = arith.addf %30, %33 : vector<2x128xf32>
    %c12 = arith.constant 12 : index
    %c0_29 = arith.constant 0 : index
    %35 = vector.load %arg19[%c12, %c0_29] : memref<32x32xbf16, #tpu.memory_space<vmem>>, vector<2x32xbf16>
    %c192 = arith.constant 192 : index
    %c0_30 = arith.constant 0 : index
    %36 = vector.load %arg3[%c192, %c0_30] : memref<512x128xbf16, #tpu.memory_space<vmem>>, vector<32x128xbf16>
    %cst_31 = arith.constant dense<0.000000e+00> : vector<2x128xf32>
    %37 = tpu.matmul %35, %36, %cst_31 {dimension_numbers = #tpu.dot_dimension_numbers<[1], [0], [0], [1], [0, 0, 1, 1], [], []>} : vector<2x32xbf16>, vector<32x128xbf16>, vector<2x128xf32> -> vector<2x128xf32>
    %38 = arith.addf %34, %37 : vector<2x128xf32>
    %c14 = arith.constant 14 : index
    %c0_32 = arith.constant 0 : index
    %39 = vector.load %arg19[%c14, %c0_32] : memref<32x32xbf16, #tpu.memory_space<vmem>>, vector<2x32xbf16>
    %c224 = arith.constant 224 : index
    %c0_33 = arith.constant 0 : index
    %40 = vector.load %arg3[%c224, %c0_33] : memref<512x128xbf16, #tpu.memory_space<vmem>>, vector<32x128xbf16>
    %cst_34 = arith.constant dense<0.000000e+00> : vector<2x128xf32>
    %41 = tpu.matmul %39, %40, %cst_34 {dimension_numbers = #tpu.dot_dimension_numbers<[1], [0], [0], [1], [0, 0, 1, 1], [], []>} : vector<2x32xbf16>, vector<32x128xbf16>, vector<2x128xf32> -> vector<2x128xf32>
    %42 = arith.addf %38, %41 : vector<2x128xf32>
    %c16 = arith.constant 16 : index
    %c0_35 = arith.constant 0 : index
    %43 = vector.load %arg19[%c16, %c0_35] : memref<32x32xbf16, #tpu.memory_space<vmem>>, vector<2x32xbf16>
    %c256 = arith.constant 256 : index
    %c0_36 = arith.constant 0 : index
    %44 = vector.load %arg3[%c256, %c0_36] : memref<512x128xbf16, #tpu.memory_space<vmem>>, vector<32x128xbf16>
    %cst_37 = arith.constant dense<0.000000e+00> : vector<2x128xf32>
    %45 = tpu.matmul %43, %44, %cst_37 {dimension_numbers = #tpu.dot_dimension_numbers<[1], [0], [0], [1], [0, 0, 1, 1], [], []>} : vector<2x32xbf16>, vector<32x128xbf16>, vector<2x128xf32> -> vector<2x128xf32>
    %46 = arith.addf %42, %45 : vector<2x128xf32>
    %c18 = arith.constant 18 : index
    %c0_38 = arith.constant 0 : index
    %47 = vector.load %arg19[%c18, %c0_38] : memref<32x32xbf16, #tpu.memory_space<vmem>>, vector<2x32xbf16>
    %c288 = arith.constant 288 : index
    %c0_39 = arith.constant 0 : index
    %48 = vector.load %arg3[%c288, %c0_39] : memref<512x128xbf16, #tpu.memory_space<vmem>>, vector<32x128xbf16>
    %cst_40 = arith.constant dense<0.000000e+00> : vector<2x128xf32>
    %49 = tpu.matmul %47, %48, %cst_40 {dimension_numbers = #tpu.dot_dimension_numbers<[1], [0], [0], [1], [0, 0, 1, 1], [], []>} : vector<2x32xbf16>, vector<32x128xbf16>, vector<2x128xf32> -> vector<2x128xf32>
    %50 = arith.addf %46, %49 : vector<2x128xf32>
    %c20 = arith.constant 20 : index
    %c0_41 = arith.constant 0 : index
    %51 = vector.load %arg19[%c20, %c0_41] : memref<32x32xbf16, #tpu.memory_space<vmem>>, vector<2x32xbf16>
    %c320 = arith.constant 320 : index
    %c0_42 = arith.constant 0 : index
    %52 = vector.load %arg3[%c320, %c0_42] : memref<512x128xbf16, #tpu.memory_space<vmem>>, vector<32x128xbf16>
    %cst_43 = arith.constant dense<0.000000e+00> : vector<2x128xf32>
    %53 = tpu.matmul %51, %52, %cst_43 {dimension_numbers = #tpu.dot_dimension_numbers<[1], [0], [0], [1], [0, 0, 1, 1], [], []>} : vector<2x32xbf16>, vector<32x128xbf16>, vector<2x128xf32> -> vector<2x128xf32>
    %54 = arith.addf %50, %53 : vector<2x128xf32>
    %c22 = arith.constant 22 : index
    %c0_44 = arith.constant 0 : index
    %55 = vector.load %arg19[%c22, %c0_44] : memref<32x32xbf16, #tpu.memory_space<vmem>>, vector<2x32xbf16>
    %c352 = arith.constant 352 : index
    %c0_45 = arith.constant 0 : index
    %56 = vector.load %arg3[%c352, %c0_45] : memref<512x128xbf16, #tpu.memory_space<vmem>>, vector<32x128xbf16>
    %cst_46 = arith.constant dense<0.000000e+00> : vector<2x128xf32>
    %57 = tpu.matmul %55, %56, %cst_46 {dimension_numbers = #tpu.dot_dimension_numbers<[1], [0], [0], [1], [0, 0, 1, 1], [], []>} : vector<2x32xbf16>, vector<32x128xbf16>, vector<2x128xf32> -> vector<2x128xf32>
    %58 = arith.addf %54, %57 : vector<2x128xf32>
    %c24 = arith.constant 24 : index
    %c0_47 = arith.constant 0 : index
    %59 = vector.load %arg19[%c24, %c0_47] : memref<32x32xbf16, #tpu.memory_space<vmem>>, vector<2x32xbf16>
    %c384 = arith.constant 384 : index
    %c0_48 = arith.constant 0 : index
    %60 = vector.load %arg3[%c384, %c0_48] : memref<512x128xbf16, #tpu.memory_space<vmem>>, vector<32x128xbf16>
    %cst_49 = arith.constant dense<0.000000e+00> : vector<2x128xf32>
    %61 = tpu.matmul %59, %60, %cst_49 {dimension_numbers = #tpu.dot_dimension_numbers<[1], [0], [0], [1], [0, 0, 1, 1], [], []>} : vector<2x32xbf16>, vector<32x128xbf16>, vector<2x128xf32> -> vector<2x128xf32>
    %62 = arith.addf %58, %61 : vector<2x128xf32>
    %c26 = arith.constant 26 : index
    %c0_50 = arith.constant 0 : index
    %63 = vector.load %arg19[%c26, %c0_50] : memref<32x32xbf16, #tpu.memory_space<vmem>>, vector<2x32xbf16>
    %c416 = arith.constant 416 : index
    %c0_51 = arith.constant 0 : index
    %64 = vector.load %arg3[%c416, %c0_51] : memref<512x128xbf16, #tpu.memory_space<vmem>>, vector<32x128xbf16>
    %cst_52 = arith.constant dense<0.000000e+00> : vector<2x128xf32>
    %65 = tpu.matmul %63, %64, %cst_52 {dimension_numbers = #tpu.dot_dimension_numbers<[1], [0], [0], [1], [0, 0, 1, 1], [], []>} : vector<2x32xbf16>, vector<32x128xbf16>, vector<2x128xf32> -> vector<2x128xf32>
    %66 = arith.addf %62, %65 : vector<2x128xf32>
    %c28 = arith.constant 28 : index
    %c0_53 = arith.constant 0 : index
    %67 = vector.load %arg19[%c28, %c0_53] : memref<32x32xbf16, #tpu.memory_space<vmem>>, vector<2x32xbf16>
    %c448 = arith.constant 448 : index
    %c0_54 = arith.constant 0 : index
    %68 = vector.load %arg3[%c448, %c0_54] : memref<512x128xbf16, #tpu.memory_space<vmem>>, vector<32x128xbf16>
    %cst_55 = arith.constant dense<0.000000e+00> : vector<2x128xf32>
    %69 = tpu.matmul %67, %68, %cst_55 {dimension_numbers = #tpu.dot_dimension_numbers<[1], [0], [0], [1], [0, 0, 1, 1], [], []>} : vector<2x32xbf16>, vector<32x128xbf16>, vector<2x128xf32> -> vector<2x128xf32>
    %70 = arith.addf %66, %69 : vector<2x128xf32>
    %c30 = arith.constant 30 : index
    %c0_56 = arith.constant 0 : index
    %71 = vector.load %arg19[%c30, %c0_56] : memref<32x32xbf16, #tpu.memory_space<vmem>>, vector<2x32xbf16>
    %c480 = arith.constant 480 : index
    %c0_57 = arith.constant 0 : index
    %72 = vector.load %arg3[%c480, %c0_57] : memref<512x128xbf16, #tpu.memory_space<vmem>>, vector<32x128xbf16>
    %cst_58 = arith.constant dense<0.000000e+00> : vector<2x128xf32>
    %73 = tpu.matmul %71, %72, %cst_58 {dimension_numbers = #tpu.dot_dimension_numbers<[1], [0], [0], [1], [0, 0, 1, 1], [], []>} : vector<2x32xbf16>, vector<32x128xbf16>, vector<2x128xf32> -> vector<2x128xf32>
    %74 = arith.addf %70, %73 : vector<2x128xf32>
    %c0_59 = arith.constant 0 : index
    %c0_60 = arith.constant 0 : index
    %75 = vector.load %arg4[%c0_59, %c0_60] : memref<1x128xf32, #tpu.memory_space<vmem>>, vector<1x128xf32>
    %76 = vector.broadcast %75 : vector<1x128xf32> to vector<2x128xf32>
    %77 = arith.addf %74, %76 : vector<2x128xf32>
    %cst_61 = arith.constant 0.000000e+00 : f32
    %78 = vector.broadcast %cst_61 : f32 to vector<2x128xf32>
    %79 = arith.maximumf %77, %78 : vector<2x128xf32>
    %80 = arith.truncf %79 : vector<2x128xf32> to vector<2x128xbf16>
    %c0_62 = arith.constant 0 : index
    %c0_63 = arith.constant 0 : index
    %81 = vector.load %arg5[%c0_62, %c0_63] : memref<128x256xbf16, #tpu.memory_space<vmem>>, vector<128x256xbf16>
    %cst_64 = arith.constant dense<0.000000e+00> : vector<2x256xf32>
    %82 = tpu.matmul %80, %81, %cst_64 {dimension_numbers = #tpu.dot_dimension_numbers<[1], [0], [0], [1], [0, 0, 1, 1], [], []>} : vector<2x128xbf16>, vector<128x256xbf16>, vector<2x256xf32> -> vector<2x256xf32>
    %c0_65 = arith.constant 0 : index
    %c0_66 = arith.constant 0 : index
    %83 = vector.load %arg6[%c0_65, %c0_66] : memref<1x256xf32, #tpu.memory_space<vmem>>, vector<1x256xf32>
    %84 = vector.broadcast %83 : vector<1x256xf32> to vector<2x256xf32>
    %85 = arith.addf %82, %84 : vector<2x256xf32>
    %86 = vector.extract_strided_slice %85 {offsets = [0, 0], sizes = [2, 128], strides = [1, 1]} : vector<2x256xf32> to vector<2x128xf32>
    %87 = vector.extract_strided_slice %85 {offsets = [0, 128], sizes = [2, 128], strides = [1, 1]} : vector<2x256xf32> to vector<2x128xf32>
    %c0_67 = arith.constant 0 : index
    %c0_68 = arith.constant 0 : index
    %88 = vector.load %arg16[%c0_67, %c0_68] : memref<2x128xf32, #tpu.memory_space<vmem>>, vector<2x128xf32>
    tpu.vector_store %arg16[%c0_67, %c0_68], %86 {strides = array<i32>} : memref<2x128xf32, #tpu.memory_space<vmem>>, vector<2x128xf32>,
    %c0_69 = arith.constant 0 : index
    %c0_70 = arith.constant 0 : index
    %89 = vector.load %arg17[%c0_69, %c0_70] : memref<2x128xf32, #tpu.memory_space<vmem>>, vector<2x128xf32>
    tpu.vector_store %arg17[%c0_69, %c0_70], %87 {strides = array<i32>} : memref<2x128xf32, #tpu.memory_space<vmem>>, vector<2x128xf32>,
    %c0_71 = arith.constant 0 : index
    %c0_72 = arith.constant 0 : index
    %90 = vector.load %arg7[%c0_71, %c0_72] : memref<128x256xf32, #tpu.memory_space<vmem>>, vector<128x256xf32>
    %cst_73 = arith.constant dense<0.000000e+00> : vector<2x256xf32>
    %91 = tpu.matmul %86, %90, %cst_73 {dimension_numbers = #tpu.dot_dimension_numbers<[1], [0], [0], [1], [0, 0, 1, 1], [], []>} : vector<2x128xf32>, vector<128x256xf32>, vector<2x256xf32> -> vector<2x256xf32>
    %c0_74 = arith.constant 0 : index
    %c0_75 = arith.constant 0 : index
    %92 = vector.load %arg8[%c0_74, %c0_75] : memref<1x256xf32, #tpu.memory_space<vmem>>, vector<1x256xf32>
    %93 = vector.broadcast %92 : vector<1x256xf32> to vector<2x256xf32>
    %94 = arith.addf %91, %93 : vector<2x256xf32>
    %95 = vector.extract_strided_slice %94 {offsets = [0, 0], sizes = [2, 128], strides = [1, 1]} : vector<2x256xf32> to vector<2x128xf32>
    %cst_76 = arith.constant 0.000000e+00 : f32
    %96 = vector.broadcast %cst_76 : f32 to vector<2x128xf32>
    %97 = arith.maximumf %95, %96 : vector<2x128xf32>
    %98 = vector.extract_strided_slice %94 {offsets = [0, 128], sizes = [2, 4], strides = [1, 1]} : vector<2x256xf32> to vector<2x4xf32>
    %c0_77 = arith.constant 0 : index
    %c0_78 = arith.constant 0 : index
    %99 = vector.load %arg18[%c0_77, %c0_78] : memref<2x4xf32, #tpu.memory_space<vmem>>, vector<2x4xf32>
    tpu.vector_store %arg18[%c0_77, %c0_78], %98 {strides = array<i32>} : memref<2x4xf32, #tpu.memory_space<vmem>>, vector<2x4xf32>,
    %100 = arith.truncf %97 : vector<2x128xf32> to vector<2x128xbf16>
    %c0_79 = arith.constant 0 : index
    %c0_80 = arith.constant 0 : index
    %101 = vector.load %arg9[%c0_79, %c0_80] : memref<128x256xbf16, #tpu.memory_space<vmem>>, vector<128x256xbf16>
    %cst_81 = arith.constant dense<0.000000e+00> : vector<2x256xf32>
    %102 = tpu.matmul %100, %101, %cst_81 {dimension_numbers = #tpu.dot_dimension_numbers<[1], [0], [0], [1], [0, 0, 1, 1], [], []>} : vector<2x128xbf16>, vector<128x256xbf16>, vector<2x256xf32> -> vector<2x256xf32>
    %c0_82 = arith.constant 0 : index
    %c0_83 = arith.constant 0 : index
    %103 = vector.load %arg10[%c0_82, %c0_83] : memref<1x256xf32, #tpu.memory_space<vmem>>, vector<1x256xf32>
    %104 = vector.broadcast %103 : vector<1x256xf32> to vector<2x256xf32>
    %105 = arith.addf %102, %104 : vector<2x256xf32>
    %cst_84 = arith.constant 0.000000e+00 : f32
    %106 = vector.broadcast %cst_84 : f32 to vector<2x256xf32>
    %107 = arith.maximumf %105, %106 : vector<2x256xf32>
    %108 = arith.truncf %107 : vector<2x256xf32> to vector<2x256xbf16>
    %c0_85 = arith.constant 0 : index
    %c0_86 = arith.constant 0 : index
    %109 = vector.load %arg11[%c0_85, %c0_86] : memref<256x256xbf16, #tpu.memory_space<vmem>>, vector<256x256xbf16>
    %cst_87 = arith.constant dense<0.000000e+00> : vector<2x256xf32>
    %110 = tpu.matmul %108, %109, %cst_87 {dimension_numbers = #tpu.dot_dimension_numbers<[1], [0], [0], [1], [0, 0, 1, 1], [], []>} : vector<2x256xbf16>, vector<256x256xbf16>, vector<2x256xf32> -> vector<2x256xf32>
    %c0_88 = arith.constant 0 : index
    %c0_89 = arith.constant 0 : index
    %111 = vector.load %arg12[%c0_88, %c0_89] : memref<1x256xf32, #tpu.memory_space<vmem>>, vector<1x256xf32>
    %112 = vector.broadcast %111 : vector<1x256xf32> to vector<2x256xf32>
    %113 = arith.addf %110, %112 : vector<2x256xf32>
    %cst_90 = arith.constant 0.000000e+00 : f32
    %114 = vector.broadcast %cst_90 : f32 to vector<2x256xf32>
    %115 = arith.maximumf %113, %114 : vector<2x256xf32>
    %116 = arith.truncf %115 : vector<2x256xf32> to vector<2x256xbf16>
    %c0_91 = arith.constant 0 : index
    %c0_92 = arith.constant 0 : index
    %117 = vector.load %arg13[%c0_91, %c0_92] : memref<256x1024xbf16, #tpu.memory_space<vmem>>, vector<256x1024xbf16>
    %cst_93 = arith.constant dense<0.000000e+00> : vector<2x1024xf32>
    %118 = tpu.matmul %116, %117, %cst_93 {dimension_numbers = #tpu.dot_dimension_numbers<[1], [0], [0], [1], [0, 0, 1, 1], [], []>} : vector<2x256xbf16>, vector<256x1024xbf16>, vector<2x1024xf32> -> vector<2x1024xf32>
    %c0_94 = arith.constant 0 : index
    %c0_95 = arith.constant 0 : index
    %119 = vector.load %arg14[%c0_94, %c0_95] : memref<1x1024xf32, #tpu.memory_space<vmem>>, vector<1x1024xf32>
    %120 = vector.broadcast %119 : vector<1x1024xf32> to vector<2x1024xf32>
    %121 = arith.addf %118, %120 : vector<2x1024xf32>
    %122 = arith.negf %121 : vector<2x1024xf32>
    %123 = math.exp %122 : vector<2x1024xf32>
    %cst_96 = arith.constant 1.000000e+00 : f32
    %124 = vector.broadcast %cst_96 : f32 to vector<2x1024xf32>
    %125 = arith.addf %124, %123 : vector<2x1024xf32>
    %126 = arith.divf %124, %125 : vector<2x1024xf32>
    %c0_97 = arith.constant 0 : index
    %c0_98 = arith.constant 0 : index
    %127 = vector.load %arg15[%c0_97, %c0_98] : memref<2x1024xf32, #tpu.memory_space<vmem>>, vector<2x1024xf32>
    tpu.vector_store %arg15[%c0_97, %c0_98], %126 {strides = array<i32>} : memref<2x1024xf32, #tpu.memory_space<vmem>>, vector<2x1024xf32>,
    return
  }
}

</mosaic_0001>

<llo_original>
// kernel: vae_forward.4
$region0: #{vae_forward.4}
  #allocation0 [shape = 'u32[]', space=smem, size = 0x4, offset = 0x4, fixed_abs, tag = 'smem constant byte address 0x4 - core index']
  #allocation1 [shape = 'u32[144,128]{1,0:T(1,128)}', space=vmem, size = 0x12000, scoped, tag = 'internal scratch']
  %s0 = inlined_call_operand.vmem [shape: bf16[128,256], index: 0, kind: input, shape index: {}]
  %s1 = inlined_call_operand.vmem [shape: bf16[256,32], index: 1, kind: input, shape index: {}]
  %s2 = inlined_call_operand.vmem [shape: f32[1,32], index: 2, kind: input, shape index: {}]
  %s3 = inlined_call_operand.vmem [shape: bf16[128,32], index: 3, kind: output, shape index: {}]
  %s4 = sld [smem:[#allocation0]]
  $region22: #{vae_forward.4} parent=0
    _
  %s6 = ssub.s32 1, %s4
  %s7 = scalar_select 0, %s6, %s4
  // Predicated region
  $region2: #{vae_forward.4} parent=0 // pred_check
    _
  $region3: #{vae_forward.4} parent=0 // pred_check_branch
    %9 = sbr.rel (0) target = $region5
  $region4: #{vae_forward.4} parent=0 // pred_region
    _
  $region5: #{vae_forward.4} parent=0 // pred_fallthru
    _
  // Predicated region
  $region6: #{vae_forward.4} parent=0 // pred_check
    _
  $region7: #{vae_forward.4} parent=0 // pred_check_branch
    %11 = sbr.rel (0) target = $region9
  $region8: #{vae_forward.4} parent=0 // pred_region
    _
  $region9: #{vae_forward.4} parent=0 // pred_fallthru
    _
  // Predicated region
  $region10: #{vae_forward.4} parent=0 // pred_check
    _
  $region11: #{vae_forward.4} parent=0 // pred_check_branch
    %13 = sbr.rel (0) target = $region13
  $region12: #{vae_forward.4} parent=0 // pred_region
    _
  $region13: #{vae_forward.4} parent=0 // pred_fallthru
    _
  %v15 = vld [vmem:[%s0] sm:$0xff]
  %v16 = vld [vmem:[%s0 + $0x8] sm:$0xff]
  %v17 = vld [vmem:[%s0 + $0x10] sm:$0xff]
  %v18 = vld [vmem:[%s0 + $0x18] sm:$0xff]
  %v19 = vld [vmem:[%s0 + $0x20] sm:$0xff]
  %v20 = vld [vmem:[%s0 + $0x28] sm:$0xff]
  %v21 = vld [vmem:[%s0 + $0x30] sm:$0xff]
  %v22 = vld [vmem:[%s0 + $0x38] sm:$0xff]
  %v23 = vld [vmem:[%s0 + $0x40] sm:$0xff]
  %v24 = vld [vmem:[%s0 + $0x48] sm:$0xff]
  %v25 = vld [vmem:[%s0 + $0x50] sm:$0xff]
  %v26 = vld [vmem:[%s0 + $0x58] sm:$0xff]
  %v27 = vld [vmem:[%s0 + $0x60] sm:$0xff]
  %v28 = vld [vmem:[%s0 + $0x68] sm:$0xff]
  %v29 = vld [vmem:[%s0 + $0x70] sm:$0xff]
  %v30 = vld [vmem:[%s0 + $0x78] sm:$0xff]
  %v31 = vld [vmem:[%s1] sm:$0xf]
  %v32 = vld [vmem:[%s1 + $0x4] sm:$0xf]
  %v33 = vld [vmem:[%s1 + $0x8] sm:$0xf]
  %v34 = vld [vmem:[%s1 + $0xc] sm:$0xf]
  %v35 = vld [vmem:[%s1 + $0x10] sm:$0xf]
  %v36 = vld [vmem:[%s1 + $0x14] sm:$0xf]
  %v37 = vld [vmem:[%s1 + $0x18] sm:$0xf]
  %v38 = vld [vmem:[%s1 + $0x1c] sm:$0xf]
  %v39 = vld [vmem:[%s1 + $0x20] sm:$0xf]
  %v40 = vld [vmem:[%s1 + $0x24] sm:$0xf]
  %v41 = vld [vmem:[%s1 + $0x28] sm:$0xf]
  %v42 = vld [vmem:[%s1 + $0x2c] sm:$0xf]
  %v43 = vld [vmem:[%s1 + $0x30] sm:$0xf]
  %v44 = vld [vmem:[%s1 + $0x34] sm:$0xf]
  %v45 = vld [vmem:[%s1 + $0x38] sm:$0xf]
  %v46 = vld [vmem:[%s1 + $0x3c] sm:$0xf]
  %v47 = vld [vmem:[%s1 + $0x40] sm:$0xf]
  %v48 = vld [vmem:[%s1 + $0x44] sm:$0xf]
  %v49 = vld [vmem:[%s1 + $0x48] sm:$0xf]
  %v50 = vld [vmem:[%s1 + $0x4c] sm:$0xf]
  %v51 = vld [vmem:[%s1 + $0x50] sm:$0xf]
  %v52 = vld [vmem:[%s1 + $0x54] sm:$0xf]
  %v53 = vld [vmem:[%s1 + $0x58] sm:$0xf]
  %v54 = vld [vmem:[%s1 + $0x5c] sm:$0xf]
  %v55 = vld [vmem:[%s1 + $0x60] sm:$0xf]
  %v56 = vld [vmem:[%s1 + $0x64] sm:$0xf]
  %v57 = vld [vmem:[%s1 + $0x68] sm:$0xf]
  %v58 = vld [vmem:[%s1 + $0x6c] sm:$0xf]
  %v59 = vld [vmem:[%s1 + $0x70] sm:$0xf]
  %v60 = vld [vmem:[%s1 + $0x74] sm:$0xf]
  %v61 = vld [vmem:[%s1 + $0x78] sm:$0xf]
  %v62 = vld [vmem:[%s1 + $0x7c] sm:$0xf]
  %v63 = vld [vmem:[%s2] sm:$0x1]
  %v65 = vlaneseq
  %v66 = vshrl.u32 %v65, 7
  %v67 = vsub.s32 0, %v66
  %v68 = vrot.slane %v63, %v67
  %v86 = vunpack.c.l.b16 %v15
  %v87 = vunpack.c.h.b16 %v15
  %v88 = vunpack.c.l.b16 %v16
  %v89 = vunpack.c.h.b16 %v16
  %v90 = vunpack.c.l.b16 %v17
  %v91 = vunpack.c.h.b16 %v17
  %v92 = vunpack.c.l.b16 %v18
  %v93 = vunpack.c.h.b16 %v18
  %v94 = vunpack.c.l.b16 %v19
  %v95 = vunpack.c.h.b16 %v19
  %v96 = vunpack.c.l.b16 %v20
  %v97 = vunpack.c.h.b16 %v20
  %v98 = vunpack.c.l.b16 %v21
  %v99 = vunpack.c.h.b16 %v21
  %v100 = vunpack.c.l.b16 %v22
  %v101 = vunpack.c.h.b16 %v22
  %v102 = vunpack.c.l.b16 %v23
  %v103 = vunpack.c.h.b16 %v23
  %v104 = vunpack.c.l.b16 %v24
  %v105 = vunpack.c.h.b16 %v24
  %v106 = vunpack.c.l.b16 %v25
  %v107 = vunpack.c.h.b16 %v25
  %v108 = vunpack.c.l.b16 %v26
  %v109 = vunpack.c.h.b16 %v26
  %v110 = vunpack.c.l.b16 %v27
  %v111 = vunpack.c.h.b16 %v27
  %v112 = vunpack.c.l.b16 %v28
  %v113 = vunpack.c.h.b16 %v28
  %v114 = vunpack.c.l.b16 %v29
  %v115 = vunpack.c.h.b16 %v29
  %v116 = vunpack.c.l.b16 %v30
  %v117 = vunpack.c.h.b16 %v30
  %v118 = vpack.c.b16 %v88, %v86
  %v119 = vpack.c.b16 %v89, %v87
  %v120 = vpack.c.b16 %v92, %v90
  %v121 = vpack.c.b16 %v93, %v91
  %v122 = vpack.c.b16 %v96, %v94
  %v123 = vpack.c.b16 %v97, %v95
  %v124 = vpack.c.b16 %v100, %v98
  %v125 = vpack.c.b16 %v101, %v99
  %v126 = vpack.c.b16 %v104, %v102
  %v127 = vpack.c.b16 %v105, %v103
  %v128 = vpack.c.b16 %v108, %v106
  %v129 = vpack.c.b16 %v109, %v107
  %v130 = vpack.c.b16 %v112, %v110
  %v131 = vpack.c.b16 %v113, %v111
  %v132 = vpack.c.b16 %v116, %v114
  %v133 = vpack.c.b16 %v117, %v115
  %v182 = vunpack.c.l.b16 %v31
  %v183 = vunpack.c.l.b16 %v32
  %v184 = vunpack.c.l.b16 %v33
  %v185 = vunpack.c.l.b16 %v34
  %v186 = vunpack.c.l.b16 %v35
  %v187 = vunpack.c.l.b16 %v36
  %v188 = vunpack.c.l.b16 %v37
  %v189 = vunpack.c.l.b16 %v38
  %v190 = vunpack.c.l.b16 %v39
  %v191 = vunpack.c.l.b16 %v40
  %v192 = vunpack.c.l.b16 %v41
  %v193 = vunpack.c.l.b16 %v42
  %v194 = vunpack.c.l.b16 %v43
  %v195 = vunpack.c.l.b16 %v44
  %v196 = vunpack.c.l.b16 %v45
  %v197 = vunpack.c.l.b16 %v46
  %v198 = vunpack.c.l.b16 %v47
  %v199 = vunpack.c.l.b16 %v48
  %v200 = vunpack.c.l.b16 %v49
  %v201 = vunpack.c.l.b16 %v50
  %v202 = vunpack.c.l.b16 %v51
  %v203 = vunpack.c.l.b16 %v52
  %v204 = vunpack.c.l.b16 %v53
  %v205 = vunpack.c.l.b16 %v54
  %v206 = vunpack.c.l.b16 %v55
  %v207 = vunpack.c.l.b16 %v56
  %v208 = vunpack.c.l.b16 %v57
  %v209 = vunpack.c.l.b16 %v58
  %v210 = vunpack.c.l.b16 %v59
  %v211 = vunpack.c.l.b16 %v60
  %v212 = vunpack.c.l.b16 %v61
  %v213 = vunpack.c.l.b16 %v62
  %v214 = vpack.c.b16 %v183, %v182
  %v215 = vpack.c.b16 %v185, %v184
  %v216 = vpack.c.b16 %v187, %v186
  %v217 = vpack.c.b16 %v189, %v188
  %v218 = vpack.c.b16 %v191, %v190
  %v219 = vpack.c.b16 %v193, %v192
  %v220 = vpack.c.b16 %v195, %v194
  %v221 = vpack.c.b16 %v197, %v196
  %v222 = vpack.c.b16 %v199, %v198
  %v223 = vpack.c.b16 %v201, %v200
  %v224 = vpack.c.b16 %v203, %v202
  %v225 = vpack.c.b16 %v205, %v204
  %v226 = vpack.c.b16 %v207, %v206
  %v227 = vpack.c.b16 %v209, %v208
  %v228 = vpack.c.b16 %v211, %v210
  %v229 = vpack.c.b16 %v213, %v212
  %246 = vmatprep.subr.bf16.mxu0 0
  %247 = vmatpush1.bf16.msra.mxu0 %v221
  %248 = vmatprep.subr.bf16.mxu0 0
  %249 = vmatpush1.bf16.msra.mxu0 %v220
  %250 = vmatprep.subr.bf16.mxu0 0
  %251 = vmatpush1.bf16.msra.mxu0 %v219
  %252 = vmatprep.subr.bf16.mxu0 0
  %253 = vmatpush1.bf16.msra.mxu0 %v218
  %254 = vmatprep.subr.bf16.mxu0 0
  %255 = vmatpush1.bf16.msra.mxu0 %v217
  %256 = vmatprep.subr.bf16.mxu0 0
  %257 = vmatpush1.bf16.msra.mxu0 %v216
  %258 = vmatprep.subr.bf16.mxu0 0
  %259 = vmatpush1.bf16.msra.mxu0 %v215
  %260 = vmatprep.subr.bf16.mxu0 0
  %261 = vmatpush1.bf16.msra.mxu0 %v214
  %262 = vmatprep.subr.bf16.mxu0 0
  %263 = vmatpush2.bf16.msra.mxu0 %v229
  %264 = vmatprep.subr.bf16.mxu0 0
  %265 = vmatpush2.bf16.msra.mxu0 %v228
  %266 = vmatprep.subr.bf16.mxu0 0
  %267 = vmatpush2.bf16.msra.mxu0 %v227
  %268 = vmatprep.subr.bf16.mxu0 0
  %269 = vmatpush2.bf16.msra.mxu0 %v226
  %270 = vmatprep.subr.bf16.mxu0 0
  %271 = vmatpush2.bf16.msra.mxu0 %v225
  %272 = vmatprep.subr.bf16.mxu0 0
  %273 = vmatpush2.bf16.msra.mxu0 %v224
  %274 = vmatprep.subr.bf16.mxu0 0
  %275 = vmatpush2.bf16.msra.mxu0 %v223
  %276 = vmatprep.subr.bf16.mxu0 0
  %277 = vmatpush2.bf16.msra.mxu0 %v222
  %278 = vmatprep.mubr.bf16.mxu0 %v119
  %279 = vmatmul.mubr.bf16.gmra.mxu0 %v118
  %v280 = vpop.f32.mrf.mxu0
  %v281 = vadd.f32 %v68, %v280
  %v282 = vpop.f32.mrf.mxu0
  %v283 = vpop.f32.mrf.mxu0
  %v284 = vadd.f32 %v68, %v283
  %v285 = vpop.f32.mrf.mxu0
  %286 = vmatprep.mubr.bf16.mxu0 %v121
  %287 = vmatmul.mubr.bf16.gmra.mxu0 %v120
  %v288 = vpop.f32.mrf.mxu0
  %v289 = vadd.f32 %v68, %v288
  %v290 = vpop.f32.mrf.mxu0
  %v291 = vpop.f32.mrf.mxu0
  %v292 = vadd.f32 %v68, %v291
  %v293 = vpop.f32.mrf.mxu0
  %294 = vmatprep.mubr.bf16.mxu0 %v123
  %295 = vmatmul.mubr.bf16.gmra.mxu0 %v122
  %v296 = vpop.f32.mrf.mxu0
  %v297 = vadd.f32 %v68, %v296
  %v298 = vpop.f32.mrf.mxu0
  %v299 = vpop.f32.mrf.mxu0
  %v300 = vadd.f32 %v68, %v299
  %v301 = vpop.f32.mrf.mxu0
  %302 = vmatprep.mubr.bf16.mxu0 %v125
  %303 = vmatmul.mubr.bf16.gmra.mxu0 %v124
  %v304 = vpop.f32.mrf.mxu0
  %v305 = vadd.f32 %v68, %v304
  %v306 = vpop.f32.mrf.mxu0
  %v307 = vpop.f32.mrf.mxu0
  %v308 = vadd.f32 %v68, %v307
  %v309 = vpop.f32.mrf.mxu0
  %310 = vmatprep.mubr.bf16.mxu0 %v127
  %311 = vmatmul.mubr.bf16.gmra.mxu0 %v126
  %v312 = vpop.f32.mrf.mxu0
  %v313 = vadd.f32 %v68, %v312
  %v314 = vpop.f32.mrf.mxu0
  %v315 = vpop.f32.mrf.mxu0
  %v316 = vadd.f32 %v68, %v315
  %v317 = vpop.f32.mrf.mxu0
  %318 = vmatprep.mubr.bf16.mxu0 %v129
  %319 = vmatmul.mubr.bf16.gmra.mxu0 %v128
  %v320 = vpop.f32.mrf.mxu0
  %v321 = vadd.f32 %v68, %v320
  %v322 = vpop.f32.mrf.mxu0
  %v323 = vpop.f32.mrf.mxu0
  %v324 = vadd.f32 %v68, %v323
  %v325 = vpop.f32.mrf.mxu0
  %326 = vmatprep.mubr.bf16.mxu0 %v131
  %327 = vmatmul.mubr.bf16.gmra.mxu0 %v130
  %v328 = vpop.f32.mrf.mxu0
  %v329 = vadd.f32 %v68, %v328
  %v330 = vpop.f32.mrf.mxu0
  %v331 = vpop.f32.mrf.mxu0
  %v332 = vadd.f32 %v68, %v331
  %v333 = vpop.f32.mrf.mxu0
  %334 = vmatprep.mubr.bf16.mxu0 %v133
  %335 = vmatmul.mubr.bf16.gmra.mxu0 %v132
  %v336 = vpop.f32.mrf.mxu0
  %v337 = vadd.f32 %v68, %v336
  %v338 = vpop.f32.mrf.mxu0
  %v339 = vpop.f32.mrf.mxu0
  %v340 = vadd.f32 %v68, %v339
  %v341 = vpop.f32.mrf.mxu0
  %342 = vdwg.mxu0
  %v343 = vmax.f32 %v281, 0.0
  %v344 = vmax.f32 %v284, 0.0
  %v345 = vmax.f32 %v289, 0.0
  %v346 = vmax.f32 %v292, 0.0
  %v347 = vmax.f32 %v297, 0.0
  %v348 = vmax.f32 %v300, 0.0
  %v349 = vmax.f32 %v305, 0.0
  %v350 = vmax.f32 %v308, 0.0
  %v351 = vmax.f32 %v313, 0.0
  %v352 = vmax.f32 %v316, 0.0
  %v353 = vmax.f32 %v321, 0.0
  %v354 = vmax.f32 %v324, 0.0
  %v355 = vmax.f32 %v329, 0.0
  %v356 = vmax.f32 %v332, 0.0
  %v357 = vmax.f32 %v337, 0.0
  %v358 = vmax.f32 %v340, 0.0
  %v359 = vpack.c.bf16 %v344, %v343
  %v360 = vpack.c.bf16 %v346, %v345
  %v361 = vpack.c.bf16 %v348, %v347
  %v362 = vpack.c.bf16 %v350, %v349
  %v363 = vpack.c.bf16 %v352, %v351
  %v364 = vpack.c.bf16 %v354, %v353
  %v365 = vpack.c.bf16 %v356, %v355
  %v366 = vpack.c.bf16 %v358, %v357
  %v375 = vunpack.c.l.b16 %v359
  %v376 = vunpack.c.h.b16 %v359
  %v377 = vunpack.c.l.b16 %v360
  %v378 = vunpack.c.h.b16 %v360
  %v379 = vunpack.c.l.b16 %v361
  %v380 = vunpack.c.h.b16 %v361
  %v381 = vunpack.c.l.b16 %v362
  %v382 = vunpack.c.h.b16 %v362
  %v383 = vunpack.c.l.b16 %v363
  %v384 = vunpack.c.h.b16 %v363
  %v385 = vunpack.c.l.b16 %v364
  %v386 = vunpack.c.h.b16 %v364
  %v387 = vunpack.c.l.b16 %v365
  %v388 = vunpack.c.h.b16 %v365
  %v389 = vunpack.c.l.b16 %v366
  %v390 = vunpack.c.h.b16 %v366
  %v391 = vpack.c.b16 %v375, %v375
  %v392 = vpack.c.b16 %v376, %v376
  %v393 = vpack.c.b16 %v377, %v377
  %v394 = vpack.c.b16 %v378, %v378
  %v395 = vpack.c.b16 %v379, %v379
  %v396 = vpack.c.b16 %v380, %v380
  %v397 = vpack.c.b16 %v381, %v381
  %v398 = vpack.c.b16 %v382, %v382
  %v399 = vpack.c.b16 %v383, %v383
  %v400 = vpack.c.b16 %v384, %v384
  %v401 = vpack.c.b16 %v385, %v385
  %v402 = vpack.c.b16 %v386, %v386
  %v403 = vpack.c.b16 %v387, %v387
  %v404 = vpack.c.b16 %v388, %v388
  %v405 = vpack.c.b16 %v389, %v389
  %v406 = vpack.c.b16 %v390, %v390
  %vm423 = vcmask 257024
  %424 = vst.msk [vmem:[%s3] sm:$0xf] %vm423, %v391
  %425 = vst.msk [vmem:[%s3 + $0x4] sm:$0xf] %vm423, %v392
  %426 = vst.msk [vmem:[%s3 + $0x8] sm:$0xf] %vm423, %v393
  %427 = vst.msk [vmem:[%s3 + $0xc] sm:$0xf] %vm423, %v394
  %428 = vst.msk [vmem:[%s3 + $0x10] sm:$0xf] %vm423, %v395
  %429 = vst.msk [vmem:[%s3 + $0x14] sm:$0xf] %vm423, %v396
  %430 = vst.msk [vmem:[%s3 + $0x18] sm:$0xf] %vm423, %v397
  %431 = vst.msk [vmem:[%s3 + $0x1c] sm:$0xf] %vm423, %v398
  %432 = vst.msk [vmem:[%s3 + $0x20] sm:$0xf] %vm423, %v399
  %433 = vst.msk [vmem:[%s3 + $0x24] sm:$0xf] %vm423, %v400
  %434 = vst.msk [vmem:[%s3 + $0x28] sm:$0xf] %vm423, %v401
  %435 = vst.msk [vmem:[%s3 + $0x2c] sm:$0xf] %vm423, %v402
  %436 = vst.msk [vmem:[%s3 + $0x30] sm:$0xf] %vm423, %v403
  %437 = vst.msk [vmem:[%s3 + $0x34] sm:$0xf] %vm423, %v404
  %438 = vst.msk [vmem:[%s3 + $0x38] sm:$0xf] %vm423, %v405
  %439 = vst.msk [vmem:[%s3 + $0x3c] sm:$0xf] %vm423, %v406
  // Predicated region
  $region14: #{vae_forward.4} parent=0 // pred_check
    _
  $region15: #{vae_forward.4} parent=0 // pred_check_branch
    %441 = sbr.rel (0) target = $region17
  $region16: #{vae_forward.4} parent=0 // pred_region
    _
  $region17: #{vae_forward.4} parent=0 // pred_fallthru
    _
  // Predicated region
  $region18: #{vae_forward.4} parent=0 // pred_check
    _
  $region19: #{vae_forward.4} parent=0 // pred_check_branch
    %443 = sbr.rel (0) target = $region21
  $region20: #{vae_forward.4} parent=0 // pred_region
    _
  $region21: #{vae_forward.4} parent=0 // pred_fallthru
    _

// kernel: vae_forward.3
$region0: #{vae_forward.3}
  #allocation0 [shape = 'u32[]', space=smem, size = 0x4, offset = 0x4, fixed_abs, tag = 'smem constant byte address 0x4 - core index']
  #allocation1 [shape = 'u32[144,128]{1,0:T(1,128)}', space=vmem, size = 0x12000, scoped, tag = 'internal scratch']
  %s0 = inlined_call_operand.vmem [shape: f32[512,16], index: 0, kind: input, shape index: {}]
  %s1 = inlined_call_operand.vmem [shape: bf16[16,16], index: 1, kind: input, shape index: {}]
  %s2 = inlined_call_operand.vmem [shape: f32[1,16], index: 2, kind: input, shape index: {}]
  %s3 = inlined_call_operand.vmem [shape: bf16[512,16], index: 3, kind: output, shape index: {}]
  %s4 = sld [smem:[#allocation0]]
  $region22: #{vae_forward.3} parent=0
    _
  %s6 = ssub.s32 1, %s4
  %s7 = scalar_select 0, %s6, %s4
  // Predicated region
  $region2: #{vae_forward.3} parent=0 // pred_check
    _
  $region3: #{vae_forward.3} parent=0 // pred_check_branch
    %9 = sbr.rel (0) target = $region5
  $region4: #{vae_forward.3} parent=0 // pred_region
    _
  $region5: #{vae_forward.3} parent=0 // pred_fallthru
    _
  // Predicated region
  $region6: #{vae_forward.3} parent=0 // pred_check
    _
  $region7: #{vae_forward.3} parent=0 // pred_check_branch
    %11 = sbr.rel (0) target = $region9
  $region8: #{vae_forward.3} parent=0 // pred_region
    _
  $region9: #{vae_forward.3} parent=0 // pred_fallthru
    _
  // Predicated region
  $region10: #{vae_forward.3} parent=0 // pred_check
    _
  $region11: #{vae_forward.3} parent=0 // pred_check_branch
    %13 = sbr.rel (0) target = $region13
  $region12: #{vae_forward.3} parent=0 // pred_region
    _
  $region13: #{vae_forward.3} parent=0 // pred_fallthru
    _
  %v15 = vld [vmem:[%s0] sm:$0xff]
  %v16 = vld [vmem:[%s0 + $0x8] sm:$0xff]
  %v17 = vld [vmem:[%s0 + $0x10] sm:$0xff]
  %v18 = vld [vmem:[%s0 + $0x18] sm:$0xff]
  %v19 = vld [vmem:[%s0 + $0x20] sm:$0xff]
  %v20 = vld [vmem:[%s0 + $0x28] sm:$0xff]
  %v21 = vld [vmem:[%s0 + $0x30] sm:$0xff]
  %v22 = vld [vmem:[%s0 + $0x38] sm:$0xff]
  %v23 = vld [vmem:[%s0 + $0x40] sm:$0xff]
  %v24 = vld [vmem:[%s0 + $0x48] sm:$0xff]
  %v25 = vld [vmem:[%s0 + $0x50] sm:$0xff]
  %v26 = vld [vmem:[%s0 + $0x58] sm:$0xff]
  %v27 = vld [vmem:[%s0 + $0x60] sm:$0xff]
  %v28 = vld [vmem:[%s0 + $0x68] sm:$0xff]
  %v29 = vld [vmem:[%s0 + $0x70] sm:$0xff]
  %v30 = vld [vmem:[%s0 + $0x78] sm:$0xff]
  %v31 = vld [vmem:[%s0 + $0x80] sm:$0xff]
  %v32 = vld [vmem:[%s0 + $0x88] sm:$0xff]
  %v33 = vld [vmem:[%s0 + $0x90] sm:$0xff]
  %v34 = vld [vmem:[%s0 + $0x98] sm:$0xff]
  %v35 = vld [vmem:[%s0 + $0xa0] sm:$0xff]
  %v36 = vld [vmem:[%s0 + $0xa8] sm:$0xff]
  %v37 = vld [vmem:[%s0 + $0xb0] sm:$0xff]
  %v38 = vld [vmem:[%s0 + $0xb8] sm:$0xff]
  %v39 = vld [vmem:[%s0 + $0xc0] sm:$0xff]
  %v40 = vld [vmem:[%s0 + $0xc8] sm:$0xff]
  %v41 = vld [vmem:[%s0 + $0xd0] sm:$0xff]
  %v42 = vld [vmem:[%s0 + $0xd8] sm:$0xff]
  %v43 = vld [vmem:[%s0 + $0xe0] sm:$0xff]
  %v44 = vld [vmem:[%s0 + $0xe8] sm:$0xff]
  %v45 = vld [vmem:[%s0 + $0xf0] sm:$0xff]
  %v46 = vld [vmem:[%s0 + $0xf8] sm:$0xff]
  %v47 = vld [vmem:[%s0 + $0x100] sm:$0xff]
  %v48 = vld [vmem:[%s0 + $0x108] sm:$0xff]
  %v49 = vld [vmem:[%s0 + $0x110] sm:$0xff]
  %v50 = vld [vmem:[%s0 + $0x118] sm:$0xff]
  %v51 = vld [vmem:[%s0 + $0x120] sm:$0xff]
  %v52 = vld [vmem:[%s0 + $0x128] sm:$0xff]
  %v53 = vld [vmem:[%s0 + $0x130] sm:$0xff]
  %v54 = vld [vmem:[%s0 + $0x138] sm:$0xff]
  %v55 = vld [vmem:[%s0 + $0x140] sm:$0xff]
  %v56 = vld [vmem:[%s0 + $0x148] sm:$0xff]
  %v57 = vld [vmem:[%s0 + $0x150] sm:$0xff]
  %v58 = vld [vmem:[%s0 + $0x158] sm:$0xff]
  %v59 = vld [vmem:[%s0 + $0x160] sm:$0xff]
  %v60 = vld [vmem:[%s0 + $0x168] sm:$0xff]
  %v61 = vld [vmem:[%s0 + $0x170] sm:$0xff]
  %v62 = vld [vmem:[%s0 + $0x178] sm:$0xff]
  %v63 = vld [vmem:[%s0 + $0x180] sm:$0xff]
  %v64 = vld [vmem:[%s0 + $0x188] sm:$0xff]
  %v65 = vld [vmem:[%s0 + $0x190] sm:$0xff]
  %v66 = vld [vmem:[%s0 + $0x198] sm:$0xff]
  %v67 = vld [vmem:[%s0 + $0x1a0] sm:$0xff]
  %v68 = vld [vmem:[%s0 + $0x1a8] sm:$0xff]
  %v69 = vld [vmem:[%s0 + $0x1b0] sm:$0xff]
  %v70 = vld [vmem:[%s0 + $0x1b8] sm:$0xff]
  %v71 = vld [vmem:[%s0 + $0x1c0] sm:$0xff]
  %v72 = vld [vmem:[%s0 + $0x1c8] sm:$0xff]
  %v73 = vld [vmem:[%s0 + $0x1d0] sm:$0xff]
  %v74 = vld [vmem:[%s0 + $0x1d8] sm:$0xff]
  %v75 = vld [vmem:[%s0 + $0x1e0] sm:$0xff]
  %v76 = vld [vmem:[%s0 + $0x1e8] sm:$0xff]
  %v77 = vld [vmem:[%s0 + $0x1f0] sm:$0xff]
  %v78 = vld [vmem:[%s0 + $0x1f8] sm:$0xff]
  %v79 = vpack.c.bf16 %v16, %v15
  %v80 = vpack.c.bf16 %v18, %v17
  %v81 = vpack.c.bf16 %v20, %v19
  %v82 = vpack.c.bf16 %v22, %v21
  %v83 = vpack.c.bf16 %v24, %v23
  %v84 = vpack.c.bf16 %v26, %v25
  %v85 = vpack.c.bf16 %v28, %v27
  %v86 = vpack.c.bf16 %v30, %v29
  %v87 = vpack.c.bf16 %v32, %v31
  %v88 = vpack.c.bf16 %v34, %v33
  %v89 = vpack.c.bf16 %v36, %v35
  %v90 = vpack.c.bf16 %v38, %v37
  %v91 = vpack.c.bf16 %v40, %v39
  %v92 = vpack.c.bf16 %v42, %v41
  %v93 = vpack.c.bf16 %v44, %v43
  %v94 = vpack.c.bf16 %v46, %v45
  %v95 = vpack.c.bf16 %v48, %v47
  %v96 = vpack.c.bf16 %v50, %v49
  %v97 = vpack.c.bf16 %v52, %v51
  %v98 = vpack.c.bf16 %v54, %v53
  %v99 = vpack.c.bf16 %v56, %v55
  %v100 = vpack.c.bf16 %v58, %v57
  %v101 = vpack.c.bf16 %v60, %v59
  %v102 = vpack.c.bf16 %v62, %v61
  %v103 = vpack.c.bf16 %v64, %v63
  %v104 = vpack.c.bf16 %v66, %v65
  %v105 = vpack.c.bf16 %v68, %v67
  %v106 = vpack.c.bf16 %v70, %v69
  %v107 = vpack.c.bf16 %v72, %v71
  %v108 = vpack.c.bf16 %v74, %v73
  %v109 = vpack.c.bf16 %v76, %v75
  %v110 = vpack.c.bf16 %v78, %v77
  %v111 = vld [vmem:[%s1] sm:$0xf]
  %v112 = vld [vmem:[%s1 + $0x4] sm:$0xf]
  %v113 = vld [vmem:[%s2] sm:$0x1]
  %v115 = vlaneseq
  %v116 = vshrl.u32 %v115, 7
  %v117 = vsub.s32 0, %v116
  %v118 = vrot.slane %v113, %v117
  %v122 = vunpack.c.l.b16 %v111
  %v123 = vunpack.c.l.b16 %v112
  %v124 = vpack.c.b16 %v123, %v122
  %vm126 = vcmask 130048
  %v128 = vsel %vm126, %v79, 0
  %v131 = vsel %vm126, %v80, 0
  %v134 = vsel %vm126, %v81, 0
  %v137 = vsel %vm126, %v82, 0
  %v140 = vsel %vm126, %v83, 0
  %v143 = vsel %vm126, %v84, 0
  %v146 = vsel %vm126, %v85, 0
  %v149 = vsel %vm126, %v86, 0
  %v152 = vsel %vm126, %v87, 0
  %v155 = vsel %vm126, %v88, 0
  %v158 = vsel %vm126, %v89, 0
  %v161 = vsel %vm126, %v90, 0
  %v164 = vsel %vm126, %v91, 0
  %v167 = vsel %vm126, %v92, 0
  %v170 = vsel %vm126, %v93, 0
  %v173 = vsel %vm126, %v94, 0
  %v176 = vsel %vm126, %v95, 0
  %v179 = vsel %vm126, %v96, 0
  %v182 = vsel %vm126, %v97, 0
  %v185 = vsel %vm126, %v98, 0
  %v188 = vsel %vm126, %v99, 0
  %v191 = vsel %vm126, %v100, 0
  %v194 = vsel %vm126, %v101, 0
  %v197 = vsel %vm126, %v102, 0
  %v200 = vsel %vm126, %v103, 0
  %v203 = vsel %vm126, %v104, 0
  %v206 = vsel %vm126, %v105, 0
  %v209 = vsel %vm126, %v106, 0
  %v212 = vsel %vm126, %v107, 0
  %v215 = vsel %vm126, %v108, 0
  %v218 = vsel %vm126, %v109, 0
  %v221 = vsel %vm126, %v110, 0
  %223 = vmatprep.subr.bf16.mxu0 0
  %224 = vmatpush1.bf16.msra.mxu0 0
  %225 = vmatprep.subr.bf16.mxu0 0
  %226 = vmatpush1.bf16.msra.mxu0 0
  %227 = vmatprep.subr.bf16.mxu0 0
  %228 = vmatpush1.bf16.msra.mxu0 0
  %229 = vmatprep.subr.bf16.mxu0 0
  %230 = vmatpush1.bf16.msra.mxu0 0
  %231 = vmatprep.subr.bf16.mxu0 0
  %232 = vmatpush1.bf16.msra.mxu0 0
  %233 = vmatprep.subr.bf16.mxu0 0
  %234 = vmatpush1.bf16.msra.mxu0 0
  %235 = vmatprep.subr.bf16.mxu0 0
  %236 = vmatpush1.bf16.msra.mxu0 0
  %237 = vmatprep.subr.bf16.mxu0 0
  %238 = vmatpush1.bf16.msra.mxu0 %v124
  %239 = vmatprep.subr.bf16.mxu0 0
  %240 = vmatpush2.bf16.msra.mxu0 0
  %241 = vmatprep.subr.bf16.mxu0 0
  %242 = vmatpush2.bf16.msra.mxu0 0
  %243 = vmatprep.subr.bf16.mxu0 0
  %244 = vmatpush2.bf16.msra.mxu0 0
  %245 = vmatprep.subr.bf16.mxu0 0
  %246 = vmatpush2.bf16.msra.mxu0 0
  %247 = vmatprep.subr.bf16.mxu0 0
  %248 = vmatpush2.bf16.msra.mxu0 0
  %249 = vmatprep.subr.bf16.mxu0 0
  %250 = vmatpush2.bf16.msra.mxu0 0
  %251 = vmatprep.subr.bf16.mxu0 0
  %252 = vmatpush2.bf16.msra.mxu0 0
  %253 = vmatprep.subr.bf16.mxu0 0
  %254 = vmatpush2.bf16.msra.mxu0 0
  %255 = vmatprep.mubr.bf16.mxu0 0
  %256 = vmatmul.mubr.bf16.gmra.mxu0 %v128
  %v257 = vpop.f32.mrf.mxu0
  %v258 = vadd.f32 %v118, %v257
  %v259 = vpop.f32.mrf.mxu0
  %v260 = vpop.f32.mrf.mxu0
  %v261 = vadd.f32 %v118, %v260
  %v262 = vpop.f32.mrf.mxu0
  %263 = vmatprep.mubr.bf16.mxu0 0
  %264 = vmatmul.mubr.bf16.gmra.mxu0 %v131
  %v265 = vpop.f32.mrf.mxu0
  %v266 = vadd.f32 %v118, %v265
  %v267 = vpop.f32.mrf.mxu0
  %v268 = vpop.f32.mrf.mxu0
  %v269 = vadd.f32 %v118, %v268
  %v270 = vpop.f32.mrf.mxu0
  %271 = vmatprep.mubr.bf16.mxu0 0
  %272 = vmatmul.mubr.bf16.gmra.mxu0 %v134
  %v273 = vpop.f32.mrf.mxu0
  %v274 = vadd.f32 %v118, %v273
  %v275 = vpop.f32.mrf.mxu0
  %v276 = vpop.f32.mrf.mxu0
  %v277 = vadd.f32 %v118, %v276
  %v278 = vpop.f32.mrf.mxu0
  %279 = vmatprep.mubr.bf16.mxu0 0
  %280 = vmatmul.mubr.bf16.gmra.mxu0 %v137
  %v281 = vpop.f32.mrf.mxu0
  %v282 = vadd.f32 %v118, %v281
  %v283 = vpop.f32.mrf.mxu0
  %v284 = vpop.f32.mrf.mxu0
  %v285 = vadd.f32 %v118, %v284
  %v286 = vpop.f32.mrf.mxu0
  %287 = vmatprep.mubr.bf16.mxu0 0
  %288 = vmatmul.mubr.bf16.gmra.mxu0 %v140
  %v289 = vpop.f32.mrf.mxu0
  %v290 = vadd.f32 %v118, %v289
  %v291 = vpop.f32.mrf.mxu0
  %v292 = vpop.f32.mrf.mxu0
  %v293 = vadd.f32 %v118, %v292
  %v294 = vpop.f32.mrf.mxu0
  %295 = vmatprep.mubr.bf16.mxu0 0
  %296 = vmatmul.mubr.bf16.gmra.mxu0 %v143
  %v297 = vpop.f32.mrf.mxu0
  %v298 = vadd.f32 %v118, %v297
  %v299 = vpop.f32.mrf.mxu0
  %v300 = vpop.f32.mrf.mxu0
  %v301 = vadd.f32 %v118, %v300
  %v302 = vpop.f32.mrf.mxu0
  %303 = vmatprep.mubr.bf16.mxu0 0
  %304 = vmatmul.mubr.bf16.gmra.mxu0 %v146
  %v305 = vpop.f32.mrf.mxu0
  %v306 = vadd.f32 %v118, %v305
  %v307 = vpop.f32.mrf.mxu0
  %v308 = vpop.f32.mrf.mxu0
  %v309 = vadd.f32 %v118, %v308
  %v310 = vpop.f32.mrf.mxu0
  %311 = vmatprep.mubr.bf16.mxu0 0
  %312 = vmatmul.mubr.bf16.gmra.mxu0 %v149
  %v313 = vpop.f32.mrf.mxu0
  %v314 = vadd.f32 %v118, %v313
  %v315 = vpop.f32.mrf.mxu0
  %v316 = vpop.f32.mrf.mxu0
  %v317 = vadd.f32 %v118, %v316
  %v318 = vpop.f32.mrf.mxu0
  %319 = vmatprep.mubr.bf16.mxu0 0
  %320 = vmatmul.mubr.bf16.gmra.mxu0 %v152
  %v321 = vpop.f32.mrf.mxu0
  %v322 = vadd.f32 %v118, %v321
  %v323 = vpop.f32.mrf.mxu0
  %v324 = vpop.f32.mrf.mxu0
  %v325 = vadd.f32 %v118, %v324
  %v326 = vpop.f32.mrf.mxu0
  %327 = vmatprep.mubr.bf16.mxu0 0
  %328 = vmatmul.mubr.bf16.gmra.mxu0 %v155
  %v329 = vpop.f32.mrf.mxu0
  %v330 = vadd.f32 %v118, %v329
  %v331 = vpop.f32.mrf.mxu0
  %v332 = vpop.f32.mrf.mxu0
  %v333 = vadd.f32 %v118, %v332
  %v334 = vpop.f32.mrf.mxu0
  %335 = vmatprep.mubr.bf16.mxu0 0
  %336 = vmatmul.mubr.bf16.gmra.mxu0 %v158
  %v337 = vpop.f32.mrf.mxu0
  %v338 = vadd.f32 %v118, %v337
  %v339 = vpop.f32.mrf.mxu0
  %v340 = vpop.f32.mrf.mxu0
  %v341 = vadd.f32 %v118, %v340
  %v342 = vpop.f32.mrf.mxu0
  %343 = vmatprep.mubr.bf16.mxu0 0
  %344 = vmatmul.mubr.bf16.gmra.mxu0 %v161
  %v345 = vpop.f32.mrf.mxu0
  %v346 = vadd.f32 %v118, %v345
  %v347 = vpop.f32.mrf.mxu0
  %v348 = vpop.f32.mrf.mxu0
  %v349 = vadd.f32 %v118, %v348
  %v350 = vpop.f32.mrf.mxu0
  %351 = vmatprep.mubr.bf16.mxu0 0
  %352 = vmatmul.mubr.bf16.gmra.mxu0 %v164
  %v353 = vpop.f32.mrf.mxu0
  %v354 = vadd.f32 %v118, %v353
  %v355 = vpop.f32.mrf.mxu0
  %v356 = vpop.f32.mrf.mxu0
  %v357 = vadd.f32 %v118, %v356
  %v358 = vpop.f32.mrf.mxu0
  %359 = vmatprep.mubr.bf16.mxu0 0
  %360 = vmatmul.mubr.bf16.gmra.mxu0 %v167
  %v361 = vpop.f32.mrf.mxu0
  %v362 = vadd.f32 %v118, %v361
  %v363 = vpop.f32.mrf.mxu0
  %v364 = vpop.f32.mrf.mxu0
  %v365 = vadd.f32 %v118, %v364
  %v366 = vpop.f32.mrf.mxu0
  %367 = vmatprep.mubr.bf16.mxu0 0
  %368 = vmatmul.mubr.bf16.gmra.mxu0 %v170
  %v369 = vpop.f32.mrf.mxu0
  %v370 = vadd.f32 %v118, %v369
  %v371 = vpop.f32.mrf.mxu0
  %v372 = vpop.f32.mrf.mxu0
  %v373 = vadd.f32 %v118, %v372
  %v374 = vpop.f32.mrf.mxu0
  %375 = vmatprep.mubr.bf16.mxu0 0
  %376 = vmatmul.mubr.bf16.gmra.mxu0 %v173
  %v377 = vpop.f32.mrf.mxu0
  %v378 = vadd.f32 %v118, %v377
  %v379 = vpop.f32.mrf.mxu0
  %v380 = vpop.f32.mrf.mxu0
  %v381 = vadd.f32 %v118, %v380
  %v382 = vpop.f32.mrf.mxu0
  %383 = vmatprep.mubr.bf16.mxu0 0
  %384 = vmatmul.mubr.bf16.gmra.mxu0 %v176
  %v385 = vpop.f32.mrf.mxu0
  %v386 = vadd.f32 %v118, %v385
  %v387 = vpop.f32.mrf.mxu0
  %v388 = vpop.f32.mrf.mxu0
  %v389 = vadd.f32 %v118, %v388
  %v390 = vpop.f32.mrf.mxu0
  %391 = vmatprep.mubr.bf16.mxu0 0
  %392 = vmatmul.mubr.bf16.gmra.mxu0 %v179
  %v393 = vpop.f32.mrf.mxu0
  %v394 = vadd.f32 %v118, %v393
  %v395 = vpop.f32.mrf.mxu0
  %v396 = vpop.f32.mrf.mxu0
  %v397 = vadd.f32 %v118, %v396
  %v398 = vpop.f32.mrf.mxu0
  %399 = vmatprep.mubr.bf16.mxu0 0
  %400 = vmatmul.mubr.bf16.gmra.mxu0 %v182
  %v401 = vpop.f32.mrf.mxu0
  %v402 = vadd.f32 %v118, %v401
  %v403 = vpop.f32.mrf.mxu0
  %v404 = vpop.f32.mrf.mxu0
  %v405 = vadd.f32 %v118, %v404
  %v406 = vpop.f32.mrf.mxu0
  %407 = vmatprep.mubr.bf16.mxu0 0
  %408 = vmatmul.mubr.bf16.gmra.mxu0 %v185
  %v409 = vpop.f32.mrf.mxu0
  %v410 = vadd.f32 %v118, %v409
  %v411 = vpop.f32.mrf.mxu0
  %v412 = vpop.f32.mrf.mxu0
  %v413 = vadd.f32 %v118, %v412
  %v414 = vpop.f32.mrf.mxu0
  %415 = vmatprep.mubr.bf16.mxu0 0
  %416 = vmatmul.mubr.bf16.gmra.mxu0 %v188
  %v417 = vpop.f32.mrf.mxu0
  %v418 = vadd.f32 %v118, %v417
  %v419 = vpop.f32.mrf.mxu0
  %v420 = vpop.f32.mrf.mxu0
  %v421 = vadd.f32 %v118, %v420
  %v422 = vpop.f32.mrf.mxu0
  %423 = vmatprep.mubr.bf16.mxu0 0
  %424 = vmatmul.mubr.bf16.gmra.mxu0 %v191
  %v425 = vpop.f32.mrf.mxu0
  %v426 = vadd.f32 %v118, %v425
  %v427 = vpop.f32.mrf.mxu0
  %v428 = vpop.f32.mrf.mxu0
  %v429 = vadd.f32 %v118, %v428
  %v430 = vpop.f32.mrf.mxu0
  %431 = vmatprep.mubr.bf16.mxu0 0
  %432 = vmatmul.mubr.bf16.gmra.mxu0 %v194
  %v433 = vpop.f32.mrf.mxu0
  %v434 = vadd.f32 %v118, %v433
  %v435 = vpop.f32.mrf.mxu0
  %v436 = vpop.f32.mrf.mxu0
  %v437 = vadd.f32 %v118, %v436
  %v438 = vpop.f32.mrf.mxu0
  %439 = vmatprep.mubr.bf16.mxu0 0
  %440 = vmatmul.mubr.bf16.gmra.mxu0 %v197
  %v441 = vpop.f32.mrf.mxu0
  %v442 = vadd.f32 %v118, %v441
  %v443 = vpop.f32.mrf.mxu0
  %v444 = vpop.f32.mrf.mxu0
  %v445 = vadd.f32 %v118, %v444
  %v446 = vpop.f32.mrf.mxu0
  %447 = vmatprep.mubr.bf16.mxu0 0
  %448 = vmatmul.mubr.bf16.gmra.mxu0 %v200
  %v449 = vpop.f32.mrf.mxu0
  %v450 = vadd.f32 %v118, %v449
  %v451 = vpop.f32.mrf.mxu0
  %v452 = vpop.f32.mrf.mxu0
  %v453 = vadd.f32 %v118, %v452
  %v454 = vpop.f32.mrf.mxu0
  %455 = vmatprep.mubr.bf16.mxu0 0
  %456 = vmatmul.mubr.bf16.gmra.mxu0 %v203
  %v457 = vpop.f32.mrf.mxu0
  %v458 = vadd.f32 %v118, %v457
  %v459 = vpop.f32.mrf.mxu0
  %v460 = vpop.f32.mrf.mxu0
  %v461 = vadd.f32 %v118, %v460
  %v462 = vpop.f32.mrf.mxu0
  %463 = vmatprep.mubr.bf16.mxu0 0
  %464 = vmatmul.mubr.bf16.gmra.mxu0 %v206
  %v465 = vpop.f32.mrf.mxu0
  %v466 = vadd.f32 %v118, %v465
  %v467 = vpop.f32.mrf.mxu0
  %v468 = vpop.f32.mrf.mxu0
  %v469 = vadd.f32 %v118, %v468
  %v470 = vpop.f32.mrf.mxu0
  %471 = vmatprep.mubr.bf16.mxu0 0
  %472 = vmatmul.mubr.bf16.gmra.mxu0 %v209
  %v473 = vpop.f32.mrf.mxu0
  %v474 = vadd.f32 %v118, %v473
  %v475 = vpop.f32.mrf.mxu0
  %v476 = vpop.f32.mrf.mxu0
  %v477 = vadd.f32 %v118, %v476
  %v478 = vpop.f32.mrf.mxu0
  %479 = vmatprep.mubr.bf16.mxu0 0
  %480 = vmatmul.mubr.bf16.gmra.mxu0 %v212
  %v481 = vpop.f32.mrf.mxu0
  %v482 = vadd.f32 %v118, %v481
  %v483 = vpop.f32.mrf.mxu0
  %v484 = vpop.f32.mrf.mxu0
  %v485 = vadd.f32 %v118, %v484
  %v486 = vpop.f32.mrf.mxu0
  %487 = vmatprep.mubr.bf16.mxu0 0
  %488 = vmatmul.mubr.bf16.gmra.mxu0 %v215
  %v489 = vpop.f32.mrf.mxu0
  %v490 = vadd.f32 %v118, %v489
  %v491 = vpop.f32.mrf.mxu0
  %v492 = vpop.f32.mrf.mxu0
  %v493 = vadd.f32 %v118, %v492
  %v494 = vpop.f32.mrf.mxu0
  %495 = vmatprep.mubr.bf16.mxu0 0
  %496 = vmatmul.mubr.bf16.gmra.mxu0 %v218
  %v497 = vpop.f32.mrf.mxu0
  %v498 = vadd.f32 %v118, %v497
  %v499 = vpop.f32.mrf.mxu0
  %v500 = vpop.f32.mrf.mxu0
  %v501 = vadd.f32 %v118, %v500
  %v502 = vpop.f32.mrf.mxu0
  %503 = vmatprep.mubr.bf16.mxu0 0
  %504 = vmatmul.mubr.bf16.gmra.mxu0 %v221
  %v505 = vpop.f32.mrf.mxu0
  %v506 = vadd.f32 %v118, %v505
  %v507 = vpop.f32.mrf.mxu0
  %v508 = vpop.f32.mrf.mxu0
  %v509 = vadd.f32 %v118, %v508
  %v510 = vpop.f32.mrf.mxu0
  %511 = vdwg.mxu0
  %v512 = vmax.f32 %v258, 0.0
  %v513 = vmax.f32 %v261, 0.0
  %v514 = vmax.f32 %v266, 0.0
  %v515 = vmax.f32 %v269, 0.0
  %v516 = vmax.f32 %v274, 0.0
  %v517 = vmax.f32 %v277, 0.0
  %v518 = vmax.f32 %v282, 0.0
  %v519 = vmax.f32 %v285, 0.0
  %v520 = vmax.f32 %v290, 0.0
  %v521 = vmax.f32 %v293, 0.0
  %v522 = vmax.f32 %v298, 0.0
  %v523 = vmax.f32 %v301, 0.0
  %v524 = vmax.f32 %v306, 0.0
  %v525 = vmax.f32 %v309, 0.0
  %v526 = vmax.f32 %v314, 0.0
  %v527 = vmax.f32 %v317, 0.0
  %v528 = vmax.f32 %v322, 0.0
  %v529 = vmax.f32 %v325, 0.0
  %v530 = vmax.f32 %v330, 0.0
  %v531 = vmax.f32 %v333, 0.0
  %v532 = vmax.f32 %v338, 0.0
  %v533 = vmax.f32 %v341, 0.0
  %v534 = vmax.f32 %v346, 0.0
  %v535 = vmax.f32 %v349, 0.0
  %v536 = vmax.f32 %v354, 0.0
  %v537 = vmax.f32 %v357, 0.0
  %v538 = vmax.f32 %v362, 0.0
  %v539 = vmax.f32 %v365, 0.0
  %v540 = vmax.f32 %v370, 0.0
  %v541 = vmax.f32 %v373, 0.0
  %v542 = vmax.f32 %v378, 0.0
  %v543 = vmax.f32 %v381, 0.0
  %v544 = vmax.f32 %v386, 0.0
  %v545 = vmax.f32 %v389, 0.0
  %v546 = vmax.f32 %v394, 0.0
  %v547 = vmax.f32 %v397, 0.0
  %v548 = vmax.f32 %v402, 0.0
  %v549 = vmax.f32 %v405, 0.0
  %v550 = vmax.f32 %v410, 0.0
  %v551 = vmax.f32 %v413, 0.0
  %v552 = vmax.f32 %v418, 0.0
  %v553 = vmax.f32 %v421, 0.0
  %v554 = vmax.f32 %v426, 0.0
  %v555 = vmax.f32 %v429, 0.0
  %v556 = vmax.f32 %v434, 0.0
  %v557 = vmax.f32 %v437, 0.0
  %v558 = vmax.f32 %v442, 0.0
  %v559 = vmax.f32 %v445, 0.0
  %v560 = vmax.f32 %v450, 0.0
  %v561 = vmax.f32 %v453, 0.0
  %v562 = vmax.f32 %v458, 0.0
  %v563 = vmax.f32 %v461, 0.0
  %v564 = vmax.f32 %v466, 0.0
  %v565 = vmax.f32 %v469, 0.0
  %v566 = vmax.f32 %v474, 0.0
  %v567 = vmax.f32 %v477, 0.0
  %v568 = vmax.f32 %v482, 0.0
  %v569 = vmax.f32 %v485, 0.0
  %v570 = vmax.f32 %v490, 0.0
  %v571 = vmax.f32 %v493, 0.0
  %v572 = vmax.f32 %v498, 0.0
  %v573 = vmax.f32 %v501, 0.0
  %v574 = vmax.f32 %v506, 0.0
  %v575 = vmax.f32 %v509, 0.0
  %v576 = vpack.c.bf16 %v513, %v512
  %v577 = vpack.c.bf16 %v515, %v514
  %v578 = vpack.c.bf16 %v517, %v516
  %v579 = vpack.c.bf16 %v519, %v518
  %v580 = vpack.c.bf16 %v521, %v520
  %v581 = vpack.c.bf16 %v523, %v522
  %v582 = vpack.c.bf16 %v525, %v524
  %v583 = vpack.c.bf16 %v527, %v526
  %v584 = vpack.c.bf16 %v529, %v528
  %v585 = vpack.c.bf16 %v531, %v530
  %v586 = vpack.c.bf16 %v533, %v532
  %v587 = vpack.c.bf16 %v535, %v534
  %v588 = vpack.c.bf16 %v537, %v536
  %v589 = vpack.c.bf16 %v539, %v538
  %v590 = vpack.c.bf16 %v541, %v540
  %v591 = vpack.c.bf16 %v543, %v542
  %v592 = vpack.c.bf16 %v545, %v544
  %v593 = vpack.c.bf16 %v547, %v546
  %v594 = vpack.c.bf16 %v549, %v548
  %v595 = vpack.c.bf16 %v551, %v550
  %v596 = vpack.c.bf16 %v553, %v552
  %v597 = vpack.c.bf16 %v555, %v554
  %v598 = vpack.c.bf16 %v557, %v556
  %v599 = vpack.c.bf16 %v559, %v558
  %v600 = vpack.c.bf16 %v561, %v560
  %v601 = vpack.c.bf16 %v563, %v562
  %v602 = vpack.c.bf16 %v565, %v564
  %v603 = vpack.c.bf16 %v567, %v566
  %v604 = vpack.c.bf16 %v569, %v568
  %v605 = vpack.c.bf16 %v571, %v570
  %v606 = vpack.c.bf16 %v573, %v572
  %v607 = vpack.c.bf16 %v575, %v574
  %v640 = vunpack.c.l.b16 %v576
  %v641 = vunpack.c.h.b16 %v576
  %v642 = vunpack.c.l.b16 %v577
  %v643 = vunpack.c.h.b16 %v577
  %v644 = vunpack.c.l.b16 %v578
  %v645 = vunpack.c.h.b16 %v578
  %v646 = vunpack.c.l.b16 %v579
  %v647 = vunpack.c.h.b16 %v579
  %v648 = vunpack.c.l.b16 %v580
  %v649 = vunpack.c.h.b16 %v580
  %v650 = vunpack.c.l.b16 %v581
  %v651 = vunpack.c.h.b16 %v581
  %v652 = vunpack.c.l.b16 %v582
  %v653 = vunpack.c.h.b16 %v582
  %v654 = vunpack.c.l.b16 %v583
  %v655 = vunpack.c.h.b16 %v583
  %v656 = vunpack.c.l.b16 %v584
  %v657 = vunpack.c.h.b16 %v584
  %v658 = vunpack.c.l.b16 %v585
  %v659 = vunpack.c.h.b16 %v585
  %v660 = vunpack.c.l.b16 %v586
  %v661 = vunpack.c.h.b16 %v586
  %v662 = vunpack.c.l.b16 %v587
  %v663 = vunpack.c.h.b16 %v587
  %v664 = vunpack.c.l.b16 %v588
  %v665 = vunpack.c.h.b16 %v588
  %v666 = vunpack.c.l.b16 %v589
  %v667 = vunpack.c.h.b16 %v589
  %v668 = vunpack.c.l.b16 %v590
  %v669 = vunpack.c.h.b16 %v590
  %v670 = vunpack.c.l.b16 %v591
  %v671 = vunpack.c.h.b16 %v591
  %v672 = vunpack.c.l.b16 %v592
  %v673 = vunpack.c.h.b16 %v592
  %v674 = vunpack.c.l.b16 %v593
  %v675 = vunpack.c.h.b16 %v593
  %v676 = vunpack.c.l.b16 %v594
  %v677 = vunpack.c.h.b16 %v594
  %v678 = vunpack.c.l.b16 %v595
  %v679 = vunpack.c.h.b16 %v595
  %v680 = vunpack.c.l.b16 %v596
  %v681 = vunpack.c.h.b16 %v596
  %v682 = vunpack.c.l.b16 %v597
  %v683 = vunpack.c.h.b16 %v597
  %v684 = vunpack.c.l.b16 %v598
  %v685 = vunpack.c.h.b16 %v598
  %v686 = vunpack.c.l.b16 %v599
  %v687 = vunpack.c.h.b16 %v599
  %v688 = vunpack.c.l.b16 %v600
  %v689 = vunpack.c.h.b16 %v600
  %v690 = vunpack.c.l.b16 %v601
  %v691 = vunpack.c.h.b16 %v601
  %v692 = vunpack.c.l.b16 %v602
  %v693 = vunpack.c.h.b16 %v602
  %v694 = vunpack.c.l.b16 %v603
  %v695 = vunpack.c.h.b16 %v603
  %v696 = vunpack.c.l.b16 %v604
  %v697 = vunpack.c.h.b16 %v604
  %v698 = vunpack.c.l.b16 %v605
  %v699 = vunpack.c.h.b16 %v605
  %v700 = vunpack.c.l.b16 %v606
  %v701 = vunpack.c.h.b16 %v606
  %v702 = vunpack.c.l.b16 %v607
  %v703 = vunpack.c.h.b16 %v607
  %v704 = vpack.c.b16 %v640, %v640
  %v705 = vpack.c.b16 %v641, %v641
  %v706 = vpack.c.b16 %v642, %v642
  %v707 = vpack.c.b16 %v643, %v643
  %v708 = vpack.c.b16 %v644, %v644
  %v709 = vpack.c.b16 %v645, %v645
  %v710 = vpack.c.b16 %v646, %v646
  %v711 = vpack.c.b16 %v647, %v647
  %v712 = vpack.c.b16 %v648, %v648
  %v713 = vpack.c.b16 %v649, %v649
  %v714 = vpack.c.b16 %v650, %v650
  %v715 = vpack.c.b16 %v651, %v651
  %v716 = vpack.c.b16 %v652, %v652
  %v717 = vpack.c.b16 %v653, %v653
  %v718 = vpack.c.b16 %v654, %v654
  %v719 = vpack.c.b16 %v655, %v655
  %v720 = vpack.c.b16 %v656, %v656
  %v721 = vpack.c.b16 %v657, %v657
  %v722 = vpack.c.b16 %v658, %v658
  %v723 = vpack.c.b16 %v659, %v659
  %v724 = vpack.c.b16 %v660, %v660
  %v725 = vpack.c.b16 %v661, %v661
  %v726 = vpack.c.b16 %v662, %v662
  %v727 = vpack.c.b16 %v663, %v663
  %v728 = vpack.c.b16 %v664, %v664
  %v729 = vpack.c.b16 %v665, %v665
  %v730 = vpack.c.b16 %v666, %v666
  %v731 = vpack.c.b16 %v667, %v667
  %v732 = vpack.c.b16 %v668, %v668
  %v733 = vpack.c.b16 %v669, %v669
  %v734 = vpack.c.b16 %v670, %v670
  %v735 = vpack.c.b16 %v671, %v671
  %v736 = vpack.c.b16 %v672, %v672
  %v737 = vpack.c.b16 %v673, %v673
  %v738 = vpack.c.b16 %v674, %v674
  %v739 = vpack.c.b16 %v675, %v675
  %v740 = vpack.c.b16 %v676, %v676
  %v741 = vpack.c.b16 %v677, %v677
  %v742 = vpack.c.b16 %v678, %v678
  %v743 = vpack.c.b16 %v679, %v679
  %v744 = vpack.c.b16 %v680, %v680
  %v745 = vpack.c.b16 %v681, %v681
  %v746 = vpack.c.b16 %v682, %v682
  %v747 = vpack.c.b16 %v683, %v683
  %v748 = vpack.c.b16 %v684, %v684
  %v749 = vpack.c.b16 %v685, %v685
  %v750 = vpack.c.b16 %v686, %v686
  %v751 = vpack.c.b16 %v687, %v687
  %v752 = vpack.c.b16 %v688, %v688
  %v753 = vpack.c.b16 %v689, %v689
  %v754 = vpack.c.b16 %v690, %v690
  %v755 = vpack.c.b16 %v691, %v691
  %v756 = vpack.c.b16 %v692, %v692
  %v757 = vpack.c.b16 %v693, %v693
  %v758 = vpack.c.b16 %v694, %v694
  %v759 = vpack.c.b16 %v695, %v695
  %v760 = vpack.c.b16 %v696, %v696
  %v761 = vpack.c.b16 %v697, %v697
  %v762 = vpack.c.b16 %v698, %v698
  %v763 = vpack.c.b16 %v699, %v699
  %v764 = vpack.c.b16 %v700, %v700
  %v765 = vpack.c.b16 %v701, %v701
  %v766 = vpack.c.b16 %v702, %v702
  %v767 = vpack.c.b16 %v703, %v703
  %vm832 = vcmask 125952
  %833 = vst.msk [vmem:[%s3] sm:$0xf] %vm832, %v704
  %834 = vst.msk [vmem:[%s3 + $0x4] sm:$0xf] %vm832, %v705
  %835 = vst.msk [vmem:[%s3 + $0x8] sm:$0xf] %vm832, %v706
  %836 = vst.msk [vmem:[%s3 + $0xc] sm:$0xf] %vm832, %v707
  %837 = vst.msk [vmem:[%s3 + $0x10] sm:$0xf] %vm832, %v708
  %838 = vst.msk [vmem:[%s3 + $0x14] sm:$0xf] %vm832, %v709
  %839 = vst.msk [vmem:[%s3 + $0x18] sm:$0xf] %vm832, %v710
  %840 = vst.msk [vmem:[%s3 + $0x1c] sm:$0xf] %vm832, %v711
  %841 = vst.msk [vmem:[%s3 + $0x20] sm:$0xf] %vm832, %v712
  %842 = vst.msk [vmem:[%s3 + $0x24] sm:$0xf] %vm832, %v713
  %843 = vst.msk [vmem:[%s3 + $0x28] sm:$0xf] %vm832, %v714
  %844 = vst.msk [vmem:[%s3 + $0x2c] sm:$0xf] %vm832, %v715
  %845 = vst.msk [vmem:[%s3 + $0x30] sm:$0xf] %vm832, %v716
  %846 = vst.msk [vmem:[%s3 + $0x34] sm:$0xf] %vm832, %v717
  %847 = vst.msk [vmem:[%s3 + $0x38] sm:$0xf] %vm832, %v718
  %848 = vst.msk [vmem:[%s3 + $0x3c] sm:$0xf] %vm832, %v719
  %849 = vst.msk [vmem:[%s3 + $0x40] sm:$0xf] %vm832, %v720
  %850 = vst.msk [vmem:[%s3 + $0x44] sm:$0xf] %vm832, %v721
  %851 = vst.msk [vmem:[%s3 + $0x48] sm:$0xf] %vm832, %v722
  %852 = vst.msk [vmem:[%s3 + $0x4c] sm:$0xf] %vm832, %v723
  %853 = vst.msk [vmem:[%s3 + $0x50] sm:$0xf] %vm832, %v724
  %854 = vst.msk [vmem:[%s3 + $0x54] sm:$0xf] %vm832, %v725
  %855 = vst.msk [vmem:[%s3 + $0x58] sm:$0xf] %vm832, %v726
  %856 = vst.msk [vmem:[%s3 + $0x5c] sm:$0xf] %vm832, %v727
  %857 = vst.msk [vmem:[%s3 + $0x60] sm:$0xf] %vm832, %v728
  %858 = vst.msk [vmem:[%s3 + $0x64] sm:$0xf] %vm832, %v729
  %859 = vst.msk [vmem:[%s3 + $0x68] sm:$0xf] %vm832, %v730
  %860 = vst.msk [vmem:[%s3 + $0x6c] sm:$0xf] %vm832, %v731
  %861 = vst.msk [vmem:[%s3 + $0x70] sm:$0xf] %vm832, %v732
  %862 = vst.msk [vmem:[%s3 + $0x74] sm:$0xf] %vm832, %v733
  %863 = vst.msk [vmem:[%s3 + $0x78] sm:$0xf] %vm832, %v734
  %864 = vst.msk [vmem:[%s3 + $0x7c] sm:$0xf] %vm832, %v735
  %865 = vst.msk [vmem:[%s3 + $0x80] sm:$0xf] %vm832, %v736
  %866 = vst.msk [vmem:[%s3 + $0x84] sm:$0xf] %vm832, %v737
  %867 = vst.msk [vmem:[%s3 + $0x88] sm:$0xf] %vm832, %v738
  %868 = vst.msk [vmem:[%s3 + $0x8c] sm:$0xf] %vm832, %v739
  %869 = vst.msk [vmem:[%s3 + $0x90] sm:$0xf] %vm832, %v740
  %870 = vst.msk [vmem:[%s3 + $0x94] sm:$0xf] %vm832, %v741
  %871 = vst.msk [vmem:[%s3 + $0x98] sm:$0xf] %vm832, %v742
  %872 = vst.msk [vmem:[%s3 + $0x9c] sm:$0xf] %vm832, %v743
  %873 = vst.msk [vmem:[%s3 + $0xa0] sm:$0xf] %vm832, %v744
  %874 = vst.msk [vmem:[%s3 + $0xa4] sm:$0xf] %vm832, %v745
  %875 = vst.msk [vmem:[%s3 + $0xa8] sm:$0xf] %vm832, %v746
  %876 = vst.msk [vmem:[%s3 + $0xac] sm:$0xf] %vm832, %v747
  %877 = vst.msk [vmem:[%s3 + $0xb0] sm:$0xf] %vm832, %v748
  %878 = vst.msk [vmem:[%s3 + $0xb4] sm:$0xf] %vm832, %v749
  %879 = vst.msk [vmem:[%s3 + $0xb8] sm:$0xf] %vm832, %v750
  %880 = vst.msk [vmem:[%s3 + $0xbc] sm:$0xf] %vm832, %v751
  %881 = vst.msk [vmem:[%s3 + $0xc0] sm:$0xf] %vm832, %v752
  %882 = vst.msk [vmem:[%s3 + $0xc4] sm:$0xf] %vm832, %v753
  %883 = vst.msk [vmem:[%s3 + $0xc8] sm:$0xf] %vm832, %v754
  %884 = vst.msk [vmem:[%s3 + $0xcc] sm:$0xf] %vm832, %v755
  %885 = vst.msk [vmem:[%s3 + $0xd0] sm:$0xf] %vm832, %v756
  %886 = vst.msk [vmem:[%s3 + $0xd4] sm:$0xf] %vm832, %v757
  %887 = vst.msk [vmem:[%s3 + $0xd8] sm:$0xf] %vm832, %v758
  %888 = vst.msk [vmem:[%s3 + $0xdc] sm:$0xf] %vm832, %v759
  %889 = vst.msk [vmem:[%s3 + $0xe0] sm:$0xf] %vm832, %v760
  %890 = vst.msk [vmem:[%s3 + $0xe4] sm:$0xf] %vm832, %v761
  %891 = vst.msk [vmem:[%s3 + $0xe8] sm:$0xf] %vm832, %v762
  %892 = vst.msk [vmem:[%s3 + $0xec] sm:$0xf] %vm832, %v763
  %893 = vst.msk [vmem:[%s3 + $0xf0] sm:$0xf] %vm832, %v764
  %894 = vst.msk [vmem:[%s3 + $0xf4] sm:$0xf] %vm832, %v765
  %895 = vst.msk [vmem:[%s3 + $0xf8] sm:$0xf] %vm832, %v766
  %896 = vst.msk [vmem:[%s3 + $0xfc] sm:$0xf] %vm832, %v767
  // Predicated region
  $region14: #{vae_forward.3} parent=0 // pred_check
    _
  $region15: #{vae_forward.3} parent=0 // pred_check_branch
    %898 = sbr.rel (0) target = $region17
  $region16: #{vae_forward.3} parent=0 // pred_region
    _
  $region17: #{vae_forward.3} parent=0 // pred_fallthru
    _
  // Predicated region
  $region18: #{vae_forward.3} parent=0 // pred_check
    _
  $region19: #{vae_forward.3} parent=0 // pred_check_branch
    %900 = sbr.rel (0) target = $region21
  $region20: #{vae_forward.3} parent=0 // pred_region
    _
  $region21: #{vae_forward.3} parent=0 // pred_fallthru
    _

// kernel: vae_forward.5
$region0: #{vae_forward.5}
  #allocation0 [shape = 'u32[]', space=smem, size = 0x4, offset = 0x4, fixed_abs, tag = 'smem constant byte address 0x4 - core index']
  #allocation1 [shape = 'u32[144,128]{1,0:T(1,128)}', space=vmem, size = 0x12000, scoped, tag = 'internal scratch']
  #allocation2 [shape = 'bf16[32,32]{1,0:T(8,128)(2,1)}', space=vmem, size = 0x2000, scoped, tag = 'scratch operand']
  %s0 = inlined_call_operand.vmem [shape: bf16[32,512], index: 0, kind: input, shape index: {}]
  %s1 = inlined_call_operand.vmem [shape: bf16[512,32], index: 1, kind: input, shape index: {}]
  %s2 = inlined_call_operand.vmem [shape: f32[1,32], index: 2, kind: input, shape index: {}]
  %s3 = inlined_call_operand.vmem [shape: bf16[512,128], index: 3, kind: input, shape index: {}]
  %s4 = inlined_call_operand.vmem [shape: f32[1,128], index: 4, kind: input, shape index: {}]
  %s5 = inlined_call_operand.vmem [shape: bf16[128,256], index: 5, kind: input, shape index: {}]
  %s6 = inlined_call_operand.vmem [shape: f32[1,256], index: 6, kind: input, shape index: {}]
  %s7 = inlined_call_operand.vmem [shape: f32[128,256], index: 7, kind: input, shape index: {}]
  %s8 = inlined_call_operand.vmem [shape: f32[1,256], index: 8, kind: input, shape index: {}]
  %s9 = inlined_call_operand.vmem [shape: bf16[128,256], index: 9, kind: input, shape index: {}]
  %s10 = inlined_call_operand.vmem [shape: f32[1,256], index: 10, kind: input, shape index: {}]
  %s11 = inlined_call_operand.vmem [shape: bf16[256,256], index: 11, kind: input, shape index: {}]
  %s12 = inlined_call_operand.vmem [shape: f32[1,256], index: 12, kind: input, shape index: {}]
  %s13 = inlined_call_operand.vmem [shape: bf16[256,1024], index: 13, kind: input, shape index: {}]
  %s14 = inlined_call_operand.vmem [shape: f32[1,1024], index: 14, kind: input, shape index: {}]
  %s15 = inlined_call_operand.vmem [shape: f32[2,1024], index: 15, kind: output, shape index: {0}]
  %s16 = inlined_call_operand.vmem [shape: f32[2,128], index: 16, kind: output, shape index: {1}]
  %s17 = inlined_call_operand.hbm [shape: f32[2,128], index: 17, kind: output, shape index: {2}]
  %s18 = inlined_call_operand.hbm [shape: f32[2,4], index: 18, kind: output, shape index: {3}]
  %19 = xla_tuple %s15, %s16, %s17, %s18
  %s20 = sld [smem:[#allocation0]]
  $region94: #{vae_forward.5} parent=0
    _
  %s22 = ssub.s32 1, %s20
  %s23 = scalar_select 0, %s22, %s20
  $region1: #{vae_forward.5} parent=0
    #allocation3 [shape = 'u8[1024]{0}', space=vmem, size = 0x400, scoped, tag = 'output window, operand 2, single buffered']
    #allocation4 [shape = 's32[1]{0}', space=sflag, size = 0x4, scoped, tag = 'scoped memory for vae_forward.5']
    #allocation5 [shape = 'u8[1024]{0}', space=vmem, size = 0x400, scoped, tag = 'output window, operand 3, single buffered']
    #allocation6 [shape = 's32[1]{0}', space=sflag, size = 0x4, scoped, tag = 'scoped memory for vae_forward.5']
    %24 = vsyncpa [#allocation4], 0
    %25 = vsyncpa [#allocation6], 0
    // Predicated region
    $region2: #{vae_forward.5} parent=1 // pred_check
      _
    $region3: #{vae_forward.5} parent=1 // pred_check_branch
      %27 = sbr.rel (0) target = $region5
    $region4: #{vae_forward.5} parent=1 // pred_region
      _
    $region5: #{vae_forward.5} parent=1 // pred_fallthru
      _
    // Predicated region
    $region6: #{vae_forward.5} parent=1 // pred_check
      _
    $region7: #{vae_forward.5} parent=1 // pred_check_branch
      %29 = sbr.rel (0) target = $region9
    $region8: #{vae_forward.5} parent=1 // pred_region
      _
    $region9: #{vae_forward.5} parent=1 // pred_fallthru
      _
    // Predicated region
    $region10: #{vae_forward.5} parent=1 // pred_check
      _
    $region11: #{vae_forward.5} parent=1 // pred_check_branch
      %31 = sbr.rel (0) target = $region13
    $region12: #{vae_forward.5} parent=1 // pred_region
      _
    $region13: #{vae_forward.5} parent=1 // pred_fallthru
      _
    // Predicated region
    $region14: #{vae_forward.5} parent=1 // pred_check
      _
    $region15: #{vae_forward.5} parent=1 // pred_check_branch
      %33 = sbr.rel (0) target = $region17
    $region16: #{vae_forward.5} parent=1 // pred_region
      _
    $region17: #{vae_forward.5} parent=1 // pred_fallthru
      _
    // Predicated region
    $region18: #{vae_forward.5} parent=1 // pred_check
      _
    $region19: #{vae_forward.5} parent=1 // pred_check_branch
      %35 = sbr.rel (0) target = $region21
    $region20: #{vae_forward.5} parent=1 // pred_region
      _
    $region21: #{vae_forward.5} parent=1 // pred_fallthru
      _
    // Predicated region
    $region22: #{vae_forward.5} parent=1 // pred_check
      _
    $region23: #{vae_forward.5} parent=1 // pred_check_branch
      %37 = sbr.rel (0) target = $region25
    $region24: #{vae_forward.5} parent=1 // pred_region
      _
    $region25: #{vae_forward.5} parent=1 // pred_fallthru
      _
    // Predicated region
    $region26: #{vae_forward.5} parent=1 // pred_check
      _
    $region27: #{vae_forward.5} parent=1 // pred_check_branch
      %39 = sbr.rel (0) target = $region29
    $region28: #{vae_forward.5} parent=1 // pred_region
      _
    $region29: #{vae_forward.5} parent=1 // pred_fallthru
      _
    // Predicated region
    $region30: #{vae_forward.5} parent=1 // pred_check
      _
    $region31: #{vae_forward.5} parent=1 // pred_check_branch
      %41 = sbr.rel (0) target = $region33
    $region32: #{vae_forward.5} parent=1 // pred_region
      _
    $region33: #{vae_forward.5} parent=1 // pred_fallthru
      _
    // Predicated region
    $region34: #{vae_forward.5} parent=1 // pred_check
      _
    $region35: #{vae_forward.5} parent=1 // pred_check_branch
      %43 = sbr.rel (0) target = $region37
    $region36: #{vae_forward.5} parent=1 // pred_region
      _
    $region37: #{vae_forward.5} parent=1 // pred_fallthru
      _
    // Predicated region
    $region38: #{vae_forward.5} parent=1 // pred_check
      _
    $region39: #{vae_forward.5} parent=1 // pred_check_branch
      %45 = sbr.rel (0) target = $region41
    $region40: #{vae_forward.5} parent=1 // pred_region
      _
    $region41: #{vae_forward.5} parent=1 // pred_fallthru
      _
    // Predicated region
    $region42: #{vae_forward.5} parent=1 // pred_check
      _
    $region43: #{vae_forward.5} parent=1 // pred_check_branch
      %47 = sbr.rel (0) target = $region45
    $region44: #{vae_forward.5} parent=1 // pred_region
      _
    $region45: #{vae_forward.5} parent=1 // pred_fallthru
      _
    // Predicated region
    $region46: #{vae_forward.5} parent=1 // pred_check
      _
    $region47: #{vae_forward.5} parent=1 // pred_check_branch
      %49 = sbr.rel (0) target = $region49
    $region48: #{vae_forward.5} parent=1 // pred_region
      _
    $region49: #{vae_forward.5} parent=1 // pred_fallthru
      _
    // Predicated region
    $region50: #{vae_forward.5} parent=1 // pred_check
      _
    $region51: #{vae_forward.5} parent=1 // pred_check_branch
      %51 = sbr.rel (0) target = $region53
    $region52: #{vae_forward.5} parent=1 // pred_region
      _
    $region53: #{vae_forward.5} parent=1 // pred_fallthru
      _
    // Predicated region
    $region54: #{vae_forward.5} parent=1 // pred_check
      _
    $region55: #{vae_forward.5} parent=1 // pred_check_branch
      %53 = sbr.rel (0) target = $region57
    $region56: #{vae_forward.5} parent=1 // pred_region
      _
    $region57: #{vae_forward.5} parent=1 // pred_fallthru
      _
    // Predicated region
    $region58: #{vae_forward.5} parent=1 // pred_check
      _
    $region59: #{vae_forward.5} parent=1 // pred_check_branch
      %55 = sbr.rel (0) target = $region61
    $region60: #{vae_forward.5} parent=1 // pred_region
      _
    $region61: #{vae_forward.5} parent=1 // pred_fallthru
      _
    %v57 = vld [vmem:[%s0] sm:$0xff]
    %v58 = vld [vmem:[%s0 + $0x8] sm:$0xff]
    %v59 = vld [vmem:[%s0 + $0x10] sm:$0xff]
    %v60 = vld [vmem:[%s0 + $0x18] sm:$0xff]
    %v61 = vld [vmem:[%s0 + $0x20] sm:$0xff]
    %v62 = vld [vmem:[%s0 + $0x28] sm:$0xff]
    %v63 = vld [vmem:[%s0 + $0x30] sm:$0xff]
    %v64 = vld [vmem:[%s0 + $0x38] sm:$0xff]
    %v65 = vld [vmem:[%s1] sm:$0xf]
    %v66 = vld [vmem:[%s1 + $0x4] sm:$0xf]
    %v67 = vld [vmem:[%s1 + $0x8] sm:$0xf]
    %v68 = vld [vmem:[%s1 + $0xc] sm:$0xf]
    %v69 = vld [vmem:[%s1 + $0x10] sm:$0xf]
    %v70 = vld [vmem:[%s1 + $0x14] sm:$0xf]
    %v71 = vld [vmem:[%s1 + $0x18] sm:$0xf]
    %v72 = vld [vmem:[%s1 + $0x1c] sm:$0xf]
    %v73 = vld [vmem:[%s1 + $0x20] sm:$0xf]
    %v74 = vld [vmem:[%s1 + $0x24] sm:$0xf]
    %v75 = vld [vmem:[%s1 + $0x28] sm:$0xf]
    %v76 = vld [vmem:[%s1 + $0x2c] sm:$0xf]
    %v77 = vld [vmem:[%s1 + $0x30] sm:$0xf]
    %v78 = vld [vmem:[%s1 + $0x34] sm:$0xf]
    %v79 = vld [vmem:[%s1 + $0x38] sm:$0xf]
    %v80 = vld [vmem:[%s1 + $0x3c] sm:$0xf]
    %v81 = vld [vmem:[%s1 + $0x40] sm:$0xf]
    %v82 = vld [vmem:[%s1 + $0x44] sm:$0xf]
    %v83 = vld [vmem:[%s1 + $0x48] sm:$0xf]
    %v84 = vld [vmem:[%s1 + $0x4c] sm:$0xf]
    %v85 = vld [vmem:[%s1 + $0x50] sm:$0xf]
    %v86 = vld [vmem:[%s1 + $0x54] sm:$0xf]
    %v87 = vld [vmem:[%s1 + $0x58] sm:$0xf]
    %v88 = vld [vmem:[%s1 + $0x5c] sm:$0xf]
    %v89 = vld [vmem:[%s1 + $0x60] sm:$0xf]
    %v90 = vld [vmem:[%s1 + $0x64] sm:$0xf]
    %v91 = vld [vmem:[%s1 + $0x68] sm:$0xf]
    %v92 = vld [vmem:[%s1 + $0x6c] sm:$0xf]
    %v93 = vld [vmem:[%s1 + $0x70] sm:$0xf]
    %v94 = vld [vmem:[%s1 + $0x74] sm:$0xf]
    %v95 = vld [vmem:[%s1 + $0x78] sm:$0xf]
    %v96 = vld [vmem:[%s1 + $0x7c] sm:$0xf]
    %v97 = vld [vmem:[%s1 + $0x80] sm:$0xf]
    %v98 = vld [vmem:[%s1 + $0x84] sm:$0xf]
    %v99 = vld [vmem:[%s1 + $0x88] sm:$0xf]
    %v100 = vld [vmem:[%s1 + $0x8c] sm:$0xf]
    %v101 = vld [vmem:[%s1 + $0x90] sm:$0xf]
    %v102 = vld [vmem:[%s1 + $0x94] sm:$0xf]
    %v103 = vld [vmem:[%s1 + $0x98] sm:$0xf]
    %v104 = vld [vmem:[%s1 + $0x9c] sm:$0xf]
    %v105 = vld [vmem:[%s1 + $0xa0] sm:$0xf]
    %v106 = vld [vmem:[%s1 + $0xa4] sm:$0xf]
    %v107 = vld [vmem:[%s1 + $0xa8] sm:$0xf]
    %v108 = vld [vmem:[%s1 + $0xac] sm:$0xf]
    %v109 = vld [vmem:[%s1 + $0xb0] sm:$0xf]
    %v110 = vld [vmem:[%s1 + $0xb4] sm:$0xf]
    %v111 = vld [vmem:[%s1 + $0xb8] sm:$0xf]
    %v112 = vld [vmem:[%s1 + $0xbc] sm:$0xf]
    %v113 = vld [vmem:[%s1 + $0xc0] sm:$0xf]
    %v114 = vld [vmem:[%s1 + $0xc4] sm:$0xf]
    %v115 = vld [vmem:[%s1 + $0xc8] sm:$0xf]
    %v116 = vld [vmem:[%s1 + $0xcc] sm:$0xf]
    %v117 = vld [vmem:[%s1 + $0xd0] sm:$0xf]
    %v118 = vld [vmem:[%s1 + $0xd4] sm:$0xf]
    %v119 = vld [vmem:[%s1 + $0xd8] sm:$0xf]
    %v120 = vld [vmem:[%s1 + $0xdc] sm:$0xf]
    %v121 = vld [vmem:[%s1 + $0xe0] sm:$0xf]
    %v122 = vld [vmem:[%s1 + $0xe4] sm:$0xf]
    %v123 = vld [vmem:[%s1 + $0xe8] sm:$0xf]
    %v124 = vld [vmem:[%s1 + $0xec] sm:$0xf]
    %v125 = vld [vmem:[%s1 + $0xf0] sm:$0xf]
    %v126 = vld [vmem:[%s1 + $0xf4] sm:$0xf]
    %v127 = vld [vmem:[%s1 + $0xf8] sm:$0xf]
    %v128 = vld [vmem:[%s1 + $0xfc] sm:$0xf]
    %v129 = vld [vmem:[%s2] sm:$0x1]
    %v131 = vlaneseq
    %v132 = vshrl.u32 %v131, 7
    %v133 = vsub.s32 0, %v132
    %v134 = vrot.slane %v129, %v133
    %v144 = vunpack.c.l.b16 %v57
    %v145 = vunpack.c.h.b16 %v57
    %v146 = vunpack.c.l.b16 %v58
    %v147 = vunpack.c.h.b16 %v58
    %v148 = vunpack.c.l.b16 %v59
    %v149 = vunpack.c.h.b16 %v59
    %v150 = vunpack.c.l.b16 %v60
    %v151 = vunpack.c.h.b16 %v60
    %v152 = vunpack.c.l.b16 %v61
    %v153 = vunpack.c.h.b16 %v61
    %v154 = vunpack.c.l.b16 %v62
    %v155 = vunpack.c.h.b16 %v62
    %v156 = vunpack.c.l.b16 %v63
    %v157 = vunpack.c.h.b16 %v63
    %v158 = vunpack.c.l.b16 %v64
    %v159 = vunpack.c.h.b16 %v64
    %v160 = vpack.c.b16 %v148, %v144
    %v161 = vpack.c.b16 %v149, %v145
    %v162 = vpack.c.b16 %v150, %v146
    %v163 = vpack.c.b16 %v151, %v147
    %v164 = vpack.c.b16 %v156, %v152
    %v165 = vpack.c.b16 %v157, %v153
    %v166 = vpack.c.b16 %v158, %v154
    %v167 = vpack.c.b16 %v159, %v155
    %v240 = vunpack.c.l.b16 %v65
    %v241 = vunpack.c.l.b16 %v66
    %v242 = vunpack.c.l.b16 %v67
    %v243 = vunpack.c.l.b16 %v68
    %v244 = vunpack.c.l.b16 %v69
    %v245 = vunpack.c.l.b16 %v70
    %v246 = vunpack.c.l.b16 %v71
    %v247 = vunpack.c.l.b16 %v72
    %v248 = vunpack.c.l.b16 %v73
    %v249 = vunpack.c.l.b16 %v74
    %v250 = vunpack.c.l.b16 %v75
    %v251 = vunpack.c.l.b16 %v76
    %v252 = vunpack.c.l.b16 %v77
    %v253 = vunpack.c.l.b16 %v78
    %v254 = vunpack.c.l.b16 %v79
    %v255 = vunpack.c.l.b16 %v80
    %v256 = vunpack.c.l.b16 %v81
    %v257 = vunpack.c.l.b16 %v82
    %v258 = vunpack.c.l.b16 %v83
    %v259 = vunpack.c.l.b16 %v84
    %v260 = vunpack.c.l.b16 %v85
    %v261 = vunpack.c.l.b16 %v86
    %v262 = vunpack.c.l.b16 %v87
    %v263 = vunpack.c.l.b16 %v88
    %v264 = vunpack.c.l.b16 %v89
    %v265 = vunpack.c.l.b16 %v90
    %v266 = vunpack.c.l.b16 %v91
    %v267 = vunpack.c.l.b16 %v92
    %v268 = vunpack.c.l.b16 %v93
    %v269 = vunpack.c.l.b16 %v94
    %v270 = vunpack.c.l.b16 %v95
    %v271 = vunpack.c.l.b16 %v96
    %v272 = vunpack.c.l.b16 %v97
    %v273 = vunpack.c.l.b16 %v98
    %v274 = vunpack.c.l.b16 %v99
    %v275 = vunpack.c.l.b16 %v100
    %v276 = vunpack.c.l.b16 %v101
    %v277 = vunpack.c.l.b16 %v102
    %v278 = vunpack.c.l.b16 %v103
    %v279 = vunpack.c.l.b16 %v104
    %v280 = vunpack.c.l.b16 %v105
    %v281 = vunpack.c.l.b16 %v106
    %v282 = vunpack.c.l.b16 %v107
    %v283 = vunpack.c.l.b16 %v108
    %v284 = vunpack.c.l.b16 %v109
    %v285 = vunpack.c.l.b16 %v110
    %v286 = vunpack.c.l.b16 %v111
    %v287 = vunpack.c.l.b16 %v112
    %v288 = vunpack.c.l.b16 %v113
    %v289 = vunpack.c.l.b16 %v114
    %v290 = vunpack.c.l.b16 %v115
    %v291 = vunpack.c.l.b16 %v116
    %v292 = vunpack.c.l.b16 %v117
    %v293 = vunpack.c.l.b16 %v118
    %v294 = vunpack.c.l.b16 %v119
    %v295 = vunpack.c.l.b16 %v120
    %v296 = vunpack.c.l.b16 %v121
    %v297 = vunpack.c.l.b16 %v122
    %v298 = vunpack.c.l.b16 %v123
    %v299 = vunpack.c.l.b16 %v124
    %v300 = vunpack.c.l.b16 %v125
    %v301 = vunpack.c.l.b16 %v126
    %v302 = vunpack.c.l.b16 %v127
    %v303 = vunpack.c.l.b16 %v128
    %v304 = vpack.c.b16 %v241, %v240
    %v305 = vpack.c.b16 %v243, %v242
    %v306 = vpack.c.b16 %v245, %v244
    %v307 = vpack.c.b16 %v247, %v246
    %v308 = vpack.c.b16 %v249, %v248
    %v309 = vpack.c.b16 %v251, %v250
    %v310 = vpack.c.b16 %v253, %v252
    %v311 = vpack.c.b16 %v255, %v254
    %v312 = vpack.c.b16 %v257, %v256
    %v313 = vpack.c.b16 %v259, %v258
    %v314 = vpack.c.b16 %v261, %v260
    %v315 = vpack.c.b16 %v263, %v262
    %v316 = vpack.c.b16 %v265, %v264
    %v317 = vpack.c.b16 %v267, %v266
    %v318 = vpack.c.b16 %v269, %v268
    %v319 = vpack.c.b16 %v271, %v270
    %v320 = vpack.c.b16 %v273, %v272
    %v321 = vpack.c.b16 %v275, %v274
    %v322 = vpack.c.b16 %v277, %v276
    %v323 = vpack.c.b16 %v279, %v278
    %v324 = vpack.c.b16 %v281, %v280
    %v325 = vpack.c.b16 %v283, %v282
    %v326 = vpack.c.b16 %v285, %v284
    %v327 = vpack.c.b16 %v287, %v286
    %v328 = vpack.c.b16 %v289, %v288
    %v329 = vpack.c.b16 %v291, %v290
    %v330 = vpack.c.b16 %v293, %v292
    %v331 = vpack.c.b16 %v295, %v294
    %v332 = vpack.c.b16 %v297, %v296
    %v333 = vpack.c.b16 %v299, %v298
    %v334 = vpack.c.b16 %v301, %v300
    %v335 = vpack.c.b16 %v303, %v302
    %368 = vmatprep.subr.bf16.mxu0 0
    %369 = vmatpush1.bf16.msra.mxu0 %v311
    %370 = vmatprep.subr.bf16.mxu0 0
    %371 = vmatpush1.bf16.msra.mxu0 %v310
    %372 = vmatprep.subr.bf16.mxu0 0
    %373 = vmatpush1.bf16.msra.mxu0 %v309
    %374 = vmatprep.subr.bf16.mxu0 0
    %375 = vmatpush1.bf16.msra.mxu0 %v308
    %376 = vmatprep.subr.bf16.mxu0 0
    %377 = vmatpush1.bf16.msra.mxu0 %v307
    %378 = vmatprep.subr.bf16.mxu0 0
    %379 = vmatpush1.bf16.msra.mxu0 %v306
    %380 = vmatprep.subr.bf16.mxu0 0
    %381 = vmatpush1.bf16.msra.mxu0 %v305
    %382 = vmatprep.subr.bf16.mxu0 0
    %383 = vmatpush1.bf16.msra.mxu0 %v304
    %384 = vmatprep.subr.bf16.mxu0 0
    %385 = vmatpush2.bf16.msra.mxu0 %v319
    %386 = vmatprep.subr.bf16.mxu0 0
    %387 = vmatpush2.bf16.msra.mxu0 %v318
    %388 = vmatprep.subr.bf16.mxu0 0
    %389 = vmatpush2.bf16.msra.mxu0 %v317
    %390 = vmatprep.subr.bf16.mxu0 0
    %391 = vmatpush2.bf16.msra.mxu0 %v316
    %392 = vmatprep.subr.bf16.mxu0 0
    %393 = vmatpush2.bf16.msra.mxu0 %v315
    %394 = vmatprep.subr.bf16.mxu0 0
    %395 = vmatpush2.bf16.msra.mxu0 %v314
    %396 = vmatprep.subr.bf16.mxu0 0
    %397 = vmatpush2.bf16.msra.mxu0 %v313
    %398 = vmatprep.subr.bf16.mxu0 0
    %399 = vmatpush2.bf16.msra.mxu0 %v312
    %400 = vmatprep.mubr.bf16.mxu0 %v161
    %401 = vmatmul.mubr.bf16.gmra.mxu0 %v160
    %v402 = vpop.f32.mrf.mxu0
    %v403 = vadd.f32 %v134, %v402
    %v404 = vpop.f32.mrf.mxu0
    %v405 = vpop.f32.mrf.mxu0
    %v406 = vadd.f32 %v134, %v405
    %v407 = vpop.f32.mrf.mxu0
    %408 = vmatprep.mubr.bf16.mxu0 %v165
    %409 = vmatmul.mubr.bf16.gmra.mxu0 %v164
    %v410 = vpop.f32.mrf.mxu0
    %v411 = vadd.f32 %v134, %v410
    %v412 = vpop.f32.mrf.mxu0
    %v413 = vpop.f32.mrf.mxu0
    %v414 = vadd.f32 %v134, %v413
    %v415 = vpop.f32.mrf.mxu0
    %416 = vdwg.mxu0
    %417 = vmatprep.subr.bf16.mxu0 0
    %418 = vmatpush1.bf16.msra.mxu0 %v327
    %419 = vmatprep.subr.bf16.mxu0 0
    %420 = vmatpush1.bf16.msra.mxu0 %v326
    %421 = vmatprep.subr.bf16.mxu0 0
    %422 = vmatpush1.bf16.msra.mxu0 %v325
    %423 = vmatprep.subr.bf16.mxu0 0
    %424 = vmatpush1.bf16.msra.mxu0 %v324
    %425 = vmatprep.subr.bf16.mxu0 0
    %426 = vmatpush1.bf16.msra.mxu0 %v323
    %427 = vmatprep.subr.bf16.mxu0 0
    %428 = vmatpush1.bf16.msra.mxu0 %v322
    %429 = vmatprep.subr.bf16.mxu0 0
    %430 = vmatpush1.bf16.msra.mxu0 %v321
    %431 = vmatprep.subr.bf16.mxu0 0
    %432 = vmatpush1.bf16.msra.mxu0 %v320
    %433 = vmatprep.subr.bf16.mxu0 0
    %434 = vmatpush2.bf16.msra.mxu0 %v335
    %435 = vmatprep.subr.bf16.mxu0 0
    %436 = vmatpush2.bf16.msra.mxu0 %v334
    %437 = vmatprep.subr.bf16.mxu0 0
    %438 = vmatpush2.bf16.msra.mxu0 %v333
    %439 = vmatprep.subr.bf16.mxu0 0
    %440 = vmatpush2.bf16.msra.mxu0 %v332
    %441 = vmatprep.subr.bf16.mxu0 0
    %442 = vmatpush2.bf16.msra.mxu0 %v331
    %443 = vmatprep.subr.bf16.mxu0 0
    %444 = vmatpush2.bf16.msra.mxu0 %v330
    %445 = vmatprep.subr.bf16.mxu0 0
    %446 = vmatpush2.bf16.msra.mxu0 %v329
    %447 = vmatprep.subr.bf16.mxu0 0
    %448 = vmatpush2.bf16.msra.mxu0 %v328
    %449 = vmatprep.mubr.bf16.mxu0 %v163
    %450 = vmatmul.mubr.bf16.gmra.mxu0 %v162
    %v451 = vpop.f32.mrf.mxu0
    %v452 = vadd.f32 %v403, %v451
    %v453 = vpop.f32.mrf.mxu0
    %v454 = vpop.f32.mrf.mxu0
    %v455 = vadd.f32 %v406, %v454
    %v456 = vpop.f32.mrf.mxu0
    %457 = vmatprep.mubr.bf16.mxu0 %v167
    %458 = vmatmul.mubr.bf16.gmra.mxu0 %v166
    %v459 = vpop.f32.mrf.mxu0
    %v460 = vadd.f32 %v411, %v459
    %v461 = vpop.f32.mrf.mxu0
    %v462 = vpop.f32.mrf.mxu0
    %v463 = vadd.f32 %v414, %v462
    %v464 = vpop.f32.mrf.mxu0
    %465 = vdwg.mxu0
    %v466 = vmax.f32 %v452, 0.0
    %v467 = vmax.f32 %v455, 0.0
    %v468 = vmax.f32 %v460, 0.0
    %v469 = vmax.f32 %v463, 0.0
    %v470 = vpack.c.bf16 %v467, %v466
    %v471 = vpack.c.bf16 %v469, %v468
    %v474 = vunpack.c.l.b16 %v470
    %v475 = vunpack.c.h.b16 %v470
    %v476 = vunpack.c.l.b16 %v471
    %v477 = vunpack.c.h.b16 %v471
    %v478 = vpack.c.b16 %v474, %v474
    %v479 = vpack.c.b16 %v475, %v475
    %v480 = vpack.c.b16 %v476, %v476
    %v481 = vpack.c.b16 %v477, %v477
    %vm486 = vcmask 257024
    %487 = vst.msk [vmem:[#allocation2] sm:$0xf] %vm486, %v478
    %488 = vst.msk [vmem:[#allocation2 + $0x4] sm:$0xf] %vm486, %v479
    %489 = vst.msk [vmem:[#allocation2 + $0x8] sm:$0xf] %vm486, %v480
    %490 = vst.msk [vmem:[#allocation2 + $0xc] sm:$0xf] %vm486, %v481
    %v491 = vld [vmem:[#allocation2] sm:$0x1]
    %v492 = vld [vmem:[%s3] sm:$0xf]
    %v493 = vld [vmem:[%s3 + $0x4] sm:$0xf]
    %v494 = vld [vmem:[%s3 + $0x8] sm:$0xf]
    %v495 = vld [vmem:[%s3 + $0xc] sm:$0xf]
    %v496 = vld [vmem:[#allocation2] sm:$0x2]
    %v497 = vld [vmem:[%s3 + $0x10] sm:$0xf]
    %v498 = vld [vmem:[%s3 + $0x14] sm:$0xf]
    %v499 = vld [vmem:[%s3 + $0x18] sm:$0xf]
    %v500 = vld [vmem:[%s3 + $0x1c] sm:$0xf]
    %v502 = vunpack.c.l.b16 %v496
    %v503 = vpack.c.b16 %v502, %v502
    %v504 = vrot.slane %v503, 1
    %v509 = vunpack.c.l.b16 %v497
    %v510 = vunpack.c.l.b16 %v498
    %v511 = vunpack.c.l.b16 %v499
    %v512 = vunpack.c.l.b16 %v500
    %v513 = vpack.c.b16 %v510, %v509
    %v514 = vpack.c.b16 %v512, %v511
    %vm517 = vcmask 261120
    %v519 = vsel %vm517, %v504, 0
    %521 = vmatprep.subr.bf16.mxu0 0
    %522 = vmatpush1.bf16.msra.mxu0 0
    %523 = vmatprep.subr.bf16.mxu0 0
    %524 = vmatpush1.bf16.msra.mxu0 0
    %525 = vmatprep.subr.bf16.mxu0 0
    %526 = vmatpush1.bf16.msra.mxu0 0
    %527 = vmatprep.subr.bf16.mxu0 0
    %528 = vmatpush1.bf16.msra.mxu0 0
    %529 = vmatprep.subr.bf16.mxu0 0
    %530 = vmatpush1.bf16.msra.mxu0 0
    %531 = vmatprep.subr.bf16.mxu0 0
    %532 = vmatpush1.bf16.msra.mxu0 0
    %533 = vmatprep.subr.bf16.mxu0 0
    %534 = vmatpush1.bf16.msra.mxu0 %v514
    %535 = vmatprep.subr.bf16.mxu0 0
    %536 = vmatpush1.bf16.msra.mxu0 %v513
    %537 = vmatprep.subr.bf16.mxu0 0
    %538 = vmatpush2.bf16.msra.mxu0 0
    %539 = vmatprep.subr.bf16.mxu0 0
    %540 = vmatpush2.bf16.msra.mxu0 0
    %541 = vmatprep.subr.bf16.mxu0 0
    %542 = vmatpush2.bf16.msra.mxu0 0
    %543 = vmatprep.subr.bf16.mxu0 0
    %544 = vmatpush2.bf16.msra.mxu0 0
    %545 = vmatprep.subr.bf16.mxu0 0
    %546 = vmatpush2.bf16.msra.mxu0 0
    %547 = vmatprep.subr.bf16.mxu0 0
    %548 = vmatpush2.bf16.msra.mxu0 0
    %549 = vmatprep.subr.bf16.mxu0 0
    %550 = vmatpush2.bf16.msra.mxu0 0
    %551 = vmatprep.subr.bf16.mxu0 0
    %552 = vmatpush2.bf16.msra.mxu0 0
    %553 = vmatprep.mubr.bf16.mxu0 0
    %554 = vmatmul.mubr.bf16.gmra.mxu0 %v519
    %v555 = vpop.f32.mrf.mxu0
    %v556 = vadd.f32 0.0, %v555
    %v557 = vpop.f32.mrf.mxu0
    %v558 = vpop.f32.mrf.mxu0
    %v559 = vpop.f32.mrf.mxu0
    %560 = vdwg.mxu0
    %v565 = vunpack.c.l.b16 %v492
    %v566 = vunpack.c.l.b16 %v493
    %v567 = vunpack.c.l.b16 %v494
    %v568 = vunpack.c.l.b16 %v495
    %v569 = vpack.c.b16 %v566, %v565
    %v570 = vpack.c.b16 %v568, %v567
    %v574 = vsel %vm517, %v491, 0
    %576 = vmatprep.subr.bf16.mxu0 0
    %577 = vmatpush1.bf16.msra.mxu0 0
    %578 = vmatprep.subr.bf16.mxu0 0
    %579 = vmatpush1.bf16.msra.mxu0 0
    %580 = vmatprep.subr.bf16.mxu0 0
    %581 = vmatpush1.bf16.msra.mxu0 0
    %582 = vmatprep.subr.bf16.mxu0 0
    %583 = vmatpush1.bf16.msra.mxu0 0
    %584 = vmatprep.subr.bf16.mxu0 0
    %585 = vmatpush1.bf16.msra.mxu0 0
    %586 = vmatprep.subr.bf16.mxu0 0
    %587 = vmatpush1.bf16.msra.mxu0 0
    %588 = vmatprep.subr.bf16.mxu0 0
    %589 = vmatpush1.bf16.msra.mxu0 %v570
    %590 = vmatprep.subr.bf16.mxu0 0
    %591 = vmatpush1.bf16.msra.mxu0 %v569
    %592 = vmatprep.subr.bf16.mxu0 0
    %593 = vmatpush2.bf16.msra.mxu0 0
    %594 = vmatprep.subr.bf16.mxu0 0
    %595 = vmatpush2.bf16.msra.mxu0 0
    %596 = vmatprep.subr.bf16.mxu0 0
    %597 = vmatpush2.bf16.msra.mxu0 0
    %598 = vmatprep.subr.bf16.mxu0 0
    %599 = vmatpush2.bf16.msra.mxu0 0
    %600 = vmatprep.subr.bf16.mxu0 0
    %601 = vmatpush2.bf16.msra.mxu0 0
    %602 = vmatprep.subr.bf16.mxu0 0
    %603 = vmatpush2.bf16.msra.mxu0 0
    %604 = vmatprep.subr.bf16.mxu0 0
    %605 = vmatpush2.bf16.msra.mxu0 0
    %606 = vmatprep.subr.bf16.mxu0 0
    %607 = vmatpush2.bf16.msra.mxu0 0
    %608 = vmatprep.mubr.bf16.mxu0 0
    %609 = vmatmul.mubr.bf16.gmra.mxu0 %v574
    %v610 = vpop.f32.mrf.mxu0
    %v611 = vadd.f32 %v556, %v610
    %v612 = vpop.f32.mrf.mxu0
    %v613 = vpop.f32.mrf.mxu0
    %v614 = vpop.f32.mrf.mxu0
    %615 = vdwg.mxu0
    %v616 = vld [vmem:[#allocation2] sm:$0x4]
    %v617 = vld [vmem:[%s3 + $0x20] sm:$0xf]
    %v618 = vld [vmem:[%s3 + $0x24] sm:$0xf]
    %v619 = vld [vmem:[%s3 + $0x28] sm:$0xf]
    %v620 = vld [vmem:[%s3 + $0x2c] sm:$0xf]
    %v622 = vunpack.c.l.b16 %v616
    %v623 = vpack.c.b16 %v622, %v622
    %v624 = vrot.slane %v623, 2
    %v629 = vunpack.c.l.b16 %v617
    %v630 = vunpack.c.l.b16 %v618
    %v631 = vunpack.c.l.b16 %v619
    %v632 = vunpack.c.l.b16 %v620
    %v633 = vpack.c.b16 %v630, %v629
    %v634 = vpack.c.b16 %v632, %v631
    %v638 = vsel %vm517, %v624, 0
    %640 = vmatprep.subr.bf16.mxu0 0
    %641 = vmatpush1.bf16.msra.mxu0 0
    %642 = vmatprep.subr.bf16.mxu0 0
    %643 = vmatpush1.bf16.msra.mxu0 0
    %644 = vmatprep.subr.bf16.mxu0 0
    %645 = vmatpush1.bf16.msra.mxu0 0
    %646 = vmatprep.subr.bf16.mxu0 0
    %647 = vmatpush1.bf16.msra.mxu0 0
    %648 = vmatprep.subr.bf16.mxu0 0
    %649 = vmatpush1.bf16.msra.mxu0 0
    %650 = vmatprep.subr.bf16.mxu0 0
    %651 = vmatpush1.bf16.msra.mxu0 0
    %652 = vmatprep.subr.bf16.mxu0 0
    %653 = vmatpush1.bf16.msra.mxu0 %v634
    %654 = vmatprep.subr.bf16.mxu0 0
    %655 = vmatpush1.bf16.msra.mxu0 %v633
    %656 = vmatprep.subr.bf16.mxu0 0
    %657 = vmatpush2.bf16.msra.mxu0 0
    %658 = vmatprep.subr.bf16.mxu0 0
    %659 = vmatpush2.bf16.msra.mxu0 0
    %660 = vmatprep.subr.bf16.mxu0 0
    %661 = vmatpush2.bf16.msra.mxu0 0
    %662 = vmatprep.subr.bf16.mxu0 0
    %663 = vmatpush2.bf16.msra.mxu0 0
    %664 = vmatprep.subr.bf16.mxu0 0
    %665 = vmatpush2.bf16.msra.mxu0 0
    %666 = vmatprep.subr.bf16.mxu0 0
    %667 = vmatpush2.bf16.msra.mxu0 0
    %668 = vmatprep.subr.bf16.mxu0 0
    %669 = vmatpush2.bf16.msra.mxu0 0
    %670 = vmatprep.subr.bf16.mxu0 0
    %671 = vmatpush2.bf16.msra.mxu0 0
    %672 = vmatprep.mubr.bf16.mxu0 0
    %673 = vmatmul.mubr.bf16.gmra.mxu0 %v638
    %v674 = vpop.f32.mrf.mxu0
    %v675 = vadd.f32 0.0, %v674
    %v676 = vpop.f32.mrf.mxu0
    %v677 = vpop.f32.mrf.mxu0
    %v678 = vpop.f32.mrf.mxu0
    %679 = vdwg.mxu0
    %v680 = vadd.f32 %v611, %v675
    %v681 = vld [vmem:[#allocation2] sm:$0x8]
    %v682 = vld [vmem:[%s3 + $0x30] sm:$0xf]
    %v683 = vld [vmem:[%s3 + $0x34] sm:$0xf]
    %v684 = vld [vmem:[%s3 + $0x38] sm:$0xf]
    %v685 = vld [vmem:[%s3 + $0x3c] sm:$0xf]
    %v687 = vunpack.c.l.b16 %v681
    %v688 = vpack.c.b16 %v687, %v687
    %v689 = vrot.slane %v688, 3
    %v694 = vunpack.c.l.b16 %v682
    %v695 = vunpack.c.l.b16 %v683
    %v696 = vunpack.c.l.b16 %v684
    %v697 = vunpack.c.l.b16 %v685
    %v698 = vpack.c.b16 %v695, %v694
    %v699 = vpack.c.b16 %v697, %v696
    %v703 = vsel %vm517, %v689, 0
    %705 = vmatprep.subr.bf16.mxu0 0
    %706 = vmatpush1.bf16.msra.mxu0 0
    %707 = vmatprep.subr.bf16.mxu0 0
    %708 = vmatpush1.bf16.msra.mxu0 0
    %709 = vmatprep.subr.bf16.mxu0 0
    %710 = vmatpush1.bf16.msra.mxu0 0
    %711 = vmatprep.subr.bf16.mxu0 0
    %712 = vmatpush1.bf16.msra.mxu0 0
    %713 = vmatprep.subr.bf16.mxu0 0
    %714 = vmatpush1.bf16.msra.mxu0 0
    %715 = vmatprep.subr.bf16.mxu0 0
    %716 = vmatpush1.bf16.msra.mxu0 0
    %717 = vmatprep.subr.bf16.mxu0 0
    %718 = vmatpush1.bf16.msra.mxu0 %v699
    %719 = vmatprep.subr.bf16.mxu0 0
    %720 = vmatpush1.bf16.msra.mxu0 %v698
    %721 = vmatprep.subr.bf16.mxu0 0
    %722 = vmatpush2.bf16.msra.mxu0 0
    %723 = vmatprep.subr.bf16.mxu0 0
    %724 = vmatpush2.bf16.msra.mxu0 0
    %725 = vmatprep.subr.bf16.mxu0 0
    %726 = vmatpush2.bf16.msra.mxu0 0
    %727 = vmatprep.subr.bf16.mxu0 0
    %728 = vmatpush2.bf16.msra.mxu0 0
    %729 = vmatprep.subr.bf16.mxu0 0
    %730 = vmatpush2.bf16.msra.mxu0 0
    %731 = vmatprep.subr.bf16.mxu0 0
    %732 = vmatpush2.bf16.msra.mxu0 0
    %733 = vmatprep.subr.bf16.mxu0 0
    %734 = vmatpush2.bf16.msra.mxu0 0
    %735 = vmatprep.subr.bf16.mxu0 0
    %736 = vmatpush2.bf16.msra.mxu0 0
    %737 = vmatprep.mubr.bf16.mxu0 0
    %738 = vmatmul.mubr.bf16.gmra.mxu0 %v703
    %v739 = vpop.f32.mrf.mxu0
    %v740 = vadd.f32 0.0, %v739
    %v741 = vpop.f32.mrf.mxu0
    %v742 = vpop.f32.mrf.mxu0
    %v743 = vpop.f32.mrf.mxu0
    %744 = vdwg.mxu0
    %v745 = vadd.f32 %v680, %v740
    %v746 = vld [vmem:[#allocation2 + $0x4] sm:$0x1]
    %v747 = vld [vmem:[%s3 + $0x40] sm:$0xf]
    %v748 = vld [vmem:[%s3 + $0x44] sm:$0xf]
    %v749 = vld [vmem:[%s3 + $0x48] sm:$0xf]
    %v750 = vld [vmem:[%s3 + $0x4c] sm:$0xf]
    %v755 = vunpack.c.l.b16 %v747
    %v756 = vunpack.c.l.b16 %v748
    %v757 = vunpack.c.l.b16 %v749
    %v758 = vunpack.c.l.b16 %v750
    %v759 = vpack.c.b16 %v756, %v755
    %v760 = vpack.c.b16 %v758, %v757
    %v764 = vsel %vm517, %v746, 0
    %766 = vmatprep.subr.bf16.mxu0 0
    %767 = vmatpush1.bf16.msra.mxu0 0
    %768 = vmatprep.subr.bf16.mxu0 0
    %769 = vmatpush1.bf16.msra.mxu0 0
    %770 = vmatprep.subr.bf16.mxu0 0
    %771 = vmatpush1.bf16.msra.mxu0 0
    %772 = vmatprep.subr.bf16.mxu0 0
    %773 = vmatpush1.bf16.msra.mxu0 0
    %774 = vmatprep.subr.bf16.mxu0 0
    %775 = vmatpush1.bf16.msra.mxu0 0
    %776 = vmatprep.subr.bf16.mxu0 0
    %777 = vmatpush1.bf16.msra.mxu0 0
    %778 = vmatprep.subr.bf16.mxu0 0
    %779 = vmatpush1.bf16.msra.mxu0 %v760
    %780 = vmatprep.subr.bf16.mxu0 0
    %781 = vmatpush1.bf16.msra.mxu0 %v759
    %782 = vmatprep.subr.bf16.mxu0 0
    %783 = vmatpush2.bf16.msra.mxu0 0
    %784 = vmatprep.subr.bf16.mxu0 0
    %785 = vmatpush2.bf16.msra.mxu0 0
    %786 = vmatprep.subr.bf16.mxu0 0
    %787 = vmatpush2.bf16.msra.mxu0 0
    %788 = vmatprep.subr.bf16.mxu0 0
    %789 = vmatpush2.bf16.msra.mxu0 0
    %790 = vmatprep.subr.bf16.mxu0 0
    %791 = vmatpush2.bf16.msra.mxu0 0
    %792 = vmatprep.subr.bf16.mxu0 0
    %793 = vmatpush2.bf16.msra.mxu0 0
    %794 = vmatprep.subr.bf16.mxu0 0
    %795 = vmatpush2.bf16.msra.mxu0 0
    %796 = vmatprep.subr.bf16.mxu0 0
    %797 = vmatpush2.bf16.msra.mxu0 0
    %798 = vmatprep.mubr.bf16.mxu0 0
    %799 = vmatmul.mubr.bf16.gmra.mxu0 %v764
    %v800 = vpop.f32.mrf.mxu0
    %v801 = vadd.f32 0.0, %v800
    %v802 = vpop.f32.mrf.mxu0
    %v803 = vpop.f32.mrf.mxu0
    %v804 = vpop.f32.mrf.mxu0
    %805 = vdwg.mxu0
    %v806 = vadd.f32 %v745, %v801
    %v807 = vld [vmem:[#allocation2 + $0x4] sm:$0x2]
    %v808 = vld [vmem:[%s3 + $0x50] sm:$0xf]
    %v809 = vld [vmem:[%s3 + $0x54] sm:$0xf]
    %v810 = vld [vmem:[%s3 + $0x58] sm:$0xf]
    %v811 = vld [vmem:[%s3 + $0x5c] sm:$0xf]
    %v813 = vunpack.c.l.b16 %v807
    %v814 = vpack.c.b16 %v813, %v813
    %v815 = vrot.slane %v814, 1
    %v820 = vunpack.c.l.b16 %v808
    %v821 = vunpack.c.l.b16 %v809
    %v822 = vunpack.c.l.b16 %v810
    %v823 = vunpack.c.l.b16 %v811
    %v824 = vpack.c.b16 %v821, %v820
    %v825 = vpack.c.b16 %v823, %v822
    %v829 = vsel %vm517, %v815, 0
    %831 = vmatprep.subr.bf16.mxu0 0
    %832 = vmatpush1.bf16.msra.mxu0 0
    %833 = vmatprep.subr.bf16.mxu0 0
    %834 = vmatpush1.bf16.msra.mxu0 0
    %835 = vmatprep.subr.bf16.mxu0 0
    %836 = vmatpush1.bf16.msra.mxu0 0
    %837 = vmatprep.subr.bf16.mxu0 0
    %838 = vmatpush1.bf16.msra.mxu0 0
    %839 = vmatprep.subr.bf16.mxu0 0
    %840 = vmatpush1.bf16.msra.mxu0 0
    %841 = vmatprep.subr.bf16.mxu0 0
    %842 = vmatpush1.bf16.msra.mxu0 0
    %843 = vmatprep.subr.bf16.mxu0 0
    %844 = vmatpush1.bf16.msra.mxu0 %v825
    %845 = vmatprep.subr.bf16.mxu0 0
    %846 = vmatpush1.bf16.msra.mxu0 %v824
    %847 = vmatprep.subr.bf16.mxu0 0
    %848 = vmatpush2.bf16.msra.mxu0 0
    %849 = vmatprep.subr.bf16.mxu0 0
    %850 = vmatpush2.bf16.msra.mxu0 0
    %851 = vmatprep.subr.bf16.mxu0 0
    %852 = vmatpush2.bf16.msra.mxu0 0
    %853 = vmatprep.subr.bf16.mxu0 0
    %854 = vmatpush2.bf16.msra.mxu0 0
    %855 = vmatprep.subr.bf16.mxu0 0
    %856 = vmatpush2.bf16.msra.mxu0 0
    %857 = vmatprep.subr.bf16.mxu0 0
    %858 = vmatpush2.bf16.msra.mxu0 0
    %859 = vmatprep.subr.bf16.mxu0 0
    %860 = vmatpush2.bf16.msra.mxu0 0
    %861 = vmatprep.subr.bf16.mxu0 0
    %862 = vmatpush2.bf16.msra.mxu0 0
    %863 = vmatprep.mubr.bf16.mxu0 0
    %864 = vmatmul.mubr.bf16.gmra.mxu0 %v829
    %v865 = vpop.f32.mrf.mxu0
    %v866 = vadd.f32 0.0, %v865
    %v867 = vpop.f32.mrf.mxu0
    %v868 = vpop.f32.mrf.mxu0
    %v869 = vpop.f32.mrf.mxu0
    %870 = vdwg.mxu0
    %v871 = vadd.f32 %v806, %v866
    %v872 = vld [vmem:[#allocation2 + $0x4] sm:$0x4]
    %v873 = vld [vmem:[%s3 + $0x60] sm:$0xf]
    %v874 = vld [vmem:[%s3 + $0x64] sm:$0xf]
    %v875 = vld [vmem:[%s3 + $0x68] sm:$0xf]
    %v876 = vld [vmem:[%s3 + $0x6c] sm:$0xf]
    %v878 = vunpack.c.l.b16 %v872
    %v879 = vpack.c.b16 %v878, %v878
    %v880 = vrot.slane %v879, 2
    %v885 = vunpack.c.l.b16 %v873
    %v886 = vunpack.c.l.b16 %v874
    %v887 = vunpack.c.l.b16 %v875
    %v888 = vunpack.c.l.b16 %v876
    %v889 = vpack.c.b16 %v886, %v885
    %v890 = vpack.c.b16 %v888, %v887
    %v894 = vsel %vm517, %v880, 0
    %896 = vmatprep.subr.bf16.mxu0 0
    %897 = vmatpush1.bf16.msra.mxu0 0
    %898 = vmatprep.subr.bf16.mxu0 0
    %899 = vmatpush1.bf16.msra.mxu0 0
    %900 = vmatprep.subr.bf16.mxu0 0
    %901 = vmatpush1.bf16.msra.mxu0 0
    %902 = vmatprep.subr.bf16.mxu0 0
    %903 = vmatpush1.bf16.msra.mxu0 0
    %904 = vmatprep.subr.bf16.mxu0 0
    %905 = vmatpush1.bf16.msra.mxu0 0
    %906 = vmatprep.subr.bf16.mxu0 0
    %907 = vmatpush1.bf16.msra.mxu0 0
    %908 = vmatprep.subr.bf16.mxu0 0
    %909 = vmatpush1.bf16.msra.mxu0 %v890
    %910 = vmatprep.subr.bf16.mxu0 0
    %911 = vmatpush1.bf16.msra.mxu0 %v889
    %912 = vmatprep.subr.bf16.mxu0 0
    %913 = vmatpush2.bf16.msra.mxu0 0
    %914 = vmatprep.subr.bf16.mxu0 0
    %915 = vmatpush2.bf16.msra.mxu0 0
    %916 = vmatprep.subr.bf16.mxu0 0
    %917 = vmatpush2.bf16.msra.mxu0 0
    %918 = vmatprep.subr.bf16.mxu0 0
    %919 = vmatpush2.bf16.msra.mxu0 0
    %920 = vmatprep.subr.bf16.mxu0 0
    %921 = vmatpush2.bf16.msra.mxu0 0
    %922 = vmatprep.subr.bf16.mxu0 0
    %923 = vmatpush2.bf16.msra.mxu0 0
    %924 = vmatprep.subr.bf16.mxu0 0
    %925 = vmatpush2.bf16.msra.mxu0 0
    %926 = vmatprep.subr.bf16.mxu0 0
    %927 = vmatpush2.bf16.msra.mxu0 0
    %928 = vmatprep.mubr.bf16.mxu0 0
    %929 = vmatmul.mubr.bf16.gmra.mxu0 %v894
    %v930 = vpop.f32.mrf.mxu0
    %v931 = vadd.f32 0.0, %v930
    %v932 = vpop.f32.mrf.mxu0
    %v933 = vpop.f32.mrf.mxu0
    %v934 = vpop.f32.mrf.mxu0
    %935 = vdwg.mxu0
    %v936 = vadd.f32 %v871, %v931
    %v937 = vld [vmem:[#allocation2 + $0x4] sm:$0x8]
    %v938 = vld [vmem:[%s3 + $0x70] sm:$0xf]
    %v939 = vld [vmem:[%s3 + $0x74] sm:$0xf]
    %v940 = vld [vmem:[%s3 + $0x78] sm:$0xf]
    %v941 = vld [vmem:[%s3 + $0x7c] sm:$0xf]
    %v943 = vunpack.c.l.b16 %v937
    %v944 = vpack.c.b16 %v943, %v943
    %v945 = vrot.slane %v944, 3
    %v950 = vunpack.c.l.b16 %v938
    %v951 = vunpack.c.l.b16 %v939
    %v952 = vunpack.c.l.b16 %v940
    %v953 = vunpack.c.l.b16 %v941
    %v954 = vpack.c.b16 %v951, %v950
    %v955 = vpack.c.b16 %v953, %v952
    %v959 = vsel %vm517, %v945, 0
    %961 = vmatprep.subr.bf16.mxu0 0
    %962 = vmatpush1.bf16.msra.mxu0 0
    %963 = vmatprep.subr.bf16.mxu0 0
    %964 = vmatpush1.bf16.msra.mxu0 0
    %965 = vmatprep.subr.bf16.mxu0 0
    %966 = vmatpush1.bf16.msra.mxu0 0
    %967 = vmatprep.subr.bf16.mxu0 0
    %968 = vmatpush1.bf16.msra.mxu0 0
    %969 = vmatprep.subr.bf16.mxu0 0
    %970 = vmatpush1.bf16.msra.mxu0 0
    %971 = vmatprep.subr.bf16.mxu0 0
    %972 = vmatpush1.bf16.msra.mxu0 0
    %973 = vmatprep.subr.bf16.mxu0 0
    %974 = vmatpush1.bf16.msra.mxu0 %v955
    %975 = vmatprep.subr.bf16.mxu0 0
    %976 = vmatpush1.bf16.msra.mxu0 %v954
    %977 = vmatprep.subr.bf16.mxu0 0
    %978 = vmatpush2.bf16.msra.mxu0 0
    %979 = vmatprep.subr.bf16.mxu0 0
    %980 = vmatpush2.bf16.msra.mxu0 0
    %981 = vmatprep.subr.bf16.mxu0 0
    %982 = vmatpush2.bf16.msra.mxu0 0
    %983 = vmatprep.subr.bf16.mxu0 0
    %984 = vmatpush2.bf16.msra.mxu0 0
    %985 = vmatprep.subr.bf16.mxu0 0
    %986 = vmatpush2.bf16.msra.mxu0 0
    %987 = vmatprep.subr.bf16.mxu0 0
    %988 = vmatpush2.bf16.msra.mxu0 0
    %989 = vmatprep.subr.bf16.mxu0 0
    %990 = vmatpush2.bf16.msra.mxu0 0
    %991 = vmatprep.subr.bf16.mxu0 0
    %992 = vmatpush2.bf16.msra.mxu0 0
    %993 = vmatprep.mubr.bf16.mxu0 0
    %994 = vmatmul.mubr.bf16.gmra.mxu0 %v959
    %v995 = vpop.f32.mrf.mxu0
    %v996 = vadd.f32 0.0, %v995
    %v997 = vpop.f32.mrf.mxu0
    %v998 = vpop.f32.mrf.mxu0
    %v999 = vpop.f32.mrf.mxu0
    %1000 = vdwg.mxu0
    %v1001 = vadd.f32 %v936, %v996
    %v1002 = vld [vmem:[#allocation2 + $0x8] sm:$0x1]
    %v1003 = vld [vmem:[%s3 + $0x80] sm:$0xf]
    %v1004 = vld [vmem:[%s3 + $0x84] sm:$0xf]
    %v1005 = vld [vmem:[%s3 + $0x88] sm:$0xf]
    %v1006 = vld [vmem:[%s3 + $0x8c] sm:$0xf]
    %v1011 = vunpack.c.l.b16 %v1003
    %v1012 = vunpack.c.l.b16 %v1004
    %v1013 = vunpack.c.l.b16 %v1005
    %v1014 = vunpack.c.l.b16 %v1006
    %v1015 = vpack.c.b16 %v1012, %v1011
    %v1016 = vpack.c.b16 %v1014, %v1013
    %v1020 = vsel %vm517, %v1002, 0
    %1022 = vmatprep.subr.bf16.mxu0 0
    %1023 = vmatpush1.bf16.msra.mxu0 0
    %1024 = vmatprep.subr.bf16.mxu0 0
    %1025 = vmatpush1.bf16.msra.mxu0 0
    %1026 = vmatprep.subr.bf16.mxu0 0
    %1027 = vmatpush1.bf16.msra.mxu0 0
    %1028 = vmatprep.subr.bf16.mxu0 0
    %1029 = vmatpush1.bf16.msra.mxu0 0
    %1030 = vmatprep.subr.bf16.mxu0 0
    %1031 = vmatpush1.bf16.msra.mxu0 0
    %1032 = vmatprep.subr.bf16.mxu0 0
    %1033 = vmatpush1.bf16.msra.mxu0 0
    %1034 = vmatprep.subr.bf16.mxu0 0
    %1035 = vmatpush1.bf16.msra.mxu0 %v1016
    %1036 = vmatprep.subr.bf16.mxu0 0
    %1037 = vmatpush1.bf16.msra.mxu0 %v1015
    %1038 = vmatprep.subr.bf16.mxu0 0
    %1039 = vmatpush2.bf16.msra.mxu0 0
    %1040 = vmatprep.subr.bf16.mxu0 0
    %1041 = vmatpush2.bf16.msra.mxu0 0
    %1042 = vmatprep.subr.bf16.mxu0 0
    %1043 = vmatpush2.bf16.msra.mxu0 0
    %1044 = vmatprep.subr.bf16.mxu0 0
    %1045 = vmatpush2.bf16.msra.mxu0 0
    %1046 = vmatprep.subr.bf16.mxu0 0
    %1047 = vmatpush2.bf16.msra.mxu0 0
    %1048 = vmatprep.subr.bf16.mxu0 0
    %1049 = vmatpush2.bf16.msra.mxu0 0
    %1050 = vmatprep.subr.bf16.mxu0 0
    %1051 = vmatpush2.bf16.msra.mxu0 0
    %1052 = vmatprep.subr.bf16.mxu0 0
    %1053 = vmatpush2.bf16.msra.mxu0 0
    %1054 = vmatprep.mubr.bf16.mxu0 0
    %1055 = vmatmul.mubr.bf16.gmra.mxu0 %v1020
    %v1056 = vpop.f32.mrf.mxu0
    %v1057 = vadd.f32 0.0, %v1056
    %v1058 = vpop.f32.mrf.mxu0
    %v1059 = vpop.f32.mrf.mxu0
    %v1060 = vpop.f32.mrf.mxu0
    %1061 = vdwg.mxu0
    %v1062 = vadd.f32 %v1001, %v1057
    %v1063 = vld [vmem:[#allocation2 + $0x8] sm:$0x2]
    %v1064 = vld [vmem:[%s3 + $0x90] sm:$0xf]
    %v1065 = vld [vmem:[%s3 + $0x94] sm:$0xf]
    %v1066 = vld [vmem:[%s3 + $0x98] sm:$0xf]
    %v1067 = vld [vmem:[%s3 + $0x9c] sm:$0xf]
    %v1069 = vunpack.c.l.b16 %v1063
    %v1070 = vpack.c.b16 %v1069, %v1069
    %v1071 = vrot.slane %v1070, 1
    %v1076 = vunpack.c.l.b16 %v1064
    %v1077 = vunpack.c.l.b16 %v1065
    %v1078 = vunpack.c.l.b16 %v1066
    %v1079 = vunpack.c.l.b16 %v1067
    %v1080 = vpack.c.b16 %v1077, %v1076
    %v1081 = vpack.c.b16 %v1079, %v1078
    %v1085 = vsel %vm517, %v1071, 0
    %1087 = vmatprep.subr.bf16.mxu0 0
    %1088 = vmatpush1.bf16.msra.mxu0 0
    %1089 = vmatprep.subr.bf16.mxu0 0
    %1090 = vmatpush1.bf16.msra.mxu0 0
    %1091 = vmatprep.subr.bf16.mxu0 0
    %1092 = vmatpush1.bf16.msra.mxu0 0
    %1093 = vmatprep.subr.bf16.mxu0 0
    %1094 = vmatpush1.bf16.msra.mxu0 0
    %1095 = vmatprep.subr.bf16.mxu0 0
    %1096 = vmatpush1.bf16.msra.mxu0 0
    %1097 = vmatprep.subr.bf16.mxu0 0
    %1098 = vmatpush1.bf16.msra.mxu0 0
    %1099 = vmatprep.subr.bf16.mxu0 0
    %1100 = vmatpush1.bf16.msra.mxu0 %v1081
    %1101 = vmatprep.subr.bf16.mxu0 0
    %1102 = vmatpush1.bf16.msra.mxu0 %v1080
    %1103 = vmatprep.subr.bf16.mxu0 0
    %1104 = vmatpush2.bf16.msra.mxu0 0
    %1105 = vmatprep.subr.bf16.mxu0 0
    %1106 = vmatpush2.bf16.msra.mxu0 0
    %1107 = vmatprep.subr.bf16.mxu0 0
    %1108 = vmatpush2.bf16.msra.mxu0 0
    %1109 = vmatprep.subr.bf16.mxu0 0
    %1110 = vmatpush2.bf16.msra.mxu0 0
    %1111 = vmatprep.subr.bf16.mxu0 0
    %1112 = vmatpush2.bf16.msra.mxu0 0
    %1113 = vmatprep.subr.bf16.mxu0 0
    %1114 = vmatpush2.bf16.msra.mxu0 0
    %1115 = vmatprep.subr.bf16.mxu0 0
    %1116 = vmatpush2.bf16.msra.mxu0 0
    %1117 = vmatprep.subr.bf16.mxu0 0
    %1118 = vmatpush2.bf16.msra.mxu0 0
    %1119 = vmatprep.mubr.bf16.mxu0 0
    %1120 = vmatmul.mubr.bf16.gmra.mxu0 %v1085
    %v1121 = vpop.f32.mrf.mxu0
    %v1122 = vadd.f32 0.0, %v1121
    %v1123 = vpop.f32.mrf.mxu0
    %v1124 = vpop.f32.mrf.mxu0
    %v1125 = vpop.f32.mrf.mxu0
    %1126 = vdwg.mxu0
    %v1127 = vadd.f32 %v1062, %v1122
    %v1128 = vld [vmem:[#allocation2 + $0x8] sm:$0x4]
    %v1129 = vld [vmem:[%s3 + $0xa0] sm:$0xf]
    %v1130 = vld [vmem:[%s3 + $0xa4] sm:$0xf]
    %v1131 = vld [vmem:[%s3 + $0xa8] sm:$0xf]
    %v1132 = vld [vmem:[%s3 + $0xac] sm:$0xf]
    %v1134 = vunpack.c.l.b16 %v1128
    %v1135 = vpack.c.b16 %v1134, %v1134
    %v1136 = vrot.slane %v1135, 2
    %v1141 = vunpack.c.l.b16 %v1129
    %v1142 = vunpack.c.l.b16 %v1130
    %v1143 = vunpack.c.l.b16 %v1131
    %v1144 = vunpack.c.l.b16 %v1132
    %v1145 = vpack.c.b16 %v1142, %v1141
    %v1146 = vpack.c.b16 %v1144, %v1143
    %v1150 = vsel %vm517, %v1136, 0
    %1152 = vmatprep.subr.bf16.mxu0 0
    %1153 = vmatpush1.bf16.msra.mxu0 0
    %1154 = vmatprep.subr.bf16.mxu0 0
    %1155 = vmatpush1.bf16.msra.mxu0 0
    %1156 = vmatprep.subr.bf16.mxu0 0
    %1157 = vmatpush1.bf16.msra.mxu0 0
    %1158 = vmatprep.subr.bf16.mxu0 0
    %1159 = vmatpush1.bf16.msra.mxu0 0
    %1160 = vmatprep.subr.bf16.mxu0 0
    %1161 = vmatpush1.bf16.msra.mxu0 0
    %1162 = vmatprep.subr.bf16.mxu0 0
    %1163 = vmatpush1.bf16.msra.mxu0 0
    %1164 = vmatprep.subr.bf16.mxu0 0
    %1165 = vmatpush1.bf16.msra.mxu0 %v1146
    %1166 = vmatprep.subr.bf16.mxu0 0
    %1167 = vmatpush1.bf16.msra.mxu0 %v1145
    %1168 = vmatprep.subr.bf16.mxu0 0
    %1169 = vmatpush2.bf16.msra.mxu0 0
    %1170 = vmatprep.subr.bf16.mxu0 0
    %1171 = vmatpush2.bf16.msra.mxu0 0
    %1172 = vmatprep.subr.bf16.mxu0 0
    %1173 = vmatpush2.bf16.msra.mxu0 0
    %1174 = vmatprep.subr.bf16.mxu0 0
    %1175 = vmatpush2.bf16.msra.mxu0 0
    %1176 = vmatprep.subr.bf16.mxu0 0
    %1177 = vmatpush2.bf16.msra.mxu0 0
    %1178 = vmatprep.subr.bf16.mxu0 0
    %1179 = vmatpush2.bf16.msra.mxu0 0
    %1180 = vmatprep.subr.bf16.mxu0 0
    %1181 = vmatpush2.bf16.msra.mxu0 0
    %1182 = vmatprep.subr.bf16.mxu0 0
    %1183 = vmatpush2.bf16.msra.mxu0 0
    %1184 = vmatprep.mubr.bf16.mxu0 0
    %1185 = vmatmul.mubr.bf16.gmra.mxu0 %v1150
    %v1186 = vpop.f32.mrf.mxu0
    %v1187 = vadd.f32 0.0, %v1186
    %v1188 = vpop.f32.mrf.mxu0
    %v1189 = vpop.f32.mrf.mxu0
    %v1190 = vpop.f32.mrf.mxu0
    %1191 = vdwg.mxu0
    %v1192 = vadd.f32 %v1127, %v1187
    %v1193 = vld [vmem:[#allocation2 + $0x8] sm:$0x8]
    %v1194 = vld [vmem:[%s3 + $0xb0] sm:$0xf]
    %v1195 = vld [vmem:[%s3 + $0xb4] sm:$0xf]
    %v1196 = vld [vmem:[%s3 + $0xb8] sm:$0xf]
    %v1197 = vld [vmem:[%s3 + $0xbc] sm:$0xf]
    %v1199 = vunpack.c.l.b16 %v1193
    %v1200 = vpack.c.b16 %v1199, %v1199
    %v1201 = vrot.slane %v1200, 3
    %v1206 = vunpack.c.l.b16 %v1194
    %v1207 = vunpack.c.l.b16 %v1195
    %v1208 = vunpack.c.l.b16 %v1196
    %v1209 = vunpack.c.l.b16 %v1197
    %v1210 = vpack.c.b16 %v1207, %v1206
    %v1211 = vpack.c.b16 %v1209, %v1208
    %v1215 = vsel %vm517, %v1201, 0
    %1217 = vmatprep.subr.bf16.mxu0 0
    %1218 = vmatpush1.bf16.msra.mxu0 0
    %1219 = vmatprep.subr.bf16.mxu0 0
    %1220 = vmatpush1.bf16.msra.mxu0 0
    %1221 = vmatprep.subr.bf16.mxu0 0
    %1222 = vmatpush1.bf16.msra.mxu0 0
    %1223 = vmatprep.subr.bf16.mxu0 0
    %1224 = vmatpush1.bf16.msra.mxu0 0
    %1225 = vmatprep.subr.bf16.mxu0 0
    %1226 = vmatpush1.bf16.msra.mxu0 0
    %1227 = vmatprep.subr.bf16.mxu0 0
    %1228 = vmatpush1.bf16.msra.mxu0 0
    %1229 = vmatprep.subr.bf16.mxu0 0
    %1230 = vmatpush1.bf16.msra.mxu0 %v1211
    %1231 = vmatprep.subr.bf16.mxu0 0
    %1232 = vmatpush1.bf16.msra.mxu0 %v1210
    %1233 = vmatprep.subr.bf16.mxu0 0
    %1234 = vmatpush2.bf16.msra.mxu0 0
    %1235 = vmatprep.subr.bf16.mxu0 0
    %1236 = vmatpush2.bf16.msra.mxu0 0
    %1237 = vmatprep.subr.bf16.mxu0 0
    %1238 = vmatpush2.bf16.msra.mxu0 0
    %1239 = vmatprep.subr.bf16.mxu0 0
    %1240 = vmatpush2.bf16.msra.mxu0 0
    %1241 = vmatprep.subr.bf16.mxu0 0
    %1242 = vmatpush2.bf16.msra.mxu0 0
    %1243 = vmatprep.subr.bf16.mxu0 0
    %1244 = vmatpush2.bf16.msra.mxu0 0
    %1245 = vmatprep.subr.bf16.mxu0 0
    %1246 = vmatpush2.bf16.msra.mxu0 0
    %1247 = vmatprep.subr.bf16.mxu0 0
    %1248 = vmatpush2.bf16.msra.mxu0 0
    %1249 = vmatprep.mubr.bf16.mxu0 0
    %1250 = vmatmul.mubr.bf16.gmra.mxu0 %v1215
    %v1251 = vpop.f32.mrf.mxu0
    %v1252 = vadd.f32 0.0, %v1251
    %v1253 = vpop.f32.mrf.mxu0
    %v1254 = vpop.f32.mrf.mxu0
    %v1255 = vpop.f32.mrf.mxu0
    %1256 = vdwg.mxu0
    %v1257 = vadd.f32 %v1192, %v1252
    %v1258 = vld [vmem:[#allocation2 + $0xc] sm:$0x1]
    %v1259 = vld [vmem:[%s3 + $0xc0] sm:$0xf]
    %v1260 = vld [vmem:[%s3 + $0xc4] sm:$0xf]
    %v1261 = vld [vmem:[%s3 + $0xc8] sm:$0xf]
    %v1262 = vld [vmem:[%s3 + $0xcc] sm:$0xf]
    %v1267 = vunpack.c.l.b16 %v1259
    %v1268 = vunpack.c.l.b16 %v1260
    %v1269 = vunpack.c.l.b16 %v1261
    %v1270 = vunpack.c.l.b16 %v1262
    %v1271 = vpack.c.b16 %v1268, %v1267
    %v1272 = vpack.c.b16 %v1270, %v1269
    %v1276 = vsel %vm517, %v1258, 0
    %1278 = vmatprep.subr.bf16.mxu0 0
    %1279 = vmatpush1.bf16.msra.mxu0 0
    %1280 = vmatprep.subr.bf16.mxu0 0
    %1281 = vmatpush1.bf16.msra.mxu0 0
    %1282 = vmatprep.subr.bf16.mxu0 0
    %1283 = vmatpush1.bf16.msra.mxu0 0
    %1284 = vmatprep.subr.bf16.mxu0 0
    %1285 = vmatpush1.bf16.msra.mxu0 0
    %1286 = vmatprep.subr.bf16.mxu0 0
    %1287 = vmatpush1.bf16.msra.mxu0 0
    %1288 = vmatprep.subr.bf16.mxu0 0
    %1289 = vmatpush1.bf16.msra.mxu0 0
    %1290 = vmatprep.subr.bf16.mxu0 0
    %1291 = vmatpush1.bf16.msra.mxu0 %v1272
    %1292 = vmatprep.subr.bf16.mxu0 0
    %1293 = vmatpush1.bf16.msra.mxu0 %v1271
    %1294 = vmatprep.subr.bf16.mxu0 0
    %1295 = vmatpush2.bf16.msra.mxu0 0
    %1296 = vmatprep.subr.bf16.mxu0 0
    %1297 = vmatpush2.bf16.msra.mxu0 0
    %1298 = vmatprep.subr.bf16.mxu0 0
    %1299 = vmatpush2.bf16.msra.mxu0 0
    %1300 = vmatprep.subr.bf16.mxu0 0
    %1301 = vmatpush2.bf16.msra.mxu0 0
    %1302 = vmatprep.subr.bf16.mxu0 0
    %1303 = vmatpush2.bf16.msra.mxu0 0
    %1304 = vmatprep.subr.bf16.mxu0 0
    %1305 = vmatpush2.bf16.msra.mxu0 0
    %1306 = vmatprep.subr.bf16.mxu0 0
    %1307 = vmatpush2.bf16.msra.mxu0 0
    %1308 = vmatprep.subr.bf16.mxu0 0
    %1309 = vmatpush2.bf16.msra.mxu0 0
    %1310 = vmatprep.mubr.bf16.mxu0 0
    %1311 = vmatmul.mubr.bf16.gmra.mxu0 %v1276
    %v1312 = vpop.f32.mrf.mxu0
    %v1313 = vadd.f32 0.0, %v1312
    %v1314 = vpop.f32.mrf.mxu0
    %v1315 = vpop.f32.mrf.mxu0
    %v1316 = vpop.f32.mrf.mxu0
    %1317 = vdwg.mxu0
    %v1318 = vadd.f32 %v1257, %v1313
    %v1319 = vld [vmem:[#allocation2 + $0xc] sm:$0x2]
    %v1320 = vld [vmem:[%s3 + $0xd0] sm:$0xf]
    %v1321 = vld [vmem:[%s3 + $0xd4] sm:$0xf]
    %v1322 = vld [vmem:[%s3 + $0xd8] sm:$0xf]
    %v1323 = vld [vmem:[%s3 + $0xdc] sm:$0xf]
    %v1325 = vunpack.c.l.b16 %v1319
    %v1326 = vpack.c.b16 %v1325, %v1325
    %v1327 = vrot.slane %v1326, 1
    %v1332 = vunpack.c.l.b16 %v1320
    %v1333 = vunpack.c.l.b16 %v1321
    %v1334 = vunpack.c.l.b16 %v1322
    %v1335 = vunpack.c.l.b16 %v1323
    %v1336 = vpack.c.b16 %v1333, %v1332
    %v1337 = vpack.c.b16 %v1335, %v1334
    %v1341 = vsel %vm517, %v1327, 0
    %1343 = vmatprep.subr.bf16.mxu0 0
    %1344 = vmatpush1.bf16.msra.mxu0 0
    %1345 = vmatprep.subr.bf16.mxu0 0
    %1346 = vmatpush1.bf16.msra.mxu0 0
    %1347 = vmatprep.subr.bf16.mxu0 0
    %1348 = vmatpush1.bf16.msra.mxu0 0
    %1349 = vmatprep.subr.bf16.mxu0 0
    %1350 = vmatpush1.bf16.msra.mxu0 0
    %1351 = vmatprep.subr.bf16.mxu0 0
    %1352 = vmatpush1.bf16.msra.mxu0 0
    %1353 = vmatprep.subr.bf16.mxu0 0
    %1354 = vmatpush1.bf16.msra.mxu0 0
    %1355 = vmatprep.subr.bf16.mxu0 0
    %1356 = vmatpush1.bf16.msra.mxu0 %v1337
    %1357 = vmatprep.subr.bf16.mxu0 0
    %1358 = vmatpush1.bf16.msra.mxu0 %v1336
    %1359 = vmatprep.subr.bf16.mxu0 0
    %1360 = vmatpush2.bf16.msra.mxu0 0
    %1361 = vmatprep.subr.bf16.mxu0 0
    %1362 = vmatpush2.bf16.msra.mxu0 0
    %1363 = vmatprep.subr.bf16.mxu0 0
    %1364 = vmatpush2.bf16.msra.mxu0 0
    %1365 = vmatprep.subr.bf16.mxu0 0
    %1366 = vmatpush2.bf16.msra.mxu0 0
    %1367 = vmatprep.subr.bf16.mxu0 0
    %1368 = vmatpush2.bf16.msra.mxu0 0
    %1369 = vmatprep.subr.bf16.mxu0 0
    %1370 = vmatpush2.bf16.msra.mxu0 0
    %1371 = vmatprep.subr.bf16.mxu0 0
    %1372 = vmatpush2.bf16.msra.mxu0 0
    %1373 = vmatprep.subr.bf16.mxu0 0
    %1374 = vmatpush2.bf16.msra.mxu0 0
    %1375 = vmatprep.mubr.bf16.mxu0 0
    %1376 = vmatmul.mubr.bf16.gmra.mxu0 %v1341
    %v1377 = vpop.f32.mrf.mxu0
    %v1378 = vadd.f32 0.0, %v1377
    %v1379 = vpop.f32.mrf.mxu0
    %v1380 = vpop.f32.mrf.mxu0
    %v1381 = vpop.f32.mrf.mxu0
    %1382 = vdwg.mxu0
    %v1383 = vadd.f32 %v1318, %v1378
    %v1384 = vld [vmem:[#allocation2 + $0xc] sm:$0x4]
    %v1385 = vld [vmem:[%s3 + $0xe0] sm:$0xf]
    %v1386 = vld [vmem:[%s3 + $0xe4] sm:$0xf]
    %v1387 = vld [vmem:[%s3 + $0xe8] sm:$0xf]
    %v1388 = vld [vmem:[%s3 + $0xec] sm:$0xf]
    %v1390 = vunpack.c.l.b16 %v1384
    %v1391 = vpack.c.b16 %v1390, %v1390
    %v1392 = vrot.slane %v1391, 2
    %v1397 = vunpack.c.l.b16 %v1385
    %v1398 = vunpack.c.l.b16 %v1386
    %v1399 = vunpack.c.l.b16 %v1387
    %v1400 = vunpack.c.l.b16 %v1388
    %v1401 = vpack.c.b16 %v1398, %v1397
    %v1402 = vpack.c.b16 %v1400, %v1399
    %v1406 = vsel %vm517, %v1392, 0
    %1408 = vmatprep.subr.bf16.mxu0 0
    %1409 = vmatpush1.bf16.msra.mxu0 0
    %1410 = vmatprep.subr.bf16.mxu0 0
    %1411 = vmatpush1.bf16.msra.mxu0 0
    %1412 = vmatprep.subr.bf16.mxu0 0
    %1413 = vmatpush1.bf16.msra.mxu0 0
    %1414 = vmatprep.subr.bf16.mxu0 0
    %1415 = vmatpush1.bf16.msra.mxu0 0
    %1416 = vmatprep.subr.bf16.mxu0 0
    %1417 = vmatpush1.bf16.msra.mxu0 0
    %1418 = vmatprep.subr.bf16.mxu0 0
    %1419 = vmatpush1.bf16.msra.mxu0 0
    %1420 = vmatprep.subr.bf16.mxu0 0
    %1421 = vmatpush1.bf16.msra.mxu0 %v1402
    %1422 = vmatprep.subr.bf16.mxu0 0
    %1423 = vmatpush1.bf16.msra.mxu0 %v1401
    %1424 = vmatprep.subr.bf16.mxu0 0
    %1425 = vmatpush2.bf16.msra.mxu0 0
    %1426 = vmatprep.subr.bf16.mxu0 0
    %1427 = vmatpush2.bf16.msra.mxu0 0
    %1428 = vmatprep.subr.bf16.mxu0 0
    %1429 = vmatpush2.bf16.msra.mxu0 0
    %1430 = vmatprep.subr.bf16.mxu0 0
    %1431 = vmatpush2.bf16.msra.mxu0 0
    %1432 = vmatprep.subr.bf16.mxu0 0
    %1433 = vmatpush2.bf16.msra.mxu0 0
    %1434 = vmatprep.subr.bf16.mxu0 0
    %1435 = vmatpush2.bf16.msra.mxu0 0
    %1436 = vmatprep.subr.bf16.mxu0 0
    %1437 = vmatpush2.bf16.msra.mxu0 0
    %1438 = vmatprep.subr.bf16.mxu0 0
    %1439 = vmatpush2.bf16.msra.mxu0 0
    %1440 = vmatprep.mubr.bf16.mxu0 0
    %1441 = vmatmul.mubr.bf16.gmra.mxu0 %v1406
    %v1442 = vpop.f32.mrf.mxu0
    %v1443 = vadd.f32 0.0, %v1442
    %v1444 = vpop.f32.mrf.mxu0
    %v1445 = vpop.f32.mrf.mxu0
    %v1446 = vpop.f32.mrf.mxu0
    %1447 = vdwg.mxu0
    %v1448 = vadd.f32 %v1383, %v1443
    %v1449 = vld [vmem:[#allocation2 + $0xc] sm:$0x8]
    %v1450 = vld [vmem:[%s3 + $0xf0] sm:$0xf]
    %v1451 = vld [vmem:[%s3 + $0xf4] sm:$0xf]
    %v1452 = vld [vmem:[%s3 + $0xf8] sm:$0xf]
    %v1453 = vld [vmem:[%s3 + $0xfc] sm:$0xf]
    %v1455 = vunpack.c.l.b16 %v1449
    %v1456 = vpack.c.b16 %v1455, %v1455
    %v1457 = vrot.slane %v1456, 3
    %v1462 = vunpack.c.l.b16 %v1450
    %v1463 = vunpack.c.l.b16 %v1451
    %v1464 = vunpack.c.l.b16 %v1452
    %v1465 = vunpack.c.l.b16 %v1453
    %v1466 = vpack.c.b16 %v1463, %v1462
    %v1467 = vpack.c.b16 %v1465, %v1464
    %v1471 = vsel %vm517, %v1457, 0
    %1473 = vmatprep.subr.bf16.mxu0 0
    %1474 = vmatpush1.bf16.msra.mxu0 0
    %1475 = vmatprep.subr.bf16.mxu0 0
    %1476 = vmatpush1.bf16.msra.mxu0 0
    %1477 = vmatprep.subr.bf16.mxu0 0
    %1478 = vmatpush1.bf16.msra.mxu0 0
    %1479 = vmatprep.subr.bf16.mxu0 0
    %1480 = vmatpush1.bf16.msra.mxu0 0
    %1481 = vmatprep.subr.bf16.mxu0 0
    %1482 = vmatpush1.bf16.msra.mxu0 0
    %1483 = vmatprep.subr.bf16.mxu0 0
    %1484 = vmatpush1.bf16.msra.mxu0 0
    %1485 = vmatprep.subr.bf16.mxu0 0
    %1486 = vmatpush1.bf16.msra.mxu0 %v1467
    %1487 = vmatprep.subr.bf16.mxu0 0
    %1488 = vmatpush1.bf16.msra.mxu0 %v1466
    %1489 = vmatprep.subr.bf16.mxu0 0
    %1490 = vmatpush2.bf16.msra.mxu0 0
    %1491 = vmatprep.subr.bf16.mxu0 0
    %1492 = vmatpush2.bf16.msra.mxu0 0
    %1493 = vmatprep.subr.bf16.mxu0 0
    %1494 = vmatpush2.bf16.msra.mxu0 0
    %1495 = vmatprep.subr.bf16.mxu0 0
    %1496 = vmatpush2.bf16.msra.mxu0 0
    %1497 = vmatprep.subr.bf16.mxu0 0
    %1498 = vmatpush2.bf16.msra.mxu0 0
    %1499 = vmatprep.subr.bf16.mxu0 0
    %1500 = vmatpush2.bf16.msra.mxu0 0
    %1501 = vmatprep.subr.bf16.mxu0 0
    %1502 = vmatpush2.bf16.msra.mxu0 0
    %1503 = vmatprep.subr.bf16.mxu0 0
    %1504 = vmatpush2.bf16.msra.mxu0 0
    %1505 = vmatprep.mubr.bf16.mxu0 0
    %1506 = vmatmul.mubr.bf16.gmra.mxu0 %v1471
    %v1507 = vpop.f32.mrf.mxu0
    %v1508 = vadd.f32 0.0, %v1507
    %v1509 = vpop.f32.mrf.mxu0
    %v1510 = vpop.f32.mrf.mxu0
    %v1511 = vpop.f32.mrf.mxu0
    %1512 = vdwg.mxu0
    %v1513 = vadd.f32 %v1448, %v1508
    %v1514 = vld [vmem:[%s4] sm:$0x1]
    %v1516 = vlaneseq
    %v1517 = vshrl.u32 %v1516, 7
    %v1518 = vsub.s32 0, %v1517
    %v1519 = vrot.slane %v1514, %v1518
    %v1521 = vadd.f32 %v1513, %v1519
    %v1522 = vmax.f32 %v1521, 0.0
    %v1523 = vpack.c.bf16 %v1522, %v1522
    %v1524 = vld [vmem:[%s5] sm:$0xff]
    %v1525 = vld [vmem:[%s5 + $0x8] sm:$0xff]
    %v1526 = vld [vmem:[%s5 + $0x10] sm:$0xff]
    %v1527 = vld [vmem:[%s5 + $0x18] sm:$0xff]
    %v1528 = vld [vmem:[%s5 + $0x20] sm:$0xff]
    %v1529 = vld [vmem:[%s5 + $0x28] sm:$0xff]
    %v1530 = vld [vmem:[%s5 + $0x30] sm:$0xff]
    %v1531 = vld [vmem:[%s5 + $0x38] sm:$0xff]
    %v1532 = vld [vmem:[%s5 + $0x40] sm:$0xff]
    %v1533 = vld [vmem:[%s5 + $0x48] sm:$0xff]
    %v1534 = vld [vmem:[%s5 + $0x50] sm:$0xff]
    %v1535 = vld [vmem:[%s5 + $0x58] sm:$0xff]
    %v1536 = vld [vmem:[%s5 + $0x60] sm:$0xff]
    %v1537 = vld [vmem:[%s5 + $0x68] sm:$0xff]
    %v1538 = vld [vmem:[%s5 + $0x70] sm:$0xff]
    %v1539 = vld [vmem:[%s5 + $0x78] sm:$0xff]
    %v1540 = vld [vmem:[%s6] sm:$0x3]
    %v1542 = vlaneseq
    %v1543 = vshrl.u32 %v1542, 7
    %v1544 = vsub.s32 0, %v1543
    %v1545 = vrot.slane %v1540, %v1544
    %v1546 = vlaneseq
    %v1547 = vshrl.u32 %v1546, 7
    %v1548 = vsub.s32 1, %v1547
    %v1549 = vrot.slane %v1540, %v1548
    %v1568 = vunpack.c.l.b16 %v1524
    %v1569 = vunpack.c.h.b16 %v1524
    %v1570 = vunpack.c.l.b16 %v1525
    %v1571 = vunpack.c.h.b16 %v1525
    %v1572 = vunpack.c.l.b16 %v1526
    %v1573 = vunpack.c.h.b16 %v1526
    %v1574 = vunpack.c.l.b16 %v1527
    %v1575 = vunpack.c.h.b16 %v1527
    %v1576 = vunpack.c.l.b16 %v1528
    %v1577 = vunpack.c.h.b16 %v1528
    %v1578 = vunpack.c.l.b16 %v1529
    %v1579 = vunpack.c.h.b16 %v1529
    %v1580 = vunpack.c.l.b16 %v1530
    %v1581 = vunpack.c.h.b16 %v1530
    %v1582 = vunpack.c.l.b16 %v1531
    %v1583 = vunpack.c.h.b16 %v1531
    %v1584 = vunpack.c.l.b16 %v1532
    %v1585 = vunpack.c.h.b16 %v1532
    %v1586 = vunpack.c.l.b16 %v1533
    %v1587 = vunpack.c.h.b16 %v1533
    %v1588 = vunpack.c.l.b16 %v1534
    %v1589 = vunpack.c.h.b16 %v1534
    %v1590 = vunpack.c.l.b16 %v1535
    %v1591 = vunpack.c.h.b16 %v1535
    %v1592 = vunpack.c.l.b16 %v1536
    %v1593 = vunpack.c.h.b16 %v1536
    %v1594 = vunpack.c.l.b16 %v1537
    %v1595 = vunpack.c.h.b16 %v1537
    %v1596 = vunpack.c.l.b16 %v1538
    %v1597 = vunpack.c.h.b16 %v1538
    %v1598 = vunpack.c.l.b16 %v1539
    %v1599 = vunpack.c.h.b16 %v1539
    %v1600 = vpack.c.b16 %v1570, %v1568
    %v1601 = vpack.c.b16 %v1571, %v1569
    %v1602 = vpack.c.b16 %v1574, %v1572
    %v1603 = vpack.c.b16 %v1575, %v1573
    %v1604 = vpack.c.b16 %v1578, %v1576
    %v1605 = vpack.c.b16 %v1579, %v1577
    %v1606 = vpack.c.b16 %v1582, %v1580
    %v1607 = vpack.c.b16 %v1583, %v1581
    %v1608 = vpack.c.b16 %v1586, %v1584
    %v1609 = vpack.c.b16 %v1587, %v1585
    %v1610 = vpack.c.b16 %v1590, %v1588
    %v1611 = vpack.c.b16 %v1591, %v1589
    %v1612 = vpack.c.b16 %v1594, %v1592
    %v1613 = vpack.c.b16 %v1595, %v1593
    %v1614 = vpack.c.b16 %v1598, %v1596
    %v1615 = vpack.c.b16 %v1599, %v1597
    %1632 = vmatprep.subr.bf16.mxu0 %v1615
    %1633 = vmatpush1.bf16.msra.mxu0 %v1614
    %1634 = vmatprep.subr.bf16.mxu0 %v1613
    %1635 = vmatpush1.bf16.msra.mxu0 %v1612
    %1636 = vmatprep.subr.bf16.mxu0 %v1611
    %1637 = vmatpush1.bf16.msra.mxu0 %v1610
    %1638 = vmatprep.subr.bf16.mxu0 %v1609
    %1639 = vmatpush1.bf16.msra.mxu0 %v1608
    %1640 = vmatprep.subr.bf16.mxu0 %v1607
    %1641 = vmatpush1.bf16.msra.mxu0 %v1606
    %1642 = vmatprep.subr.bf16.mxu0 %v1605
    %1643 = vmatpush1.bf16.msra.mxu0 %v1604
    %1644 = vmatprep.subr.bf16.mxu0 %v1603
    %1645 = vmatpush1.bf16.msra.mxu0 %v1602
    %1646 = vmatprep.subr.bf16.mxu0 %v1601
    %1647 = vmatpush1.bf16.msra.mxu0 %v1600
    %1648 = vmatprep.subr.bf16.mxu0 0
    %1649 = vmatpush2.bf16.msra.mxu0 0
    %1650 = vmatprep.subr.bf16.mxu0 0
    %1651 = vmatpush2.bf16.msra.mxu0 0
    %1652 = vmatprep.subr.bf16.mxu0 0
    %1653 = vmatpush2.bf16.msra.mxu0 0
    %1654 = vmatprep.subr.bf16.mxu0 0
    %1655 = vmatpush2.bf16.msra.mxu0 0
    %1656 = vmatprep.subr.bf16.mxu0 0
    %1657 = vmatpush2.bf16.msra.mxu0 0
    %1658 = vmatprep.subr.bf16.mxu0 0
    %1659 = vmatpush2.bf16.msra.mxu0 0
    %1660 = vmatprep.subr.bf16.mxu0 0
    %1661 = vmatpush2.bf16.msra.mxu0 0
    %1662 = vmatprep.subr.bf16.mxu0 0
    %1663 = vmatpush2.bf16.msra.mxu0 0
    %1664 = vmatprep.mubr.bf16.mxu0 0
    %1665 = vmatmul.mubr.bf16.gmra.mxu0 %v1523
    %v1666 = vpop.f32.mrf.mxu0
    %v1667 = vadd.f32 %v1545, %v1666
    %v1668 = vpop.f32.mrf.mxu0
    %v1669 = vadd.f32 %v1549, %v1668
    %v1670 = vpop.f32.mrf.mxu0
    %v1671 = vpop.f32.mrf.mxu0
    %1672 = vdwg.mxu0
    %1673 = vst [vmem:[%s16] sm:$0x3] %v1667
    %1674 = vst [vmem:[#allocation3] sm:$0x3] %v1669
    %v1675 = vld [vmem:[%s7] sm:$0xff]
    %v1676 = vld [vmem:[%s7 + $0x8] sm:$0xff]
    %v1677 = vld [vmem:[%s7 + $0x10] sm:$0xff]
    %v1678 = vld [vmem:[%s7 + $0x18] sm:$0xff]
    %v1679 = vld [vmem:[%s7 + $0x20] sm:$0xff]
    %v1680 = vld [vmem:[%s7 + $0x28] sm:$0xff]
    %v1681 = vld [vmem:[%s7 + $0x30] sm:$0xff]
    %v1682 = vld [vmem:[%s7 + $0x38] sm:$0xff]
    %v1683 = vld [vmem:[%s7 + $0x40] sm:$0xff]
    %v1684 = vld [vmem:[%s7 + $0x48] sm:$0xff]
    %v1685 = vld [vmem:[%s7 + $0x50] sm:$0xff]
    %v1686 = vld [vmem:[%s7 + $0x58] sm:$0xff]
    %v1687 = vld [vmem:[%s7 + $0x60] sm:$0xff]
    %v1688 = vld [vmem:[%s7 + $0x68] sm:$0xff]
    %v1689 = vld [vmem:[%s7 + $0x70] sm:$0xff]
    %v1690 = vld [vmem:[%s7 + $0x78] sm:$0xff]
    %v1691 = vld [vmem:[%s7 + $0x80] sm:$0xff]
    %v1692 = vld [vmem:[%s7 + $0x88] sm:$0xff]
    %v1693 = vld [vmem:[%s7 + $0x90] sm:$0xff]
    %v1694 = vld [vmem:[%s7 + $0x98] sm:$0xff]
    %v1695 = vld [vmem:[%s7 + $0xa0] sm:$0xff]
    %v1696 = vld [vmem:[%s7 + $0xa8] sm:$0xff]
    %v1697 = vld [vmem:[%s7 + $0xb0] sm:$0xff]
    %v1698 = vld [vmem:[%s7 + $0xb8] sm:$0xff]
    %v1699 = vld [vmem:[%s7 + $0xc0] sm:$0xff]
    %v1700 = vld [vmem:[%s7 + $0xc8] sm:$0xff]
    %v1701 = vld [vmem:[%s7 + $0xd0] sm:$0xff]
    %v1702 = vld [vmem:[%s7 + $0xd8] sm:$0xff]
    %v1703 = vld [vmem:[%s7 + $0xe0] sm:$0xff]
    %v1704 = vld [vmem:[%s7 + $0xe8] sm:$0xff]
    %v1705 = vld [vmem:[%s7 + $0xf0] sm:$0xff]
    %v1706 = vld [vmem:[%s7 + $0xf8] sm:$0xff]
    %v1707 = vld [vmem:[%s8] sm:$0x3]
    %v1709 = vlaneseq
    %v1710 = vshrl.u32 %v1709, 7
    %v1711 = vsub.s32 0, %v1710
    %v1712 = vrot.slane %v1707, %v1711
    %v1713 = vlaneseq
    %v1714 = vshrl.u32 %v1713, 7
    %v1715 = vsub.s32 1, %v1714
    %v1716 = vrot.slane %v1707, %v1715
    %1719 = vmatprep.subr.mxu0 %v1706
    %1720 = vmatpush1.msra.mxu0 %v1705
    %1721 = vmatprep.subr.mxu0 %v1704
    %1722 = vmatpush1.msra.mxu0 %v1703
    %1723 = vmatprep.subr.mxu0 %v1702
    %1724 = vmatpush1.msra.mxu0 %v1701
    %1725 = vmatprep.subr.mxu0 %v1700
    %1726 = vmatpush1.msra.mxu0 %v1699
    %1727 = vmatprep.subr.mxu0 %v1698
    %1728 = vmatpush1.msra.mxu0 %v1697
    %1729 = vmatprep.subr.mxu0 %v1696
    %1730 = vmatpush1.msra.mxu0 %v1695
    %1731 = vmatprep.subr.mxu0 %v1694
    %1732 = vmatpush1.msra.mxu0 %v1693
    %1733 = vmatprep.subr.mxu0 %v1692
    %1734 = vmatpush1.msra.mxu0 %v1691
    %1735 = vmatprep.subr.mxu0 %v1690
    %1736 = vmatpush1.msra.mxu0 %v1689
    %1737 = vmatprep.subr.mxu0 %v1688
    %1738 = vmatpush1.msra.mxu0 %v1687
    %1739 = vmatprep.subr.mxu0 %v1686
    %1740 = vmatpush1.msra.mxu0 %v1685
    %1741 = vmatprep.subr.mxu0 %v1684
    %1742 = vmatpush1.msra.mxu0 %v1683
    %1743 = vmatprep.subr.mxu0 %v1682
    %1744 = vmatpush1.msra.mxu0 %v1681
    %1745 = vmatprep.subr.mxu0 %v1680
    %1746 = vmatpush1.msra.mxu0 %v1679
    %1747 = vmatprep.subr.mxu0 %v1678
    %1748 = vmatpush1.msra.mxu0 %v1677
    %1749 = vmatprep.subr.mxu0 %v1676
    %1750 = vmatpush1.msra.mxu0 %v1675
    %1751 = vmatprep.subr.mxu0 0.0
    %1752 = vmatpush2.msra.mxu0 0.0
    %1753 = vmatprep.subr.mxu0 0.0
    %1754 = vmatpush2.msra.mxu0 0.0
    %1755 = vmatprep.subr.mxu0 0.0
    %1756 = vmatpush2.msra.mxu0 0.0
    %1757 = vmatprep.subr.mxu0 0.0
    %1758 = vmatpush2.msra.mxu0 0.0
    %1759 = vmatprep.subr.mxu0 0.0
    %1760 = vmatpush2.msra.mxu0 0.0
    %1761 = vmatprep.subr.mxu0 0.0
    %1762 = vmatpush2.msra.mxu0 0.0
    %1763 = vmatprep.subr.mxu0 0.0
    %1764 = vmatpush2.msra.mxu0 0.0
    %1765 = vmatprep.subr.mxu0 0.0
    %1766 = vmatpush2.msra.mxu0 0.0
    %1767 = vmatprep.subr.mxu0 0.0
    %1768 = vmatpush2.msra.mxu0 0.0
    %1769 = vmatprep.subr.mxu0 0.0
    %1770 = vmatpush2.msra.mxu0 0.0
    %1771 = vmatprep.subr.mxu0 0.0
    %1772 = vmatpush2.msra.mxu0 0.0
    %1773 = vmatprep.subr.mxu0 0.0
    %1774 = vmatpush2.msra.mxu0 0.0
    %1775 = vmatprep.subr.mxu0 0.0
    %1776 = vmatpush2.msra.mxu0 0.0
    %1777 = vmatprep.subr.mxu0 0.0
    %1778 = vmatpush2.msra.mxu0 0.0
    %1779 = vmatprep.subr.mxu0 0.0
    %1780 = vmatpush2.msra.mxu0 0.0
    %1781 = vmatprep.subr.mxu0 0.0
    %1782 = vmatpush2.msra.mxu0 0.0
    %1783 = vmatprep.mubr.f32.mxu0 0.0
    %1784 = vmatmul.mubr.f32.gmra.mxu0 %v1667
    %v1785 = vpop.f32.mrf.mxu0
    %v1786 = vadd.f32 %v1712, %v1785
    %v1787 = vpop.f32.mrf.mxu0
    %v1788 = vadd.f32 %v1716, %v1787
    %1789 = vdwg.mxu0
    %v1790 = vmax.f32 %v1786, 0.0
    %vm1791 = vcmask 25600
    %1792 = vst.msk [vmem:[#allocation5] sm:$0x3] %vm1791, %v1788
    %v1793 = vpack.c.bf16 %v1790, %v1790
    %v1794 = vld [vmem:[%s9] sm:$0xff]
    %v1795 = vld [vmem:[%s9 + $0x8] sm:$0xff]
    %v1796 = vld [vmem:[%s9 + $0x10] sm:$0xff]
    %v1797 = vld [vmem:[%s9 + $0x18] sm:$0xff]
    %v1798 = vld [vmem:[%s9 + $0x20] sm:$0xff]
    %v1799 = vld [vmem:[%s9 + $0x28] sm:$0xff]
    %v1800 = vld [vmem:[%s9 + $0x30] sm:$0xff]
    %v1801 = vld [vmem:[%s9 + $0x38] sm:$0xff]
    %v1802 = vld [vmem:[%s9 + $0x40] sm:$0xff]
    %v1803 = vld [vmem:[%s9 + $0x48] sm:$0xff]
    %v1804 = vld [vmem:[%s9 + $0x50] sm:$0xff]
    %v1805 = vld [vmem:[%s9 + $0x58] sm:$0xff]
    %v1806 = vld [vmem:[%s9 + $0x60] sm:$0xff]
    %v1807 = vld [vmem:[%s9 + $0x68] sm:$0xff]
    %v1808 = vld [vmem:[%s9 + $0x70] sm:$0xff]
    %v1809 = vld [vmem:[%s9 + $0x78] sm:$0xff]
    %v1810 = vld [vmem:[%s10] sm:$0x3]
    %v1812 = vlaneseq
    %v1813 = vshrl.u32 %v1812, 7
    %v1814 = vsub.s32 0, %v1813
    %v1815 = vrot.slane %v1810, %v1814
    %v1816 = vlaneseq
    %v1817 = vshrl.u32 %v1816, 7
    %v1818 = vsub.s32 1, %v1817
    %v1819 = vrot.slane %v1810, %v1818
    %v1838 = vunpack.c.l.b16 %v1794
    %v1839 = vunpack.c.h.b16 %v1794
    %v1840 = vunpack.c.l.b16 %v1795
    %v1841 = vunpack.c.h.b16 %v1795
    %v1842 = vunpack.c.l.b16 %v1796
    %v1843 = vunpack.c.h.b16 %v1796
    %v1844 = vunpack.c.l.b16 %v1797
    %v1845 = vunpack.c.h.b16 %v1797
    %v1846 = vunpack.c.l.b16 %v1798
    %v1847 = vunpack.c.h.b16 %v1798
    %v1848 = vunpack.c.l.b16 %v1799
    %v1849 = vunpack.c.h.b16 %v1799
    %v1850 = vunpack.c.l.b16 %v1800
    %v1851 = vunpack.c.h.b16 %v1800
    %v1852 = vunpack.c.l.b16 %v1801
    %v1853 = vunpack.c.h.b16 %v1801
    %v1854 = vunpack.c.l.b16 %v1802
    %v1855 = vunpack.c.h.b16 %v1802
    %v1856 = vunpack.c.l.b16 %v1803
    %v1857 = vunpack.c.h.b16 %v1803
    %v1858 = vunpack.c.l.b16 %v1804
    %v1859 = vunpack.c.h.b16 %v1804
    %v1860 = vunpack.c.l.b16 %v1805
    %v1861 = vunpack.c.h.b16 %v1805
    %v1862 = vunpack.c.l.b16 %v1806
    %v1863 = vunpack.c.h.b16 %v1806
    %v1864 = vunpack.c.l.b16 %v1807
    %v1865 = vunpack.c.h.b16 %v1807
    %v1866 = vunpack.c.l.b16 %v1808
    %v1867 = vunpack.c.h.b16 %v1808
    %v1868 = vunpack.c.l.b16 %v1809
    %v1869 = vunpack.c.h.b16 %v1809
    %v1870 = vpack.c.b16 %v1840, %v1838
    %v1871 = vpack.c.b16 %v1841, %v1839
    %v1872 = vpack.c.b16 %v1844, %v1842
    %v1873 = vpack.c.b16 %v1845, %v1843
    %v1874 = vpack.c.b16 %v1848, %v1846
    %v1875 = vpack.c.b16 %v1849, %v1847
    %v1876 = vpack.c.b16 %v1852, %v1850
    %v1877 = vpack.c.b16 %v1853, %v1851
    %v1878 = vpack.c.b16 %v1856, %v1854
    %v1879 = vpack.c.b16 %v1857, %v1855
    %v1880 = vpack.c.b16 %v1860, %v1858
    %v1881 = vpack.c.b16 %v1861, %v1859
    %v1882 = vpack.c.b16 %v1864, %v1862
    %v1883 = vpack.c.b16 %v1865, %v1863
    %v1884 = vpack.c.b16 %v1868, %v1866
    %v1885 = vpack.c.b16 %v1869, %v1867
    %1902 = vmatprep.subr.bf16.mxu0 %v1885
    %1903 = vmatpush1.bf16.msra.mxu0 %v1884
    %1904 = vmatprep.subr.bf16.mxu0 %v1883
    %1905 = vmatpush1.bf16.msra.mxu0 %v1882
    %1906 = vmatprep.subr.bf16.mxu0 %v1881
    %1907 = vmatpush1.bf16.msra.mxu0 %v1880
    %1908 = vmatprep.subr.bf16.mxu0 %v1879
    %1909 = vmatpush1.bf16.msra.mxu0 %v1878
    %1910 = vmatprep.subr.bf16.mxu0 %v1877
    %1911 = vmatpush1.bf16.msra.mxu0 %v1876
    %1912 = vmatprep.subr.bf16.mxu0 %v1875
    %1913 = vmatpush1.bf16.msra.mxu0 %v1874
    %1914 = vmatprep.subr.bf16.mxu0 %v1873
    %1915 = vmatpush1.bf16.msra.mxu0 %v1872
    %1916 = vmatprep.subr.bf16.mxu0 %v1871
    %1917 = vmatpush1.bf16.msra.mxu0 %v1870
    %1918 = vmatprep.subr.bf16.mxu0 0
    %1919 = vmatpush2.bf16.msra.mxu0 0
    %1920 = vmatprep.subr.bf16.mxu0 0
    %1921 = vmatpush2.bf16.msra.mxu0 0
    %1922 = vmatprep.subr.bf16.mxu0 0
    %1923 = vmatpush2.bf16.msra.mxu0 0
    %1924 = vmatprep.subr.bf16.mxu0 0
    %1925 = vmatpush2.bf16.msra.mxu0 0
    %1926 = vmatprep.subr.bf16.mxu0 0
    %1927 = vmatpush2.bf16.msra.mxu0 0
    %1928 = vmatprep.subr.bf16.mxu0 0
    %1929 = vmatpush2.bf16.msra.mxu0 0
    %1930 = vmatprep.subr.bf16.mxu0 0
    %1931 = vmatpush2.bf16.msra.mxu0 0
    %1932 = vmatprep.subr.bf16.mxu0 0
    %1933 = vmatpush2.bf16.msra.mxu0 0
    %1934 = vmatprep.mubr.bf16.mxu0 0
    %1935 = vmatmul.mubr.bf16.gmra.mxu0 %v1793
    %v1936 = vpop.f32.mrf.mxu0
    %v1937 = vadd.f32 %v1815, %v1936
    %v1938 = vpop.f32.mrf.mxu0
    %v1939 = vadd.f32 %v1819, %v1938
    %v1940 = vpop.f32.mrf.mxu0
    %v1941 = vpop.f32.mrf.mxu0
    %1942 = vdwg.mxu0
    %v1943 = vmax.f32 %v1937, 0.0
    %v1944 = vmax.f32 %v1939, 0.0
    %v1945 = vpack.c.bf16 %v1943, %v1943
    %v1946 = vpack.c.bf16 %v1944, %v1944
    %v1947 = vld [vmem:[%s11] sm:$0xff]
    %v1948 = vld [vmem:[%s11 + $0x8] sm:$0xff]
    %v1949 = vld [vmem:[%s11 + $0x10] sm:$0xff]
    %v1950 = vld [vmem:[%s11 + $0x18] sm:$0xff]
    %v1951 = vld [vmem:[%s11 + $0x20] sm:$0xff]
    %v1952 = vld [vmem:[%s11 + $0x28] sm:$0xff]
    %v1953 = vld [vmem:[%s11 + $0x30] sm:$0xff]
    %v1954 = vld [vmem:[%s11 + $0x38] sm:$0xff]
    %v1955 = vld [vmem:[%s11 + $0x40] sm:$0xff]
    %v1956 = vld [vmem:[%s11 + $0x48] sm:$0xff]
    %v1957 = vld [vmem:[%s11 + $0x50] sm:$0xff]
    %v1958 = vld [vmem:[%s11 + $0x58] sm:$0xff]
    %v1959 = vld [vmem:[%s11 + $0x60] sm:$0xff]
    %v1960 = vld [vmem:[%s11 + $0x68] sm:$0xff]
    %v1961 = vld [vmem:[%s11 + $0x70] sm:$0xff]
    %v1962 = vld [vmem:[%s11 + $0x78] sm:$0xff]
    %v1963 = vld [vmem:[%s11 + $0x80] sm:$0xff]
    %v1964 = vld [vmem:[%s11 + $0x88] sm:$0xff]
    %v1965 = vld [vmem:[%s11 + $0x90] sm:$0xff]
    %v1966 = vld [vmem:[%s11 + $0x98] sm:$0xff]
    %v1967 = vld [vmem:[%s11 + $0xa0] sm:$0xff]
    %v1968 = vld [vmem:[%s11 + $0xa8] sm:$0xff]
    %v1969 = vld [vmem:[%s11 + $0xb0] sm:$0xff]
    %v1970 = vld [vmem:[%s11 + $0xb8] sm:$0xff]
    %v1971 = vld [vmem:[%s11 + $0xc0] sm:$0xff]
    %v1972 = vld [vmem:[%s11 + $0xc8] sm:$0xff]
    %v1973 = vld [vmem:[%s11 + $0xd0] sm:$0xff]
    %v1974 = vld [vmem:[%s11 + $0xd8] sm:$0xff]
    %v1975 = vld [vmem:[%s11 + $0xe0] sm:$0xff]
    %v1976 = vld [vmem:[%s11 + $0xe8] sm:$0xff]
    %v1977 = vld [vmem:[%s11 + $0xf0] sm:$0xff]
    %v1978 = vld [vmem:[%s11 + $0xf8] sm:$0xff]
    %v1979 = vld [vmem:[%s12] sm:$0x3]
    %v1981 = vlaneseq
    %v1982 = vshrl.u32 %v1981, 7
    %v1983 = vsub.s32 0, %v1982
    %v1984 = vrot.slane %v1979, %v1983
    %v1985 = vlaneseq
    %v1986 = vshrl.u32 %v1985, 7
    %v1987 = vsub.s32 1, %v1986
    %v1988 = vrot.slane %v1979, %v1987
    %v2023 = vunpack.c.l.b16 %v1947
    %v2024 = vunpack.c.h.b16 %v1947
    %v2025 = vunpack.c.l.b16 %v1948
    %v2026 = vunpack.c.h.b16 %v1948
    %v2027 = vunpack.c.l.b16 %v1949
    %v2028 = vunpack.c.h.b16 %v1949
    %v2029 = vunpack.c.l.b16 %v1950
    %v2030 = vunpack.c.h.b16 %v1950
    %v2031 = vunpack.c.l.b16 %v1951
    %v2032 = vunpack.c.h.b16 %v1951
    %v2033 = vunpack.c.l.b16 %v1952
    %v2034 = vunpack.c.h.b16 %v1952
    %v2035 = vunpack.c.l.b16 %v1953
    %v2036 = vunpack.c.h.b16 %v1953
    %v2037 = vunpack.c.l.b16 %v1954
    %v2038 = vunpack.c.h.b16 %v1954
    %v2039 = vunpack.c.l.b16 %v1955
    %v2040 = vunpack.c.h.b16 %v1955
    %v2041 = vunpack.c.l.b16 %v1956
    %v2042 = vunpack.c.h.b16 %v1956
    %v2043 = vunpack.c.l.b16 %v1957
    %v2044 = vunpack.c.h.b16 %v1957
    %v2045 = vunpack.c.l.b16 %v1958
    %v2046 = vunpack.c.h.b16 %v1958
    %v2047 = vunpack.c.l.b16 %v1959
    %v2048 = vunpack.c.h.b16 %v1959
    %v2049 = vunpack.c.l.b16 %v1960
    %v2050 = vunpack.c.h.b16 %v1960
    %v2051 = vunpack.c.l.b16 %v1961
    %v2052 = vunpack.c.h.b16 %v1961
    %v2053 = vunpack.c.l.b16 %v1962
    %v2054 = vunpack.c.h.b16 %v1962
    %v2055 = vunpack.c.l.b16 %v1963
    %v2056 = vunpack.c.h.b16 %v1963
    %v2057 = vunpack.c.l.b16 %v1964
    %v2058 = vunpack.c.h.b16 %v1964
    %v2059 = vunpack.c.l.b16 %v1965
    %v2060 = vunpack.c.h.b16 %v1965
    %v2061 = vunpack.c.l.b16 %v1966
    %v2062 = vunpack.c.h.b16 %v1966
    %v2063 = vunpack.c.l.b16 %v1967
    %v2064 = vunpack.c.h.b16 %v1967
    %v2065 = vunpack.c.l.b16 %v1968
    %v2066 = vunpack.c.h.b16 %v1968
    %v2067 = vunpack.c.l.b16 %v1969
    %v2068 = vunpack.c.h.b16 %v1969
    %v2069 = vunpack.c.l.b16 %v1970
    %v2070 = vunpack.c.h.b16 %v1970
    %v2071 = vunpack.c.l.b16 %v1971
    %v2072 = vunpack.c.h.b16 %v1971
    %v2073 = vunpack.c.l.b16 %v1972
    %v2074 = vunpack.c.h.b16 %v1972
    %v2075 = vunpack.c.l.b16 %v1973
    %v2076 = vunpack.c.h.b16 %v1973
    %v2077 = vunpack.c.l.b16 %v1974
    %v2078 = vunpack.c.h.b16 %v1974
    %v2079 = vunpack.c.l.b16 %v1975
    %v2080 = vunpack.c.h.b16 %v1975
    %v2081 = vunpack.c.l.b16 %v1976
    %v2082 = vunpack.c.h.b16 %v1976
    %v2083 = vunpack.c.l.b16 %v1977
    %v2084 = vunpack.c.h.b16 %v1977
    %v2085 = vunpack.c.l.b16 %v1978
    %v2086 = vunpack.c.h.b16 %v1978
    %v2087 = vpack.c.b16 %v2025, %v2023
    %v2088 = vpack.c.b16 %v2026, %v2024
    %v2089 = vpack.c.b16 %v2029, %v2027
    %v2090 = vpack.c.b16 %v2030, %v2028
    %v2091 = vpack.c.b16 %v2033, %v2031
    %v2092 = vpack.c.b16 %v2034, %v2032
    %v2093 = vpack.c.b16 %v2037, %v2035
    %v2094 = vpack.c.b16 %v2038, %v2036
    %v2095 = vpack.c.b16 %v2041, %v2039
    %v2096 = vpack.c.b16 %v2042, %v2040
    %v2097 = vpack.c.b16 %v2045, %v2043
    %v2098 = vpack.c.b16 %v2046, %v2044
    %v2099 = vpack.c.b16 %v2049, %v2047
    %v2100 = vpack.c.b16 %v2050, %v2048
    %v2101 = vpack.c.b16 %v2053, %v2051
    %v2102 = vpack.c.b16 %v2054, %v2052
    %v2103 = vpack.c.b16 %v2057, %v2055
    %v2104 = vpack.c.b16 %v2058, %v2056
    %v2105 = vpack.c.b16 %v2061, %v2059
    %v2106 = vpack.c.b16 %v2062, %v2060
    %v2107 = vpack.c.b16 %v2065, %v2063
    %v2108 = vpack.c.b16 %v2066, %v2064
    %v2109 = vpack.c.b16 %v2069, %v2067
    %v2110 = vpack.c.b16 %v2070, %v2068
    %v2111 = vpack.c.b16 %v2073, %v2071
    %v2112 = vpack.c.b16 %v2074, %v2072
    %v2113 = vpack.c.b16 %v2077, %v2075
    %v2114 = vpack.c.b16 %v2078, %v2076
    %v2115 = vpack.c.b16 %v2081, %v2079
    %v2116 = vpack.c.b16 %v2082, %v2080
    %v2117 = vpack.c.b16 %v2085, %v2083
    %v2118 = vpack.c.b16 %v2086, %v2084
    %2151 = vmatprep.subr.bf16.mxu0 %v2102
    %2152 = vmatpush1.bf16.msra.mxu0 %v2101
    %2153 = vmatprep.subr.bf16.mxu0 %v2100
    %2154 = vmatpush1.bf16.msra.mxu0 %v2099
    %2155 = vmatprep.subr.bf16.mxu0 %v2098
    %2156 = vmatpush1.bf16.msra.mxu0 %v2097
    %2157 = vmatprep.subr.bf16.mxu0 %v2096
    %2158 = vmatpush1.bf16.msra.mxu0 %v2095
    %2159 = vmatprep.subr.bf16.mxu0 %v2094
    %2160 = vmatpush1.bf16.msra.mxu0 %v2093
    %2161 = vmatprep.subr.bf16.mxu0 %v2092
    %2162 = vmatpush1.bf16.msra.mxu0 %v2091
    %2163 = vmatprep.subr.bf16.mxu0 %v2090
    %2164 = vmatpush1.bf16.msra.mxu0 %v2089
    %2165 = vmatprep.subr.bf16.mxu0 %v2088
    %2166 = vmatpush1.bf16.msra.mxu0 %v2087
    %2167 = vmatprep.subr.bf16.mxu0 %v2118
    %2168 = vmatpush2.bf16.msra.mxu0 %v2117
    %2169 = vmatprep.subr.bf16.mxu0 %v2116
    %2170 = vmatpush2.bf16.msra.mxu0 %v2115
    %2171 = vmatprep.subr.bf16.mxu0 %v2114
    %2172 = vmatpush2.bf16.msra.mxu0 %v2113
    %2173 = vmatprep.subr.bf16.mxu0 %v2112
    %2174 = vmatpush2.bf16.msra.mxu0 %v2111
    %2175 = vmatprep.subr.bf16.mxu0 %v2110
    %2176 = vmatpush2.bf16.msra.mxu0 %v2109
    %2177 = vmatprep.subr.bf16.mxu0 %v2108
    %2178 = vmatpush2.bf16.msra.mxu0 %v2107
    %2179 = vmatprep.subr.bf16.mxu0 %v2106
    %2180 = vmatpush2.bf16.msra.mxu0 %v2105
    %2181 = vmatprep.subr.bf16.mxu0 %v2104
    %2182 = vmatpush2.bf16.msra.mxu0 %v2103
    %2183 = vmatprep.mubr.bf16.mxu0 %v1946
    %2184 = vmatmul.mubr.bf16.gmra.mxu0 %v1945
    %v2185 = vpop.f32.mrf.mxu0
    %v2186 = vadd.f32 %v1984, %v2185
    %v2187 = vpop.f32.mrf.mxu0
    %v2188 = vadd.f32 %v1988, %v2187
    %v2189 = vpop.f32.mrf.mxu0
    %v2190 = vpop.f32.mrf.mxu0
    %2191 = vdwg.mxu0
    %v2192 = vmax.f32 %v2186, 0.0
    %v2193 = vmax.f32 %v2188, 0.0
    %v2194 = vpack.c.bf16 %v2192, %v2192
    %v2195 = vpack.c.bf16 %v2193, %v2193
    %v2196 = vld [vmem:[%s13] sm:$0xff]
    %v2197 = vld [vmem:[%s13 + $0x8] sm:$0xff]
    %v2198 = vld [vmem:[%s13 + $0x10] sm:$0xff]
    %v2199 = vld [vmem:[%s13 + $0x18] sm:$0xff]
    %v2200 = vld [vmem:[%s13 + $0x20] sm:$0xff]
    %v2201 = vld [vmem:[%s13 + $0x28] sm:$0xff]
    %v2202 = vld [vmem:[%s13 + $0x30] sm:$0xff]
    %v2203 = vld [vmem:[%s13 + $0x38] sm:$0xff]
    %v2204 = vld [vmem:[%s13 + $0x40] sm:$0xff]
    %v2205 = vld [vmem:[%s13 + $0x48] sm:$0xff]
    %v2206 = vld [vmem:[%s13 + $0x50] sm:$0xff]
    %v2207 = vld [vmem:[%s13 + $0x58] sm:$0xff]
    %v2208 = vld [vmem:[%s13 + $0x60] sm:$0xff]
    %v2209 = vld [vmem:[%s13 + $0x68] sm:$0xff]
    %v2210 = vld [vmem:[%s13 + $0x70] sm:$0xff]
    %v2211 = vld [vmem:[%s13 + $0x78] sm:$0xff]
    %v2212 = vld [vmem:[%s13 + $0x80] sm:$0xff]
    %v2213 = vld [vmem:[%s13 + $0x88] sm:$0xff]
    %v2214 = vld [vmem:[%s13 + $0x90] sm:$0xff]
    %v2215 = vld [vmem:[%s13 + $0x98] sm:$0xff]
    %v2216 = vld [vmem:[%s13 + $0xa0] sm:$0xff]
    %v2217 = vld [vmem:[%s13 + $0xa8] sm:$0xff]
    %v2218 = vld [vmem:[%s13 + $0xb0] sm:$0xff]
    %v2219 = vld [vmem:[%s13 + $0xb8] sm:$0xff]
    %v2220 = vld [vmem:[%s13 + $0xc0] sm:$0xff]
    %v2221 = vld [vmem:[%s13 + $0xc8] sm:$0xff]
    %v2222 = vld [vmem:[%s13 + $0xd0] sm:$0xff]
    %v2223 = vld [vmem:[%s13 + $0xd8] sm:$0xff]
    %v2224 = vld [vmem:[%s13 + $0xe0] sm:$0xff]
    %v2225 = vld [vmem:[%s13 + $0xe8] sm:$0xff]
    %v2226 = vld [vmem:[%s13 + $0xf0] sm:$0xff]
    %v2227 = vld [vmem:[%s13 + $0xf8] sm:$0xff]
    %v2228 = vld [vmem:[%s13 + $0x100] sm:$0xff]
    %v2229 = vld [vmem:[%s13 + $0x108] sm:$0xff]
    %v2230 = vld [vmem:[%s13 + $0x110] sm:$0xff]
    %v2231 = vld [vmem:[%s13 + $0x118] sm:$0xff]
    %v2232 = vld [vmem:[%s13 + $0x120] sm:$0xff]
    %v2233 = vld [vmem:[%s13 + $0x128] sm:$0xff]
    %v2234 = vld [vmem:[%s13 + $0x130] sm:$0xff]
    %v2235 = vld [vmem:[%s13 + $0x138] sm:$0xff]
    %v2236 = vld [vmem:[%s13 + $0x140] sm:$0xff]
    %v2237 = vld [vmem:[%s13 + $0x148] sm:$0xff]
    %v2238 = vld [vmem:[%s13 + $0x150] sm:$0xff]
    %v2239 = vld [vmem:[%s13 + $0x158] sm:$0xff]
    %v2240 = vld [vmem:[%s13 + $0x160] sm:$0xff]
    %v2241 = vld [vmem:[%s13 + $0x168] sm:$0xff]
    %v2242 = vld [vmem:[%s13 + $0x170] sm:$0xff]
    %v2243 = vld [vmem:[%s13 + $0x178] sm:$0xff]
    %v2244 = vld [vmem:[%s13 + $0x180] sm:$0xff]
    %v2245 = vld [vmem:[%s13 + $0x188] sm:$0xff]
    %v2246 = vld [vmem:[%s13 + $0x190] sm:$0xff]
    %v2247 = vld [vmem:[%s13 + $0x198] sm:$0xff]
    %v2248 = vld [vmem:[%s13 + $0x1a0] sm:$0xff]
    %v2249 = vld [vmem:[%s13 + $0x1a8] sm:$0xff]
    %v2250 = vld [vmem:[%s13 + $0x1b0] sm:$0xff]
    %v2251 = vld [vmem:[%s13 + $0x1b8] sm:$0xff]
    %v2252 = vld [vmem:[%s13 + $0x1c0] sm:$0xff]
    %v2253 = vld [vmem:[%s13 + $0x1c8] sm:$0xff]
    %v2254 = vld [vmem:[%s13 + $0x1d0] sm:$0xff]
    %v2255 = vld [vmem:[%s13 + $0x1d8] sm:$0xff]
    %v2256 = vld [vmem:[%s13 + $0x1e0] sm:$0xff]
    %v2257 = vld [vmem:[%s13 + $0x1e8] sm:$0xff]
    %v2258 = vld [vmem:[%s13 + $0x1f0] sm:$0xff]
    %v2259 = vld [vmem:[%s13 + $0x1f8] sm:$0xff]
    %v2260 = vld [vmem:[%s13 + $0x200] sm:$0xff]
    %v2261 = vld [vmem:[%s13 + $0x208] sm:$0xff]
    %v2262 = vld [vmem:[%s13 + $0x210] sm:$0xff]
    %v2263 = vld [vmem:[%s13 + $0x218] sm:$0xff]
    %v2264 = vld [vmem:[%s13 + $0x220] sm:$0xff]
    %v2265 = vld [vmem:[%s13 + $0x228] sm:$0xff]
    %v2266 = vld [vmem:[%s13 + $0x230] sm:$0xff]
    %v2267 = vld [vmem:[%s13 + $0x238] sm:$0xff]
    %v2268 = vld [vmem:[%s13 + $0x240] sm:$0xff]
    %v2269 = vld [vmem:[%s13 + $0x248] sm:$0xff]
    %v2270 = vld [vmem:[%s13 + $0x250] sm:$0xff]
    %v2271 = vld [vmem:[%s13 + $0x258] sm:$0xff]
    %v2272 = vld [vmem:[%s13 + $0x260] sm:$0xff]
    %v2273 = vld [vmem:[%s13 + $0x268] sm:$0xff]
    %v2274 = vld [vmem:[%s13 + $0x270] sm:$0xff]
    %v2275 = vld [vmem:[%s13 + $0x278] sm:$0xff]
    %v2276 = vld [vmem:[%s13 + $0x280] sm:$0xff]
    %v2277 = vld [vmem:[%s13 + $0x288] sm:$0xff]
    %v2278 = vld [vmem:[%s13 + $0x290] sm:$0xff]
    %v2279 = vld [vmem:[%s13 + $0x298] sm:$0xff]
    %v2280 = vld [vmem:[%s13 + $0x2a0] sm:$0xff]
    %v2281 = vld [vmem:[%s13 + $0x2a8] sm:$0xff]
    %v2282 = vld [vmem:[%s13 + $0x2b0] sm:$0xff]
    %v2283 = vld [vmem:[%s13 + $0x2b8] sm:$0xff]
    %v2284 = vld [vmem:[%s13 + $0x2c0] sm:$0xff]
    %v2285 = vld [vmem:[%s13 + $0x2c8] sm:$0xff]
    %v2286 = vld [vmem:[%s13 + $0x2d0] sm:$0xff]
    %v2287 = vld [vmem:[%s13 + $0x2d8] sm:$0xff]
    %v2288 = vld [vmem:[%s13 + $0x2e0] sm:$0xff]
    %v2289 = vld [vmem:[%s13 + $0x2e8] sm:$0xff]
    %v2290 = vld [vmem:[%s13 + $0x2f0] sm:$0xff]
    %v2291 = vld [vmem:[%s13 + $0x2f8] sm:$0xff]
    %v2292 = vld [vmem:[%s13 + $0x300] sm:$0xff]
    %v2293 = vld [vmem:[%s13 + $0x308] sm:$0xff]
    %v2294 = vld [vmem:[%s13 + $0x310] sm:$0xff]
    %v2295 = vld [vmem:[%s13 + $0x318] sm:$0xff]
    %v2296 = vld [vmem:[%s13 + $0x320] sm:$0xff]
    %v2297 = vld [vmem:[%s13 + $0x328] sm:$0xff]
    %v2298 = vld [vmem:[%s13 + $0x330] sm:$0xff]
    %v2299 = vld [vmem:[%s13 + $0x338] sm:$0xff]
    %v2300 = vld [vmem:[%s13 + $0x340] sm:$0xff]
    %v2301 = vld [vmem:[%s13 + $0x348] sm:$0xff]
    %v2302 = vld [vmem:[%s13 + $0x350] sm:$0xff]
    %v2303 = vld [vmem:[%s13 + $0x358] sm:$0xff]
    %v2304 = vld [vmem:[%s13 + $0x360] sm:$0xff]
    %v2305 = vld [vmem:[%s13 + $0x368] sm:$0xff]
    %v2306 = vld [vmem:[%s13 + $0x370] sm:$0xff]
    %v2307 = vld [vmem:[%s13 + $0x378] sm:$0xff]
    %v2308 = vld [vmem:[%s13 + $0x380] sm:$0xff]
    %v2309 = vld [vmem:[%s13 + $0x388] sm:$0xff]
    %v2310 = vld [vmem:[%s13 + $0x390] sm:$0xff]
    %v2311 = vld [vmem:[%s13 + $0x398] sm:$0xff]
    %v2312 = vld [vmem:[%s13 + $0x3a0] sm:$0xff]
    %v2313 = vld [vmem:[%s13 + $0x3a8] sm:$0xff]
    %v2314 = vld [vmem:[%s13 + $0x3b0] sm:$0xff]
    %v2315 = vld [vmem:[%s13 + $0x3b8] sm:$0xff]
    %v2316 = vld [vmem:[%s13 + $0x3c0] sm:$0xff]
    %v2317 = vld [vmem:[%s13 + $0x3c8] sm:$0xff]
    %v2318 = vld [vmem:[%s13 + $0x3d0] sm:$0xff]
    %v2319 = vld [vmem:[%s13 + $0x3d8] sm:$0xff]
    %v2320 = vld [vmem:[%s13 + $0x3e0] sm:$0xff]
    %v2321 = vld [vmem:[%s13 + $0x3e8] sm:$0xff]
    %v2322 = vld [vmem:[%s13 + $0x3f0] sm:$0xff]
    %v2323 = vld [vmem:[%s13 + $0x3f8] sm:$0xff]
    %v2324 = vld [vmem:[%s14] sm:$0xff]
    %v2326 = vlaneseq
    %v2327 = vshrl.u32 %v2326, 7
    %v2328 = vsub.s32 0, %v2327
    %v2329 = vrot.slane %v2324, %v2328
    %v2330 = vlaneseq
    %v2331 = vshrl.u32 %v2330, 7
    %v2332 = vsub.s32 1, %v2331
    %v2333 = vrot.slane %v2324, %v2332
    %v2334 = vlaneseq
    %v2335 = vshrl.u32 %v2334, 7
    %v2336 = vsub.s32 2, %v2335
    %v2337 = vrot.slane %v2324, %v2336
    %v2338 = vlaneseq
    %v2339 = vshrl.u32 %v2338, 7
    %v2340 = vsub.s32 3, %v2339
    %v2341 = vrot.slane %v2324, %v2340
    %v2342 = vlaneseq
    %v2343 = vshrl.u32 %v2342, 7
    %v2344 = vsub.s32 4, %v2343
    %v2345 = vrot.slane %v2324, %v2344
    %v2346 = vlaneseq
    %v2347 = vshrl.u32 %v2346, 7
    %v2348 = vsub.s32 5, %v2347
    %v2349 = vrot.slane %v2324, %v2348
    %v2350 = vlaneseq
    %v2351 = vshrl.u32 %v2350, 7
    %v2352 = vsub.s32 6, %v2351
    %v2353 = vrot.slane %v2324, %v2352
    %v2354 = vlaneseq
    %v2355 = vshrl.u32 %v2354, 7
    %v2356 = vsub.s32 7, %v2355
    %v2357 = vrot.slane %v2324, %v2356
    %v2494 = vunpack.c.l.b16 %v2196
    %v2495 = vunpack.c.h.b16 %v2196
    %v2496 = vunpack.c.l.b16 %v2197
    %v2497 = vunpack.c.h.b16 %v2197
    %v2498 = vunpack.c.l.b16 %v2198
    %v2499 = vunpack.c.h.b16 %v2198
    %v2500 = vunpack.c.l.b16 %v2199
    %v2501 = vunpack.c.h.b16 %v2199
    %v2502 = vunpack.c.l.b16 %v2200
    %v2503 = vunpack.c.h.b16 %v2200
    %v2504 = vunpack.c.l.b16 %v2201
    %v2505 = vunpack.c.h.b16 %v2201
    %v2506 = vunpack.c.l.b16 %v2202
    %v2507 = vunpack.c.h.b16 %v2202
    %v2508 = vunpack.c.l.b16 %v2203
    %v2509 = vunpack.c.h.b16 %v2203
    %v2510 = vunpack.c.l.b16 %v2204
    %v2511 = vunpack.c.h.b16 %v2204
    %v2512 = vunpack.c.l.b16 %v2205
    %v2513 = vunpack.c.h.b16 %v2205
    %v2514 = vunpack.c.l.b16 %v2206
    %v2515 = vunpack.c.h.b16 %v2206
    %v2516 = vunpack.c.l.b16 %v2207
    %v2517 = vunpack.c.h.b16 %v2207
    %v2518 = vunpack.c.l.b16 %v2208
    %v2519 = vunpack.c.h.b16 %v2208
    %v2520 = vunpack.c.l.b16 %v2209
    %v2521 = vunpack.c.h.b16 %v2209
    %v2522 = vunpack.c.l.b16 %v2210
    %v2523 = vunpack.c.h.b16 %v2210
    %v2524 = vunpack.c.l.b16 %v2211
    %v2525 = vunpack.c.h.b16 %v2211
    %v2526 = vunpack.c.l.b16 %v2212
    %v2527 = vunpack.c.h.b16 %v2212
    %v2528 = vunpack.c.l.b16 %v2213
    %v2529 = vunpack.c.h.b16 %v2213
    %v2530 = vunpack.c.l.b16 %v2214
    %v2531 = vunpack.c.h.b16 %v2214
    %v2532 = vunpack.c.l.b16 %v2215
    %v2533 = vunpack.c.h.b16 %v2215
    %v2534 = vunpack.c.l.b16 %v2216
    %v2535 = vunpack.c.h.b16 %v2216
    %v2536 = vunpack.c.l.b16 %v2217
    %v2537 = vunpack.c.h.b16 %v2217
    %v2538 = vunpack.c.l.b16 %v2218
    %v2539 = vunpack.c.h.b16 %v2218
    %v2540 = vunpack.c.l.b16 %v2219
    %v2541 = vunpack.c.h.b16 %v2219
    %v2542 = vunpack.c.l.b16 %v2220
    %v2543 = vunpack.c.h.b16 %v2220
    %v2544 = vunpack.c.l.b16 %v2221
    %v2545 = vunpack.c.h.b16 %v2221
    %v2546 = vunpack.c.l.b16 %v2222
    %v2547 = vunpack.c.h.b16 %v2222
    %v2548 = vunpack.c.l.b16 %v2223
    %v2549 = vunpack.c.h.b16 %v2223
    %v2550 = vunpack.c.l.b16 %v2224
    %v2551 = vunpack.c.h.b16 %v2224
    %v2552 = vunpack.c.l.b16 %v2225
    %v2553 = vunpack.c.h.b16 %v2225
    %v2554 = vunpack.c.l.b16 %v2226
    %v2555 = vunpack.c.h.b16 %v2226
    %v2556 = vunpack.c.l.b16 %v2227
    %v2557 = vunpack.c.h.b16 %v2227
    %v2558 = vunpack.c.l.b16 %v2228
    %v2559 = vunpack.c.h.b16 %v2228
    %v2560 = vunpack.c.l.b16 %v2229
    %v2561 = vunpack.c.h.b16 %v2229
    %v2562 = vunpack.c.l.b16 %v2230
    %v2563 = vunpack.c.h.b16 %v2230
    %v2564 = vunpack.c.l.b16 %v2231
    %v2565 = vunpack.c.h.b16 %v2231
    %v2566 = vunpack.c.l.b16 %v2232
    %v2567 = vunpack.c.h.b16 %v2232
    %v2568 = vunpack.c.l.b16 %v2233
    %v2569 = vunpack.c.h.b16 %v2233
    %v2570 = vunpack.c.l.b16 %v2234
    %v2571 = vunpack.c.h.b16 %v2234
    %v2572 = vunpack.c.l.b16 %v2235
    %v2573 = vunpack.c.h.b16 %v2235
    %v2574 = vunpack.c.l.b16 %v2236
    %v2575 = vunpack.c.h.b16 %v2236
    %v2576 = vunpack.c.l.b16 %v2237
    %v2577 = vunpack.c.h.b16 %v2237
    %v2578 = vunpack.c.l.b16 %v2238
    %v2579 = vunpack.c.h.b16 %v2238
    %v2580 = vunpack.c.l.b16 %v2239
    %v2581 = vunpack.c.h.b16 %v2239
    %v2582 = vunpack.c.l.b16 %v2240
    %v2583 = vunpack.c.h.b16 %v2240
    %v2584 = vunpack.c.l.b16 %v2241
    %v2585 = vunpack.c.h.b16 %v2241
    %v2586 = vunpack.c.l.b16 %v2242
    %v2587 = vunpack.c.h.b16 %v2242
    %v2588 = vunpack.c.l.b16 %v2243
    %v2589 = vunpack.c.h.b16 %v2243
    %v2590 = vunpack.c.l.b16 %v2244
    %v2591 = vunpack.c.h.b16 %v2244
    %v2592 = vunpack.c.l.b16 %v2245
    %v2593 = vunpack.c.h.b16 %v2245
    %v2594 = vunpack.c.l.b16 %v2246
    %v2595 = vunpack.c.h.b16 %v2246
    %v2596 = vunpack.c.l.b16 %v2247
    %v2597 = vunpack.c.h.b16 %v2247
    %v2598 = vunpack.c.l.b16 %v2248
    %v2599 = vunpack.c.h.b16 %v2248
    %v2600 = vunpack.c.l.b16 %v2249
    %v2601 = vunpack.c.h.b16 %v2249
    %v2602 = vunpack.c.l.b16 %v2250
    %v2603 = vunpack.c.h.b16 %v2250
    %v2604 = vunpack.c.l.b16 %v2251
    %v2605 = vunpack.c.h.b16 %v2251
    %v2606 = vunpack.c.l.b16 %v2252
    %v2607 = vunpack.c.h.b16 %v2252
    %v2608 = vunpack.c.l.b16 %v2253
    %v2609 = vunpack.c.h.b16 %v2253
    %v2610 = vunpack.c.l.b16 %v2254
    %v2611 = vunpack.c.h.b16 %v2254
    %v2612 = vunpack.c.l.b16 %v2255
    %v2613 = vunpack.c.h.b16 %v2255
    %v2614 = vunpack.c.l.b16 %v2256
    %v2615 = vunpack.c.h.b16 %v2256
    %v2616 = vunpack.c.l.b16 %v2257
    %v2617 = vunpack.c.h.b16 %v2257
    %v2618 = vunpack.c.l.b16 %v2258
    %v2619 = vunpack.c.h.b16 %v2258
    %v2620 = vunpack.c.l.b16 %v2259
    %v2621 = vunpack.c.h.b16 %v2259
    %v2622 = vunpack.c.l.b16 %v2260
    %v2623 = vunpack.c.h.b16 %v2260
    %v2624 = vunpack.c.l.b16 %v2261
    %v2625 = vunpack.c.h.b16 %v2261
    %v2626 = vunpack.c.l.b16 %v2262
    %v2627 = vunpack.c.h.b16 %v2262
    %v2628 = vunpack.c.l.b16 %v2263
    %v2629 = vunpack.c.h.b16 %v2263
    %v2630 = vunpack.c.l.b16 %v2264
    %v2631 = vunpack.c.h.b16 %v2264
    %v2632 = vunpack.c.l.b16 %v2265
    %v2633 = vunpack.c.h.b16 %v2265
    %v2634 = vunpack.c.l.b16 %v2266
    %v2635 = vunpack.c.h.b16 %v2266
    %v2636 = vunpack.c.l.b16 %v2267
    %v2637 = vunpack.c.h.b16 %v2267
    %v2638 = vunpack.c.l.b16 %v2268
    %v2639 = vunpack.c.h.b16 %v2268
    %v2640 = vunpack.c.l.b16 %v2269
    %v2641 = vunpack.c.h.b16 %v2269
    %v2642 = vunpack.c.l.b16 %v2270
    %v2643 = vunpack.c.h.b16 %v2270
    %v2644 = vunpack.c.l.b16 %v2271
    %v2645 = vunpack.c.h.b16 %v2271
    %v2646 = vunpack.c.l.b16 %v2272
    %v2647 = vunpack.c.h.b16 %v2272
    %v2648 = vunpack.c.l.b16 %v2273
    %v2649 = vunpack.c.h.b16 %v2273
    %v2650 = vunpack.c.l.b16 %v2274
    %v2651 = vunpack.c.h.b16 %v2274
    %v2652 = vunpack.c.l.b16 %v2275
    %v2653 = vunpack.c.h.b16 %v2275
    %v2654 = vunpack.c.l.b16 %v2276
    %v2655 = vunpack.c.h.b16 %v2276
    %v2656 = vunpack.c.l.b16 %v2277
    %v2657 = vunpack.c.h.b16 %v2277
    %v2658 = vunpack.c.l.b16 %v2278
    %v2659 = vunpack.c.h.b16 %v2278
    %v2660 = vunpack.c.l.b16 %v2279
    %v2661 = vunpack.c.h.b16 %v2279
    %v2662 = vunpack.c.l.b16 %v2280
    %v2663 = vunpack.c.h.b16 %v2280
    %v2664 = vunpack.c.l.b16 %v2281
    %v2665 = vunpack.c.h.b16 %v2281
    %v2666 = vunpack.c.l.b16 %v2282
    %v2667 = vunpack.c.h.b16 %v2282
    %v2668 = vunpack.c.l.b16 %v2283
    %v2669 = vunpack.c.h.b16 %v2283
    %v2670 = vunpack.c.l.b16 %v2284
    %v2671 = vunpack.c.h.b16 %v2284
    %v2672 = vunpack.c.l.b16 %v2285
    %v2673 = vunpack.c.h.b16 %v2285
    %v2674 = vunpack.c.l.b16 %v2286
    %v2675 = vunpack.c.h.b16 %v2286
    %v2676 = vunpack.c.l.b16 %v2287
    %v2677 = vunpack.c.h.b16 %v2287
    %v2678 = vunpack.c.l.b16 %v2288
    %v2679 = vunpack.c.h.b16 %v2288
    %v2680 = vunpack.c.l.b16 %v2289
    %v2681 = vunpack.c.h.b16 %v2289
    %v2682 = vunpack.c.l.b16 %v2290
    %v2683 = vunpack.c.h.b16 %v2290
    %v2684 = vunpack.c.l.b16 %v2291
    %v2685 = vunpack.c.h.b16 %v2291
    %v2686 = vunpack.c.l.b16 %v2292
    %v2687 = vunpack.c.h.b16 %v2292
    %v2688 = vunpack.c.l.b16 %v2293
    %v2689 = vunpack.c.h.b16 %v2293
    %v2690 = vunpack.c.l.b16 %v2294
    %v2691 = vunpack.c.h.b16 %v2294
    %v2692 = vunpack.c.l.b16 %v2295
    %v2693 = vunpack.c.h.b16 %v2295
    %v2694 = vunpack.c.l.b16 %v2296
    %v2695 = vunpack.c.h.b16 %v2296
    %v2696 = vunpack.c.l.b16 %v2297
    %v2697 = vunpack.c.h.b16 %v2297
    %v2698 = vunpack.c.l.b16 %v2298
    %v2699 = vunpack.c.h.b16 %v2298
    %v2700 = vunpack.c.l.b16 %v2299
    %v2701 = vunpack.c.h.b16 %v2299
    %v2702 = vunpack.c.l.b16 %v2300
    %v2703 = vunpack.c.h.b16 %v2300
    %v2704 = vunpack.c.l.b16 %v2301
    %v2705 = vunpack.c.h.b16 %v2301
    %v2706 = vunpack.c.l.b16 %v2302
    %v2707 = vunpack.c.h.b16 %v2302
    %v2708 = vunpack.c.l.b16 %v2303
    %v2709 = vunpack.c.h.b16 %v2303
    %v2710 = vunpack.c.l.b16 %v2304
    %v2711 = vunpack.c.h.b16 %v2304
    %v2712 = vunpack.c.l.b16 %v2305
    %v2713 = vunpack.c.h.b16 %v2305
    %v2714 = vunpack.c.l.b16 %v2306
    %v2715 = vunpack.c.h.b16 %v2306
    %v2716 = vunpack.c.l.b16 %v2307
    %v2717 = vunpack.c.h.b16 %v2307
    %v2718 = vunpack.c.l.b16 %v2308
    %v2719 = vunpack.c.h.b16 %v2308
    %v2720 = vunpack.c.l.b16 %v2309
    %v2721 = vunpack.c.h.b16 %v2309
    %v2722 = vunpack.c.l.b16 %v2310
    %v2723 = vunpack.c.h.b16 %v2310
    %v2724 = vunpack.c.l.b16 %v2311
    %v2725 = vunpack.c.h.b16 %v2311
    %v2726 = vunpack.c.l.b16 %v2312
    %v2727 = vunpack.c.h.b16 %v2312
    %v2728 = vunpack.c.l.b16 %v2313
    %v2729 = vunpack.c.h.b16 %v2313
    %v2730 = vunpack.c.l.b16 %v2314
    %v2731 = vunpack.c.h.b16 %v2314
    %v2732 = vunpack.c.l.b16 %v2315
    %v2733 = vunpack.c.h.b16 %v2315
    %v2734 = vunpack.c.l.b16 %v2316
    %v2735 = vunpack.c.h.b16 %v2316
    %v2736 = vunpack.c.l.b16 %v2317
    %v2737 = vunpack.c.h.b16 %v2317
    %v2738 = vunpack.c.l.b16 %v2318
    %v2739 = vunpack.c.h.b16 %v2318
    %v2740 = vunpack.c.l.b16 %v2319
    %v2741 = vunpack.c.h.b16 %v2319
    %v2742 = vunpack.c.l.b16 %v2320
    %v2743 = vunpack.c.h.b16 %v2320
    %v2744 = vunpack.c.l.b16 %v2321
    %v2745 = vunpack.c.h.b16 %v2321
    %v2746 = vunpack.c.l.b16 %v2322
    %v2747 = vunpack.c.h.b16 %v2322
    %v2748 = vunpack.c.l.b16 %v2323
    %v2749 = vunpack.c.h.b16 %v2323
    %v2750 = vpack.c.b16 %v2502, %v2494
    %v2751 = vpack.c.b16 %v2503, %v2495
    %v2752 = vpack.c.b16 %v2504, %v2496
    %v2753 = vpack.c.b16 %v2505, %v2497
    %v2754 = vpack.c.b16 %v2506, %v2498
    %v2755 = vpack.c.b16 %v2507, %v2499
    %v2756 = vpack.c.b16 %v2508, %v2500
    %v2757 = vpack.c.b16 %v2509, %v2501
    %v2758 = vpack.c.b16 %v2518, %v2510
    %v2759 = vpack.c.b16 %v2519, %v2511
    %v2760 = vpack.c.b16 %v2520, %v2512
    %v2761 = vpack.c.b16 %v2521, %v2513
    %v2762 = vpack.c.b16 %v2522, %v2514
    %v2763 = vpack.c.b16 %v2523, %v2515
    %v2764 = vpack.c.b16 %v2524, %v2516
    %v2765 = vpack.c.b16 %v2525, %v2517
    %v2766 = vpack.c.b16 %v2534, %v2526
    %v2767 = vpack.c.b16 %v2535, %v2527
    %v2768 = vpack.c.b16 %v2536, %v2528
    %v2769 = vpack.c.b16 %v2537, %v2529
    %v2770 = vpack.c.b16 %v2538, %v2530
    %v2771 = vpack.c.b16 %v2539, %v2531
    %v2772 = vpack.c.b16 %v2540, %v2532
    %v2773 = vpack.c.b16 %v2541, %v2533
    %v2774 = vpack.c.b16 %v2550, %v2542
    %v2775 = vpack.c.b16 %v2551, %v2543
    %v2776 = vpack.c.b16 %v2552, %v2544
    %v2777 = vpack.c.b16 %v2553, %v2545
    %v2778 = vpack.c.b16 %v2554, %v2546
    %v2779 = vpack.c.b16 %v2555, %v2547
    %v2780 = vpack.c.b16 %v2556, %v2548
    %v2781 = vpack.c.b16 %v2557, %v2549
    %v2782 = vpack.c.b16 %v2566, %v2558
    %v2783 = vpack.c.b16 %v2567, %v2559
    %v2784 = vpack.c.b16 %v2568, %v2560
    %v2785 = vpack.c.b16 %v2569, %v2561
    %v2786 = vpack.c.b16 %v2570, %v2562
    %v2787 = vpack.c.b16 %v2571, %v2563
    %v2788 = vpack.c.b16 %v2572, %v2564
    %v2789 = vpack.c.b16 %v2573, %v2565
    %v2790 = vpack.c.b16 %v2582, %v2574
    %v2791 = vpack.c.b16 %v2583, %v2575
    %v2792 = vpack.c.b16 %v2584, %v2576
    %v2793 = vpack.c.b16 %v2585, %v2577
    %v2794 = vpack.c.b16 %v2586, %v2578
    %v2795 = vpack.c.b16 %v2587, %v2579
    %v2796 = vpack.c.b16 %v2588, %v2580
    %v2797 = vpack.c.b16 %v2589, %v2581
    %v2798 = vpack.c.b16 %v2598, %v2590
    %v2799 = vpack.c.b16 %v2599, %v2591
    %v2800 = vpack.c.b16 %v2600, %v2592
    %v2801 = vpack.c.b16 %v2601, %v2593
    %v2802 = vpack.c.b16 %v2602, %v2594
    %v2803 = vpack.c.b16 %v2603, %v2595
    %v2804 = vpack.c.b16 %v2604, %v2596
    %v2805 = vpack.c.b16 %v2605, %v2597
    %v2806 = vpack.c.b16 %v2614, %v2606
    %v2807 = vpack.c.b16 %v2615, %v2607
    %v2808 = vpack.c.b16 %v2616, %v2608
    %v2809 = vpack.c.b16 %v2617, %v2609
    %v2810 = vpack.c.b16 %v2618, %v2610
    %v2811 = vpack.c.b16 %v2619, %v2611
    %v2812 = vpack.c.b16 %v2620, %v2612
    %v2813 = vpack.c.b16 %v2621, %v2613
    %v2814 = vpack.c.b16 %v2630, %v2622
    %v2815 = vpack.c.b16 %v2631, %v2623
    %v2816 = vpack.c.b16 %v2632, %v2624
    %v2817 = vpack.c.b16 %v2633, %v2625
    %v2818 = vpack.c.b16 %v2634, %v2626
    %v2819 = vpack.c.b16 %v2635, %v2627
    %v2820 = vpack.c.b16 %v2636, %v2628
    %v2821 = vpack.c.b16 %v2637, %v2629
    %v2822 = vpack.c.b16 %v2646, %v2638
    %v2823 = vpack.c.b16 %v2647, %v2639
    %v2824 = vpack.c.b16 %v2648, %v2640
    %v2825 = vpack.c.b16 %v2649, %v2641
    %v2826 = vpack.c.b16 %v2650, %v2642
    %v2827 = vpack.c.b16 %v2651, %v2643
    %v2828 = vpack.c.b16 %v2652, %v2644
    %v2829 = vpack.c.b16 %v2653, %v2645
    %v2830 = vpack.c.b16 %v2662, %v2654
    %v2831 = vpack.c.b16 %v2663, %v2655
    %v2832 = vpack.c.b16 %v2664, %v2656
    %v2833 = vpack.c.b16 %v2665, %v2657
    %v2834 = vpack.c.b16 %v2666, %v2658
    %v2835 = vpack.c.b16 %v2667, %v2659
    %v2836 = vpack.c.b16 %v2668, %v2660
    %v2837 = vpack.c.b16 %v2669, %v2661
    %v2838 = vpack.c.b16 %v2678, %v2670
    %v2839 = vpack.c.b16 %v2679, %v2671
    %v2840 = vpack.c.b16 %v2680, %v2672
    %v2841 = vpack.c.b16 %v2681, %v2673
    %v2842 = vpack.c.b16 %v2682, %v2674
    %v2843 = vpack.c.b16 %v2683, %v2675
    %v2844 = vpack.c.b16 %v2684, %v2676
    %v2845 = vpack.c.b16 %v2685, %v2677
    %v2846 = vpack.c.b16 %v2694, %v2686
    %v2847 = vpack.c.b16 %v2695, %v2687
    %v2848 = vpack.c.b16 %v2696, %v2688
    %v2849 = vpack.c.b16 %v2697, %v2689
    %v2850 = vpack.c.b16 %v2698, %v2690
    %v2851 = vpack.c.b16 %v2699, %v2691
    %v2852 = vpack.c.b16 %v2700, %v2692
    %v2853 = vpack.c.b16 %v2701, %v2693
    %v2854 = vpack.c.b16 %v2710, %v2702
    %v2855 = vpack.c.b16 %v2711, %v2703
    %v2856 = vpack.c.b16 %v2712, %v2704
    %v2857 = vpack.c.b16 %v2713, %v2705
    %v2858 = vpack.c.b16 %v2714, %v2706
    %v2859 = vpack.c.b16 %v2715, %v2707
    %v2860 = vpack.c.b16 %v2716, %v2708
    %v2861 = vpack.c.b16 %v2717, %v2709
    %v2862 = vpack.c.b16 %v2726, %v2718
    %v2863 = vpack.c.b16 %v2727, %v2719
    %v2864 = vpack.c.b16 %v2728, %v2720
    %v2865 = vpack.c.b16 %v2729, %v2721
    %v2866 = vpack.c.b16 %v2730, %v2722
    %v2867 = vpack.c.b16 %v2731, %v2723
    %v2868 = vpack.c.b16 %v2732, %v2724
    %v2869 = vpack.c.b16 %v2733, %v2725
    %v2870 = vpack.c.b16 %v2742, %v2734
    %v2871 = vpack.c.b16 %v2743, %v2735
    %v2872 = vpack.c.b16 %v2744, %v2736
    %v2873 = vpack.c.b16 %v2745, %v2737
    %v2874 = vpack.c.b16 %v2746, %v2738
    %v2875 = vpack.c.b16 %v2747, %v2739
    %v2876 = vpack.c.b16 %v2748, %v2740
    %v2877 = vpack.c.b16 %v2749, %v2741
    %3006 = vmatprep.subr.bf16.mxu0 %v2807
    %3007 = vmatpush1.bf16.msra.mxu0 %v2806
    %3008 = vmatprep.subr.bf16.mxu0 %v2799
    %3009 = vmatpush1.bf16.msra.mxu0 %v2798
    %3010 = vmatprep.subr.bf16.mxu0 %v2791
    %3011 = vmatpush1.bf16.msra.mxu0 %v2790
    %3012 = vmatprep.subr.bf16.mxu0 %v2783
    %3013 = vmatpush1.bf16.msra.mxu0 %v2782
    %3014 = vmatprep.subr.bf16.mxu0 %v2775
    %3015 = vmatpush1.bf16.msra.mxu0 %v2774
    %3016 = vmatprep.subr.bf16.mxu0 %v2767
    %3017 = vmatpush1.bf16.msra.mxu0 %v2766
    %3018 = vmatprep.subr.bf16.mxu0 %v2759
    %3019 = vmatpush1.bf16.msra.mxu0 %v2758
    %3020 = vmatprep.subr.bf16.mxu0 %v2751
    %3021 = vmatpush1.bf16.msra.mxu0 %v2750
    %3022 = vmatprep.subr.bf16.mxu0 %v2871
    %3023 = vmatpush2.bf16.msra.mxu0 %v2870
    %3024 = vmatprep.subr.bf16.mxu0 %v2863
    %3025 = vmatpush2.bf16.msra.mxu0 %v2862
    %3026 = vmatprep.subr.bf16.mxu0 %v2855
    %3027 = vmatpush2.bf16.msra.mxu0 %v2854
    %3028 = vmatprep.subr.bf16.mxu0 %v2847
    %3029 = vmatpush2.bf16.msra.mxu0 %v2846
    %3030 = vmatprep.subr.bf16.mxu0 %v2839
    %3031 = vmatpush2.bf16.msra.mxu0 %v2838
    %3032 = vmatprep.subr.bf16.mxu0 %v2831
    %3033 = vmatpush2.bf16.msra.mxu0 %v2830
    %3034 = vmatprep.subr.bf16.mxu0 %v2823
    %3035 = vmatpush2.bf16.msra.mxu0 %v2822
    %3036 = vmatprep.subr.bf16.mxu0 %v2815
    %3037 = vmatpush2.bf16.msra.mxu0 %v2814
    %3038 = vmatprep.mubr.bf16.mxu0 %v2195
    %3039 = vmatmul.mubr.bf16.gmra.mxu0 %v2194
    %v3040 = vpop.f32.mrf.mxu0
    %v3041 = vadd.f32 %v2329, %v3040
    %v3042 = vpop.f32.mrf.mxu0
    %v3043 = vadd.f32 %v2333, %v3042
    %v3044 = vpop.f32.mrf.mxu0
    %v3045 = vpop.f32.mrf.mxu0
    %3046 = vdwg.mxu0
    %3047 = vmatprep.subr.bf16.mxu0 %v2809
    %3048 = vmatpush1.bf16.msra.mxu0 %v2808
    %3049 = vmatprep.subr.bf16.mxu0 %v2801
    %3050 = vmatpush1.bf16.msra.mxu0 %v2800
    %3051 = vmatprep.subr.bf16.mxu0 %v2793
    %3052 = vmatpush1.bf16.msra.mxu0 %v2792
    %3053 = vmatprep.subr.bf16.mxu0 %v2785
    %3054 = vmatpush1.bf16.msra.mxu0 %v2784
    %3055 = vmatprep.subr.bf16.mxu0 %v2777
    %3056 = vmatpush1.bf16.msra.mxu0 %v2776
    %3057 = vmatprep.subr.bf16.mxu0 %v2769
    %3058 = vmatpush1.bf16.msra.mxu0 %v2768
    %3059 = vmatprep.subr.bf16.mxu0 %v2761
    %3060 = vmatpush1.bf16.msra.mxu0 %v2760
    %3061 = vmatprep.subr.bf16.mxu0 %v2753
    %3062 = vmatpush1.bf16.msra.mxu0 %v2752
    %3063 = vmatprep.subr.bf16.mxu0 %v2873
    %3064 = vmatpush2.bf16.msra.mxu0 %v2872
    %3065 = vmatprep.subr.bf16.mxu0 %v2865
    %3066 = vmatpush2.bf16.msra.mxu0 %v2864
    %3067 = vmatprep.subr.bf16.mxu0 %v2857
    %3068 = vmatpush2.bf16.msra.mxu0 %v2856
    %3069 = vmatprep.subr.bf16.mxu0 %v2849
    %3070 = vmatpush2.bf16.msra.mxu0 %v2848
    %3071 = vmatprep.subr.bf16.mxu0 %v2841
    %3072 = vmatpush2.bf16.msra.mxu0 %v2840
    %3073 = vmatprep.subr.bf16.mxu0 %v2833
    %3074 = vmatpush2.bf16.msra.mxu0 %v2832
    %3075 = vmatprep.subr.bf16.mxu0 %v2825
    %3076 = vmatpush2.bf16.msra.mxu0 %v2824
    %3077 = vmatprep.subr.bf16.mxu0 %v2817
    %3078 = vmatpush2.bf16.msra.mxu0 %v2816
    %3079 = vmatprep.mubr.bf16.mxu0 %v2195
    %3080 = vmatmul.mubr.bf16.gmra.mxu0 %v2194
    %v3081 = vpop.f32.mrf.mxu0
    %v3082 = vadd.f32 %v2337, %v3081
    %v3083 = vpop.f32.mrf.mxu0
    %v3084 = vadd.f32 %v2341, %v3083
    %v3085 = vpop.f32.mrf.mxu0
    %v3086 = vpop.f32.mrf.mxu0
    %3087 = vdwg.mxu0
    %3088 = vmatprep.subr.bf16.mxu0 %v2811
    %3089 = vmatpush1.bf16.msra.mxu0 %v2810
    %3090 = vmatprep.subr.bf16.mxu0 %v2803
    %3091 = vmatpush1.bf16.msra.mxu0 %v2802
    %3092 = vmatprep.subr.bf16.mxu0 %v2795
    %3093 = vmatpush1.bf16.msra.mxu0 %v2794
    %3094 = vmatprep.subr.bf16.mxu0 %v2787
    %3095 = vmatpush1.bf16.msra.mxu0 %v2786
    %3096 = vmatprep.subr.bf16.mxu0 %v2779
    %3097 = vmatpush1.bf16.msra.mxu0 %v2778
    %3098 = vmatprep.subr.bf16.mxu0 %v2771
    %3099 = vmatpush1.bf16.msra.mxu0 %v2770
    %3100 = vmatprep.subr.bf16.mxu0 %v2763
    %3101 = vmatpush1.bf16.msra.mxu0 %v2762
    %3102 = vmatprep.subr.bf16.mxu0 %v2755
    %3103 = vmatpush1.bf16.msra.mxu0 %v2754
    %3104 = vmatprep.subr.bf16.mxu0 %v2875
    %3105 = vmatpush2.bf16.msra.mxu0 %v2874
    %3106 = vmatprep.subr.bf16.mxu0 %v2867
    %3107 = vmatpush2.bf16.msra.mxu0 %v2866
    %3108 = vmatprep.subr.bf16.mxu0 %v2859
    %3109 = vmatpush2.bf16.msra.mxu0 %v2858
    %3110 = vmatprep.subr.bf16.mxu0 %v2851
    %3111 = vmatpush2.bf16.msra.mxu0 %v2850
    %3112 = vmatprep.subr.bf16.mxu0 %v2843
    %3113 = vmatpush2.bf16.msra.mxu0 %v2842
    %3114 = vmatprep.subr.bf16.mxu0 %v2835
    %3115 = vmatpush2.bf16.msra.mxu0 %v2834
    %3116 = vmatprep.subr.bf16.mxu0 %v2827
    %3117 = vmatpush2.bf16.msra.mxu0 %v2826
    %3118 = vmatprep.subr.bf16.mxu0 %v2819
    %3119 = vmatpush2.bf16.msra.mxu0 %v2818
    %3120 = vmatprep.mubr.bf16.mxu0 %v2195
    %3121 = vmatmul.mubr.bf16.gmra.mxu0 %v2194
    %v3122 = vpop.f32.mrf.mxu0
    %v3123 = vadd.f32 %v2345, %v3122
    %v3124 = vpop.f32.mrf.mxu0
    %v3125 = vadd.f32 %v2349, %v3124
    %v3126 = vpop.f32.mrf.mxu0
    %v3127 = vpop.f32.mrf.mxu0
    %3128 = vdwg.mxu0
    %3129 = vmatprep.subr.bf16.mxu0 %v2813
    %3130 = vmatpush1.bf16.msra.mxu0 %v2812
    %3131 = vmatprep.subr.bf16.mxu0 %v2805
    %3132 = vmatpush1.bf16.msra.mxu0 %v2804
    %3133 = vmatprep.subr.bf16.mxu0 %v2797
    %3134 = vmatpush1.bf16.msra.mxu0 %v2796
    %3135 = vmatprep.subr.bf16.mxu0 %v2789
    %3136 = vmatpush1.bf16.msra.mxu0 %v2788
    %3137 = vmatprep.subr.bf16.mxu0 %v2781
    %3138 = vmatpush1.bf16.msra.mxu0 %v2780
    %3139 = vmatprep.subr.bf16.mxu0 %v2773
    %3140 = vmatpush1.bf16.msra.mxu0 %v2772
    %3141 = vmatprep.subr.bf16.mxu0 %v2765
    %3142 = vmatpush1.bf16.msra.mxu0 %v2764
    %3143 = vmatprep.subr.bf16.mxu0 %v2757
    %3144 = vmatpush1.bf16.msra.mxu0 %v2756
    %3145 = vmatprep.subr.bf16.mxu0 %v2877
    %3146 = vmatpush2.bf16.msra.mxu0 %v2876
    %3147 = vmatprep.subr.bf16.mxu0 %v2869
    %3148 = vmatpush2.bf16.msra.mxu0 %v2868
    %3149 = vmatprep.subr.bf16.mxu0 %v2861
    %3150 = vmatpush2.bf16.msra.mxu0 %v2860
    %3151 = vmatprep.subr.bf16.mxu0 %v2853
    %3152 = vmatpush2.bf16.msra.mxu0 %v2852
    %3153 = vmatprep.subr.bf16.mxu0 %v2845
    %3154 = vmatpush2.bf16.msra.mxu0 %v2844
    %3155 = vmatprep.subr.bf16.mxu0 %v2837
    %3156 = vmatpush2.bf16.msra.mxu0 %v2836
    %3157 = vmatprep.subr.bf16.mxu0 %v2829
    %3158 = vmatpush2.bf16.msra.mxu0 %v2828
    %3159 = vmatprep.subr.bf16.mxu0 %v2821
    %3160 = vmatpush2.bf16.msra.mxu0 %v2820
    %3161 = vmatprep.mubr.bf16.mxu0 %v2195
    %3162 = vmatmul.mubr.bf16.gmra.mxu0 %v2194
    %v3163 = vpop.f32.mrf.mxu0
    %v3164 = vadd.f32 %v2353, %v3163
    %v3165 = vpop.f32.mrf.mxu0
    %v3166 = vadd.f32 %v2357, %v3165
    %v3167 = vpop.f32.mrf.mxu0
    %v3168 = vpop.f32.mrf.mxu0
    %3169 = vdwg.mxu0
    %v3170 = vxor.u32 %v3041, 2147483648
    %v3171 = vxor.u32 %v3043, 2147483648
    %v3172 = vxor.u32 %v3082, 2147483648
    %v3173 = vxor.u32 %v3084, 2147483648
    %v3174 = vxor.u32 %v3123, 2147483648
    %v3175 = vxor.u32 %v3125, 2147483648
    %v3176 = vxor.u32 %v3164, 2147483648
    %v3177 = vxor.u32 %v3166, 2147483648
    %v3178 = vmul.f32 %v3170, 1.442695
    %v3179 = vpow.pop %v3178
    %v3180 = vmul.f32 %v3171, 1.442695
    %v3181 = vpow.pop %v3180
    %v3182 = vmul.f32 %v3172, 1.442695
    %v3183 = vpow.pop %v3182
    %v3184 = vmul.f32 %v3173, 1.442695
    %v3185 = vpow.pop %v3184
    %v3186 = vmul.f32 %v3174, 1.442695
    %v3187 = vpow.pop %v3186
    %v3188 = vmul.f32 %v3175, 1.442695
    %v3189 = vpow.pop %v3188
    %v3190 = vmul.f32 %v3176, 1.442695
    %v3191 = vpow.pop %v3190
    %v3192 = vmul.f32 %v3177, 1.442695
    %v3193 = vpow.pop %v3192
    %v3194 = vadd.f32 %v3179, 1.0
    %v3195 = vadd.f32 %v3181, 1.0
    %v3196 = vadd.f32 %v3183, 1.0
    %v3197 = vadd.f32 %v3185, 1.0
    %v3198 = vadd.f32 %v3187, 1.0
    %v3199 = vadd.f32 %v3189, 1.0
    %v3200 = vadd.f32 %v3191, 1.0
    %v3201 = vadd.f32 %v3193, 1.0
    %v3202 = vrcp.pop %v3194
    %v3203 = vmul.f32 1.0, %v3202
    %v3204 = vrcp.pop %v3195
    %v3205 = vmul.f32 1.0, %v3204
    %v3206 = vrcp.pop %v3196
    %v3207 = vmul.f32 1.0, %v3206
    %v3208 = vrcp.pop %v3197
    %v3209 = vmul.f32 1.0, %v3208
    %v3210 = vrcp.pop %v3198
    %v3211 = vmul.f32 1.0, %v3210
    %v3212 = vrcp.pop %v3199
    %v3213 = vmul.f32 1.0, %v3212
    %v3214 = vrcp.pop %v3200
    %v3215 = vmul.f32 1.0, %v3214
    %v3216 = vrcp.pop %v3201
    %v3217 = vmul.f32 1.0, %v3216
    %v3226 = vcombine.low %v3203, %v3205
    %v3227 = vcombine.low %v3207, %v3209
    %v3229 = vunpack.c.l.s4 1983009808
    %v3230 = vunpack.c.0.s8 %v3229
    %v3231 = vlaneseq
    %v3232 = vshrl.u32 %v3231, 7
    %v3233 = vsub.s32 %v3230, %v3232
    %v3234 = vrot.slane %v3226, %v3233
    %v3236 = vunpack.c.l.s4 1983009808
    %v3237 = vunpack.c.0.s8 %v3236
    %v3238 = vlaneseq
    %v3239 = vshrl.u32 %v3238, 7
    %v3240 = vsub.s32 %v3237, %v3239
    %v3241 = vrot.slane %v3227, %v3240
    %v3242 = vcombine.low %v3234, %v3241
    %v3243 = vcombine.low %v3211, %v3213
    %v3244 = vcombine.low %v3215, %v3217
    %v3246 = vunpack.c.l.s4 1983009808
    %v3247 = vunpack.c.0.s8 %v3246
    %v3248 = vlaneseq
    %v3249 = vshrl.u32 %v3248, 7
    %v3250 = vsub.s32 %v3247, %v3249
    %v3251 = vrot.slane %v3243, %v3250
    %v3253 = vunpack.c.l.s4 1983009808
    %v3254 = vunpack.c.0.s8 %v3253
    %v3255 = vlaneseq
    %v3256 = vshrl.u32 %v3255, 7
    %v3257 = vsub.s32 %v3254, %v3256
    %v3258 = vrot.slane %v3244, %v3257
    %v3259 = vcombine.low %v3251, %v3258
    %3262 = vst [vmem:[%s15] sm:$0xff] %v3242
    %3263 = vst [vmem:[%s15 + $0x8] sm:$0xff] %v3259
    // Predicated region
    $region62: #{vae_forward.5} parent=1 // pred_check
      _
    $region63: #{vae_forward.5} parent=1 // pred_check_branch
      %3265 = sbr.rel (0) target = $region65
    $region64: #{vae_forward.5} parent=1 // pred_region
      _
    $region65: #{vae_forward.5} parent=1 // pred_fallthru
      _
    // Predicated region
    $region66: #{vae_forward.5} parent=1 // pred_check
      _
    $region67: #{vae_forward.5} parent=1 // pred_check_branch
      %3267 = sbr.rel (0) target = $region69
    $region68: #{vae_forward.5} parent=1 // pred_region
      _
    $region69: #{vae_forward.5} parent=1 // pred_fallthru
      _
    // Predicated region
    $region70: #{vae_forward.5} parent=1 // pred_check
      _
    $region71: #{vae_forward.5} parent=1 // pred_check_branch
      %3269 = sbr.rel (0) target = $region73
    $region72: #{vae_forward.5} parent=1 // pred_region
      %s3271 = ssub.s32 32, 32
      %3272 = vsyncadd [#allocation4], %s3271
      %s3274 = sshll.u32 [#allocation3], 4
      %s3275 = int_to_ptr.vmem [resolvable:$true] %s3274
      %3277 = dma.vmem_to_hbm [thread:$0]  %s3275, 32, %s17, [#allocation4]
    $region73: #{vae_forward.5} parent=1 // pred_fallthru
      _
    // Predicated region
    $region74: #{vae_forward.5} parent=1 // pred_check
      _
    $region75: #{vae_forward.5} parent=1 // pred_check_branch
      %3279 = sbr.rel (0) target = $region77
    $region76: #{vae_forward.5} parent=1 // pred_region
      %s3281 = ssub.s32 32, 32
      %3282 = vsyncadd [#allocation6], %s3281
      %s3284 = sshll.u32 [#allocation5], 4
      %s3285 = int_to_ptr.vmem [resolvable:$true] %s3284
      %3287 = dma.vmem_to_hbm [thread:$0]  %s3285, 32, %s18, [#allocation6]
    $region77: #{vae_forward.5} parent=1 // pred_fallthru
      _
    // Predicated region
    $region78: #{vae_forward.5} parent=1 // pred_check
      _
    $region79: #{vae_forward.5} parent=1 // pred_check_branch
      %3289 = sbr.rel (0) target = $region81
    $region80: #{vae_forward.5} parent=1 // pred_region
      _
    $region81: #{vae_forward.5} parent=1 // pred_fallthru
      _
    // Predicated region
    $region82: #{vae_forward.5} parent=1 // pred_check
      _
    $region83: #{vae_forward.5} parent=1 // pred_check_branch
      %3291 = sbr.rel (0) target = $region85
    $region84: #{vae_forward.5} parent=1 // pred_region
      _
    $region85: #{vae_forward.5} parent=1 // pred_fallthru
      _
    // Predicated region
    $region86: #{vae_forward.5} parent=1 // pred_check
      _
    $region87: #{vae_forward.5} parent=1 // pred_check_branch
      %3293 = sbr.rel (0) target = $region89
    $region88: #{vae_forward.5} parent=1 // pred_region
      %3294 = dma.done [#allocation4], 32
    $region89: #{vae_forward.5} parent=1 // pred_fallthru
      _
    // Predicated region
    $region90: #{vae_forward.5} parent=1 // pred_check
      _
    $region91: #{vae_forward.5} parent=1 // pred_check_branch
      %3296 = sbr.rel (0) target = $region93
    $region92: #{vae_forward.5} parent=1 // pred_region
      %3297 = dma.done [#allocation6], 32
    $region93: #{vae_forward.5} parent=1 // pred_fallthru
      _
    %3298 = vsyncpa [#allocation4], 1
    %3299 = vsyncpa [#allocation6], 1

</llo_original>
